<compile_context>
chip_gen: v7x
topology: tpu7x:2x2x1
jax: 0.10.0
libtpu: 0.0.40
codegen_flags: <defaults>
</compile_context>

<pallas_src>
import functools

import jax
import jax.numpy as jnp
from jax.experimental import pallas as pl
from jax.experimental.pallas import tpu as pltpu

EPS = 1e-5


def _round_up(a, b):
    return (a + b - 1) // b * b


def _conv1_bn1_relu(xT, w1f, b1f, c_in):
    """1x1 conv with tiny K (input channels) as K broadcast FMAs on the VPU.

    bn1 is pre-folded into (w1f, b1f), so this is relu(xT @ w1f + b1f).
    Keeping it off the MXU leaves the MXU free for conv2/conv3."""
    acc = xT[:, 0:1] * w1f[0:1, :]
    for k in range(1, c_in):                       # static, small channel count
        acc = acc + xT[:, k:k + 1] * w1f[k:k + 1, :]
    return jnp.maximum(acc + b1f, 0.0)


def _row_mask(tile_n, tile_idx, n_points):
    """(tile_n, 1) 0/1 mask marking rows that are real points (not padding)."""
    row = jax.lax.broadcasted_iota(jnp.int32, (tile_n, 1), 0) + tile_idx * tile_n
    return (row < n_points).astype(jnp.float32)


def _bn_train_relu(y):
    """Training-mode BatchNorm over the batch rows (gamma=1, beta=0) + ReLU.

    Note: for B == 1 the batch variance is 0 (PyTorch would raise in train
    mode); here it degrades gracefully to a 1/sqrt(eps) scale."""
    mean = jnp.mean(y, axis=0, keepdims=True)
    var = jnp.mean(jnp.square(y - mean), axis=0, keepdims=True)
    return jnp.maximum((y - mean) * jax.lax.rsqrt(var + EPS), 0.0)


def _mean_rsqrt(s, ssq, count):
    """(sum, sumsq) -> (mean, rsqrt(var+eps)); var clamped against cancellation."""
    mean = s / count
    var = jnp.maximum(ssq / count - mean * mean, 0.0)
    return mean, jax.lax.rsqrt(var + EPS)


# ------------------------------ pass A: bn2 stats -----------------------------

def conv2_stats_kernel(x_ref, w1_ref, b1_ref, w2_ref, ssum_ref, ssq_ref,
                       *, n_points, tile_n, c_in):
    t = pl.program_id(1)

    @pl.when(t == 0)                 # per-batch accumulators: reset on every new b
    def _():
        ssum_ref[...] = jnp.zeros_like(ssum_ref)
        ssq_ref[...] = jnp.zeros_like(ssq_ref)

    xT = x_ref[0].T                                           # (tn, C_pad)
    a1 = _conv1_bn1_relu(xT, w1_ref[...], b1_ref[...], c_in)  # (tn, 64) f32
    y2 = jnp.dot(a1.astype(jnp.bfloat16), w2_ref[...],
                 preferred_element_type=jnp.float32)          # (tn, 128)

    mask = _row_mask(tile_n, t, n_points)
    y2m = y2 * mask
    ssum_ref[...] += jnp.sum(y2m, axis=0, keepdims=True)[None]
    ssq_ref[...] += jnp.sum(y2m * y2, axis=0, keepdims=True)[None]


# --------------------- pass B: bn3 stats (linearity + Gram) + max -------------

def conv3_stats_max_kernel(x_ref, w1_ref, b1_ref, w2_ref, b2_ref, w3_ref,
                           sa_ref, gram_ref, mx_ref, *, n_points, tile_n, c_in):
    t = pl.program_id(1)

    @pl.when(t == 0)                 # per-batch accumulators: reset on every new b
    def _():
        sa_ref[...] = jnp.zeros_like(sa_ref)
        gram_ref[...] = jnp.zeros_like(gram_ref)
        mx_ref[...] = jnp.full_like(mx_ref, -jnp.inf)

    xT = x_ref[0].T                                           # (tn, C_pad)
    a1 = _conv1_bn1_relu(xT, w1_ref[...], b1_ref[...], c_in)  # (tn, 64)
    a2 = jnp.maximum(
        jnp.dot(a1.astype(jnp.bfloat16), w2_ref[...],
                preferred_element_type=jnp.float32) + b2_ref[...], 0.0)  # (tn,128)

    # Dominant matmul: bf16 operands, f32 accumulation on the MXU.
    y3 = jnp.dot(a2.astype(jnp.bfloat16), w3_ref[...],
                 preferred_element_type=jnp.float32)          # (tn, 1024)

    # Per-batch running max of the raw conv3 output.  Padded rows are edge
    # copies of a real point, so no masking / select is needed on this tensor.
    mx_ref[...] = jnp.maximum(mx_ref[...],
                              jnp.max(y3, axis=0, keepdims=True)[None])

    # bn3 statistics via linearity: per-channel sum and 128x128 Gram of the
    # *masked* a2 (MXU); both are pushed through w3 once in XLA afterwards.
    mask = _row_mask(tile_n, t, n_points)
    a2m = a2 * mask
    sa_ref[...] += jnp.sum(a2m, axis=0, keepdims=True)[None]
    gram_ref[...] += jnp.dot(a2m.T.astype(jnp.bfloat16),      # f32 transpose, bf16 NN dot
                             a2m.astype(jnp.bfloat16),
                             preferred_element_type=jnp.float32)[None]


# ----------------------------------- fc head ----------------------------------

def fc_head_kernel(mx_ref, g3_ref, wf1_ref, wf2_ref, wf3_ref, bout_ref, out_ref):
    # bn3 + relu applied once to the pooled (B, 1024) features.
    g = jnp.maximum((mx_ref[...] - g3_ref[0:1, :]) * g3_ref[1:2, :], 0.0)
    # fc1 + bn4 + relu (bf16 operands, f32 accumulation & BN statistics).
    f = jnp.dot(g.astype(jnp.bfloat16), wf1_ref[...],
                preferred_element_type=jnp.float32)
    f = _bn_train_relu(f)
    # fc2 + bn5 + relu.
    f = jnp.dot(f, wf2_ref[...], preferred_element_type=jnp.float32)
    f = _bn_train_relu(f)
    # fc3 + (bias + identity); written to a lane-dense 128-wide slab.
    out_ref[...] = jnp.dot(f, wf3_ref[...],
                           preferred_element_type=jnp.float32) + bout_ref[...]


# ----------------------------------- wrapper -----------------------------------

def init_params(channel, key):
    """Deterministic synthetic parameters (PyTorch-style uniform bounds)."""
    dims = [(channel, 64), (64, 128), (128, 1024), (1024, 512), (512, 256), (256, 9)]
    names = ["1", "2", "3", "f1", "f2", "f3"]
    params = {}
    keys = jax.random.split(key, 2 * len(dims))
    for i, ((fin, fout), nm) in enumerate(zip(dims, names)):
        bound = 1.0 / (fin ** 0.5)
        params["w" + nm] = jax.random.uniform(
            keys[2 * i], (fin, fout), jnp.float32, -bound, bound)
        params["b" + nm] = jax.random.uniform(
            keys[2 * i + 1], (1, fout), jnp.float32, -bound, bound)
    return params


def stn3d_forward(x, params, *, tile_n=1024):
    """x: (B, channel, N) float32 -> (B, 3, 3) float32."""
    B, C, N = x.shape
    count = float(B * N)

    # --------- tiling / padding (points are the lane axis: 128 multiples) ------
    tn = max(128, min(_round_up(tile_n, 128), _round_up(N, 128)))
    n_pad = _round_up(N, tn)
    cp = _round_up(C, 8)
    xp = x
    if n_pad != N:
        # Edge-replicate padded points: their conv3 output duplicates a real
        # point, so the max pool needs no masking (statistics mask them out).
        xp = jnp.pad(xp, ((0, 0), (0, 0), (0, n_pad - N)), mode="edge")
    if cp != C:
        xp = jnp.pad(xp, ((0, 0), (0, cp - C), (0, 0)))
    grid = (B, n_pad // tn)

    w1, w2, w3 = params["w1"], params["w2"], params["w3"]

    # --------- bn1 statistics straight from x (linearity; replaces a pass) -----
    sx = jnp.sum(x, axis=(0, 2))                               # (C,)
    sxx = jnp.einsum("bkn,bln->kl", x, x)                      # (C, C)
    mean1 = (sx @ w1) / count
    ey1sq = jnp.sum(((sxx / count) @ w1) * w1, axis=0)
    rs1 = jax.lax.rsqrt(jnp.maximum(ey1sq - mean1 * mean1, 0.0) + EPS)
    w1f = jnp.zeros((cp, 64), jnp.float32).at[:C].set(w1 * rs1[None, :])
    b1f = (-mean1 * rs1)[None, :]                              # (1, 64)

    x_spec = pl.BlockSpec((1, cp, tn), lambda b, t: (b, 0, t))
    res = lambda shape: pl.BlockSpec(shape, lambda b, t: (0,) * len(shape))
    per_b = lambda shape: pl.BlockSpec(
        (1,) + tuple(shape[1:]), lambda b, t: (b,) + (0,) * (len(shape) - 1))
    cparams = pltpu.CompilerParams(
        # Batch axis is truly parallel (per-b accumulators); point-tile axis is a
        # sequential reduction.
        dimension_semantics=("parallel", "arbitrary"),
        vmem_limit_bytes=32 * 1024 * 1024,
    )

    # --------- pass A: bn2 statistics (conv1 recomputed, conv2 bf16/MXU) -------
    s2sum, s2sq = pl.pallas_call(
        functools.partial(conv2_stats_kernel, n_points=N, tile_n=tn, c_in=C),
        grid=grid,
        in_specs=[x_spec, res((cp, 64)), res((1, 64)), res((64, 128))],
        out_specs=(per_b((B, 1, 128)), per_b((B, 1, 128))),
        out_shape=(jax.ShapeDtypeStruct((B, 1, 128), jnp.float32),
                   jax.ShapeDtypeStruct((B, 1, 128), jnp.float32)),
        compiler_params=cparams,
    )(xp, w1f, b1f, w2.astype(jnp.bfloat16))
    mean2, rs2 = _mean_rsqrt(jnp.sum(s2sum, axis=(0, 1)),
                             jnp.sum(s2sq, axis=(0, 1)), count)
    w2f_bf = (w2 * rs2[None, :]).astype(jnp.bfloat16)          # bn2 folded into conv2
    b2f = (-mean2 * rs2)[None, :]                              # (1, 128)
    w3_bf = w3.astype(jnp.bfloat16)

    # --------- pass B: bn3 statistics (linearity + Gram) + per-batch max -------
    sa, gram, mx = pl.pallas_call(
        functools.partial(conv3_stats_max_kernel, n_points=N, tile_n=tn, c_in=C),
        grid=grid,
        in_specs=[x_spec, res((cp, 64)), res((1, 64)), res((64, 128)),
                  res((1, 128)), res((128, 1024))],
        out_specs=(per_b((B, 1, 128)), per_b((B, 128, 128)), per_b((B, 1, 1024))),
        out_shape=(jax.ShapeDtypeStruct((B, 1, 128), jnp.float32),
                   jax.ShapeDtypeStruct((B, 128, 128), jnp.float32),
                   jax.ShapeDtypeStruct((B, 1, 1024), jnp.float32)),
        compiler_params=cparams,
    )(xp, w1f, b1f, w2f_bf, b2f, w3_bf)

    w3u = w3_bf.astype(jnp.float32)                            # match in-kernel weights
    sa_t = jnp.sum(sa, axis=(0, 1))                            # (128,)
    g_t = jnp.sum(gram, axis=0)                                # (128, 128)
    mean3 = (sa_t @ w3u) / count
    ey3sq = jnp.sum(((g_t / count) @ w3u) * w3u, axis=0)
    rs3 = jax.lax.rsqrt(jnp.maximum(ey3sq - mean3 * mean3, 0.0) + EPS)
    g3 = jnp.stack([mean3, rs3])                               # (2, 1024)
    pooled = mx[:, 0, :]                                       # (B, 1024) raw max

    # --------- tiny fc head on the pooled features ------------------------------
    wf2 = params["wf2"]
    wf3_pad = jnp.zeros((wf2.shape[1], 128), jnp.float32).at[:, :9].set(params["wf3"])
    iden = jnp.eye(3, dtype=jnp.float32).reshape(1, 9)
    bout = jnp.zeros((1, 128), jnp.float32).at[:, :9].set(params["bf3"] + iden)

    out128 = pl.pallas_call(
        fc_head_kernel,
        out_shape=jax.ShapeDtypeStruct((B, 128), jnp.float32),
        in_specs=[pl.BlockSpec(memory_space=pltpu.MemorySpace.VMEM)
                  for _ in range(6)],
        out_specs=pl.BlockSpec(memory_space=pltpu.MemorySpace.VMEM),
    )(pooled, g3, params["wf1"].astype(jnp.bfloat16), wf2, wf3_pad, bout)

    return out128[:, :9].reshape(B, 3, 3)


if __name__ == "__main__":
    key = jax.random.PRNGKey(0)
    k_param, k_x = jax.random.split(key)

    B, CHANNEL, N = 2, 3, 16          # (batch, channel, num_points) as in Conv1d input
    params = init_params(CHANNEL, k_param)
    x = jax.random.normal(k_x, (B, CHANNEL, N), jnp.float32)

    y = jax.jit(stn3d_forward)(x, params)
    jax.block_until_ready(y)
    assert y.shape == (B, 3, 3) and y.dtype == jnp.float32
    assert bool(jnp.all(jnp.isfinite(y)))
    print("KERNEL_OK")
</pallas_src>

<mosaic_0001>
module attributes {stable_mosaic.version = 11 : i64} {
  func.func @conv3_stats_max_kernel(%arg0: i32, %arg1: i32, %arg2: memref<1x8x128xf32, #tpu.memory_space<vmem>>, %arg3: memref<8x64xf32, #tpu.memory_space<vmem>>, %arg4: memref<1x64xf32, #tpu.memory_space<vmem>>, %arg5: memref<64x128xbf16, #tpu.memory_space<vmem>>, %arg6: memref<1x128xf32, #tpu.memory_space<vmem>>, %arg7: memref<128x1024xbf16, #tpu.memory_space<vmem>>, %arg8: memref<1x1x128xf32, #tpu.memory_space<vmem>>, %arg9: memref<1x128x128xf32, #tpu.memory_space<vmem>>, %arg10: memref<1x1x1024xf32, #tpu.memory_space<vmem>>) attributes {dimension_semantics = [#tpu.dimension_semantics<parallel>, #tpu.dimension_semantics<arbitrary>], iteration_bounds = array<i64: 2, 1>, scalar_prefetch = 0 : i64, scratch_operands = 0 : i64, tpu.core_type = #tpu.core_type<tc>, window_params = [{transform_indices = @transform_0, window_bounds = array<i64: 1, 8, 128>}, {pipeline_mode = #tpu.pipeline_mode<synchronous>, transform_indices = @transform_1, window_bounds = array<i64: 8, 64>}, {pipeline_mode = #tpu.pipeline_mode<synchronous>, transform_indices = @transform_2, window_bounds = array<i64: 1, 64>}, {pipeline_mode = #tpu.pipeline_mode<synchronous>, transform_indices = @transform_3, window_bounds = array<i64: 64, 128>}, {pipeline_mode = #tpu.pipeline_mode<synchronous>, transform_indices = @transform_4, window_bounds = array<i64: 1, 128>}, {pipeline_mode = #tpu.pipeline_mode<synchronous>, transform_indices = @transform_5, window_bounds = array<i64: 128, 1024>}, {transform_indices = @transform_6, window_bounds = array<i64: 1, 1, 128>}, {transform_indices = @transform_7, window_bounds = array<i64: 1, 128, 128>}, {transform_indices = @transform_8, window_bounds = array<i64: 1, 1, 1024>}]} {
    %c0_i32 = arith.constant 0 : i32
    %0 = arith.cmpi eq, %arg1, %c0_i32 : i32
    %1 = arith.extui %0 : i1 to i32
    %c0_i32_0 = arith.constant 0 : i32
    %2 = arith.cmpi ne, %1, %c0_i32_0 : i32
    scf.if %2 {
      %cst_37 = arith.constant 0.000000e+00 : f32
      %70 = vector.broadcast %cst_37 : f32 to vector<1x1x128xf32>
      %c0_38 = arith.constant 0 : index
      %c0_39 = arith.constant 0 : index
      %c0_40 = arith.constant 0 : index
      %71 = vector.load %arg8[%c0_38, %c0_39, %c0_40] : memref<1x1x128xf32, #tpu.memory_space<vmem>>, vector<1x1x128xf32>
      tpu.vector_store %arg8[%c0_38, %c0_39, %c0_40], %70 {strides = array<i32>} : memref<1x1x128xf32, #tpu.memory_space<vmem>>, vector<1x1x128xf32>,
      %cst_41 = arith.constant 0.000000e+00 : f32
      %72 = vector.broadcast %cst_41 : f32 to vector<1x128x128xf32>
      %c0_42 = arith.constant 0 : index
      %c0_43 = arith.constant 0 : index
      %c0_44 = arith.constant 0 : index
      %73 = vector.load %arg9[%c0_42, %c0_43, %c0_44] : memref<1x128x128xf32, #tpu.memory_space<vmem>>, vector<1x128x128xf32>
      tpu.vector_store %arg9[%c0_42, %c0_43, %c0_44], %72 {strides = array<i32>} : memref<1x128x128xf32, #tpu.memory_space<vmem>>, vector<1x128x128xf32>,
      %cst_45 = arith.constant 0xFF800000 : f32
      %74 = vector.broadcast %cst_45 : f32 to vector<1x1x1024xf32>
      %c0_46 = arith.constant 0 : index
      %c0_47 = arith.constant 0 : index
      %c0_48 = arith.constant 0 : index
      %75 = vector.load %arg10[%c0_46, %c0_47, %c0_48] : memref<1x1x1024xf32, #tpu.memory_space<vmem>>, vector<1x1x1024xf32>
      tpu.vector_store %arg10[%c0_46, %c0_47, %c0_48], %74 {strides = array<i32>} : memref<1x1x1024xf32, #tpu.memory_space<vmem>>, vector<1x1x1024xf32>,
    } else {
    }
    %c0 = arith.constant 0 : index
    %c0_1 = arith.constant 0 : index
    %c0_2 = arith.constant 0 : index
    %3 = vector.load %arg2[%c0, %c0_1, %c0_2] : memref<1x8x128xf32, #tpu.memory_space<vmem>>, vector<1x8x128xf32>
    %4 = vector.shape_cast %3 : vector<1x8x128xf32> to vector<8x128xf32>
    %5 = tpu.transpose %4, [1, 0] : vector<8x128xf32> -> vector<128x8xf32>
    %c0_3 = arith.constant 0 : index
    %c0_4 = arith.constant 0 : index
    %6 = vector.load %arg3[%c0_3, %c0_4] : memref<8x64xf32, #tpu.memory_space<vmem>>, vector<8x64xf32>
    %c0_5 = arith.constant 0 : index
    %c0_6 = arith.constant 0 : index
    %7 = vector.load %arg4[%c0_5, %c0_6] : memref<1x64xf32, #tpu.memory_space<vmem>>, vector<1x64xf32>
    %8 = vector.extract_strided_slice %5 {offsets = [0, 0], sizes = [128, 1], strides = [1, 1]} : vector<128x8xf32> to vector<128x1xf32>
    %9 = vector.extract_strided_slice %6 {offsets = [0, 0], sizes = [1, 64], strides = [1, 1]} : vector<8x64xf32> to vector<1x64xf32>
    %10 = vector.broadcast %8 : vector<128x1xf32> to vector<128x64xf32>
    %11 = vector.broadcast %9 : vector<1x64xf32> to vector<128x64xf32>
    %12 = arith.mulf %10, %11 : vector<128x64xf32>
    %13 = vector.extract_strided_slice %5 {offsets = [0, 1], sizes = [128, 1], strides = [1, 1]} : vector<128x8xf32> to vector<128x1xf32>
    %14 = vector.extract_strided_slice %6 {offsets = [1, 0], sizes = [1, 64], strides = [1, 1]} : vector<8x64xf32> to vector<1x64xf32>
    %15 = vector.broadcast %13 : vector<128x1xf32> to vector<128x64xf32>
    %16 = vector.broadcast %14 : vector<1x64xf32> to vector<128x64xf32>
    %17 = arith.mulf %15, %16 : vector<128x64xf32>
    %18 = arith.addf %12, %17 : vector<128x64xf32>
    %19 = vector.extract_strided_slice %5 {offsets = [0, 2], sizes = [128, 1], strides = [1, 1]} : vector<128x8xf32> to vector<128x1xf32>
    %20 = vector.extract_strided_slice %6 {offsets = [2, 0], sizes = [1, 64], strides = [1, 1]} : vector<8x64xf32> to vector<1x64xf32>
    %21 = vector.broadcast %19 : vector<128x1xf32> to vector<128x64xf32>
    %22 = vector.broadcast %20 : vector<1x64xf32> to vector<128x64xf32>
    %23 = arith.mulf %21, %22 : vector<128x64xf32>
    %24 = arith.addf %18, %23 : vector<128x64xf32>
    %25 = vector.broadcast %7 : vector<1x64xf32> to vector<128x64xf32>
    %26 = arith.addf %24, %25 : vector<128x64xf32>
    %cst = arith.constant 0.000000e+00 : f32
    %27 = vector.broadcast %cst : f32 to vector<128x64xf32>
    %28 = arith.maximumf %26, %27 : vector<128x64xf32>
    %29 = arith.truncf %28 : vector<128x64xf32> to vector<128x64xbf16>
    %c0_7 = arith.constant 0 : index
    %c0_8 = arith.constant 0 : index
    %30 = vector.load %arg5[%c0_7, %c0_8] : memref<64x128xbf16, #tpu.memory_space<vmem>>, vector<64x128xbf16>
    %cst_9 = arith.constant dense<0.000000e+00> : vector<128x128xf32>
    %31 = tpu.matmul %29, %30, %cst_9 {dimension_numbers = #tpu.dot_dimension_numbers<[1], [0], [0], [1], [0, 0, 1, 1], [], []>} : vector<128x64xbf16>, vector<64x128xbf16>, vector<128x128xf32> -> vector<128x128xf32>
    %c0_10 = arith.constant 0 : index
    %c0_11 = arith.constant 0 : index
    %32 = vector.load %arg6[%c0_10, %c0_11] : memref<1x128xf32, #tpu.memory_space<vmem>>, vector<1x128xf32>
    %33 = vector.broadcast %32 : vector<1x128xf32> to vector<128x128xf32>
    %34 = arith.addf %31, %33 : vector<128x128xf32>
    %cst_12 = arith.constant 0.000000e+00 : f32
    %35 = vector.broadcast %cst_12 : f32 to vector<128x128xf32>
    %36 = arith.maximumf %34, %35 : vector<128x128xf32>
    %37 = arith.truncf %36 : vector<128x128xf32> to vector<128x128xbf16>
    %c0_13 = arith.constant 0 : index
    %c0_14 = arith.constant 0 : index
    %38 = vector.load %arg7[%c0_13, %c0_14] : memref<128x1024xbf16, #tpu.memory_space<vmem>>, vector<128x1024xbf16>
    %cst_15 = arith.constant dense<0.000000e+00> : vector<128x1024xf32>
    %39 = tpu.matmul %37, %38, %cst_15 {dimension_numbers = #tpu.dot_dimension_numbers<[1], [0], [0], [1], [0, 0, 1, 1], [], []>} : vector<128x128xbf16>, vector<128x1024xbf16>, vector<128x1024xf32> -> vector<128x1024xf32>
    %c0_16 = arith.constant 0 : index
    %c0_17 = arith.constant 0 : index
    %c0_18 = arith.constant 0 : index
    %40 = vector.load %arg10[%c0_16, %c0_17, %c0_18] : memref<1x1x1024xf32, #tpu.memory_space<vmem>>, vector<1x1x1024xf32>
    %cst_19 = arith.constant dense<0xFF800000> : vector<1024xf32>
    %41 = vector.multi_reduction <maximumf>, %39, %cst_19 [0] : vector<128x1024xf32> to vector<1024xf32>
    %42 = vector.shape_cast %41 : vector<1024xf32> to vector<1x1024xf32>
    %43 = vector.shape_cast %42 : vector<1x1024xf32> to vector<1x1x1024xf32>
    %44 = arith.maximumf %40, %43 : vector<1x1x1024xf32>
    %c0_20 = arith.constant 0 : index
    %c0_21 = arith.constant 0 : index
    %c0_22 = arith.constant 0 : index
    %45 = vector.load %arg10[%c0_20, %c0_21, %c0_22] : memref<1x1x1024xf32, #tpu.memory_space<vmem>>, vector<1x1x1024xf32>
    tpu.vector_store %arg10[%c0_20, %c0_21, %c0_22], %44 {strides = array<i32>} : memref<1x1x1024xf32, #tpu.memory_space<vmem>>, vector<1x1x1024xf32>,
    %46 = tpu.iota {dimensions = array<i32: 0>} : vector<128x1xi32>
    %c128_i32 = arith.constant 128 : i32
    %47 = arith.muli %arg1, %c128_i32 : i32
    %48 = vector.broadcast %47 : i32 to vector<128x1xi32>
    %49 = arith.addi %46, %48 : vector<128x1xi32>
    %c16_i32 = arith.constant 16 : i32
    %50 = vector.broadcast %c16_i32 : i32 to vector<128x1xi32>
    %51 = arith.cmpi slt, %49, %50 : vector<128x1xi32>
    %52 = arith.extui %51 : vector<128x1xi1> to vector<128x1xi32>
    %53 = arith.sitofp %52 : vector<128x1xi32> to vector<128x1xf32>
    %54 = vector.broadcast %53 : vector<128x1xf32> to vector<128x128xf32>
    %55 = arith.mulf %36, %54 : vector<128x128xf32>
    %c0_23 = arith.constant 0 : index
    %c0_24 = arith.constant 0 : index
    %c0_25 = arith.constant 0 : index
    %56 = vector.load %arg8[%c0_23, %c0_24, %c0_25] : memref<1x1x128xf32, #tpu.memory_space<vmem>>, vector<1x1x128xf32>
    %cst_26 = arith.constant dense<0.000000e+00> : vector<128xf32>
    %57 = vector.multi_reduction <add>, %55, %cst_26 [0] : vector<128x128xf32> to vector<128xf32>
    %58 = vector.shape_cast %57 : vector<128xf32> to vector<1x128xf32>
    %59 = vector.shape_cast %58 : vector<1x128xf32> to vector<1x1x128xf32>
    %60 = arith.addf %56, %59 : vector<1x1x128xf32>
    %c0_27 = arith.constant 0 : index
    %c0_28 = arith.constant 0 : index
    %c0_29 = arith.constant 0 : index
    %61 = vector.load %arg8[%c0_27, %c0_28, %c0_29] : memref<1x1x128xf32, #tpu.memory_space<vmem>>, vector<1x1x128xf32>
    tpu.vector_store %arg8[%c0_27, %c0_28, %c0_29], %60 {strides = array<i32>} : memref<1x1x128xf32, #tpu.memory_space<vmem>>, vector<1x1x128xf32>,
    %c0_30 = arith.constant 0 : index
    %c0_31 = arith.constant 0 : index
    %c0_32 = arith.constant 0 : index
    %62 = vector.load %arg9[%c0_30, %c0_31, %c0_32] : memref<1x128x128xf32, #tpu.memory_space<vmem>>, vector<1x128x128xf32>
    %63 = tpu.transpose %55, [1, 0] : vector<128x128xf32> -> vector<128x128xf32>
    %64 = arith.truncf %63 : vector<128x128xf32> to vector<128x128xbf16>
    %65 = arith.truncf %55 : vector<128x128xf32> to vector<128x128xbf16>
    %cst_33 = arith.constant dense<0.000000e+00> : vector<128x128xf32>
    %66 = tpu.matmul %64, %65, %cst_33 {dimension_numbers = #tpu.dot_dimension_numbers<[1], [0], [0], [1], [0, 0, 1, 1], [], []>} : vector<128x128xbf16>, vector<128x128xbf16>, vector<128x128xf32> -> vector<128x128xf32>
    %67 = vector.shape_cast %66 : vector<128x128xf32> to vector<1x128x128xf32>
    %68 = arith.addf %62, %67 : vector<1x128x128xf32>
    %c0_34 = arith.constant 0 : index
    %c0_35 = arith.constant 0 : index
    %c0_36 = arith.constant 0 : index
    %69 = vector.load %arg9[%c0_34, %c0_35, %c0_36] : memref<1x128x128xf32, #tpu.memory_space<vmem>>, vector<1x128x128xf32>
    tpu.vector_store %arg9[%c0_34, %c0_35, %c0_36], %68 {strides = array<i32>} : memref<1x128x128xf32, #tpu.memory_space<vmem>>, vector<1x128x128xf32>,
    return
  }
  func.func @transform_0(%arg0: i32, %arg1: i32) -> (i32, i32, i32) {
    %c0_i32 = arith.constant 0 : i32
    %c0_i32_0 = arith.constant 0 : i32
    return %arg0, %c0_i32, %arg1 : i32, i32, i32
  }
  func.func @transform_1(%arg0: i32, %arg1: i32) -> (i32, i32) {
    %c0_i32 = arith.constant 0 : i32
    %c0_i32_0 = arith.constant 0 : i32
    %c0_i32_1 = arith.constant 0 : i32
    return %c0_i32, %c0_i32_0 : i32, i32
  }
  func.func @transform_2(%arg0: i32, %arg1: i32) -> (i32, i32) {
    %c0_i32 = arith.constant 0 : i32
    %c0_i32_0 = arith.constant 0 : i32
    %c0_i32_1 = arith.constant 0 : i32
    return %c0_i32, %c0_i32_0 : i32, i32
  }
  func.func @transform_3(%arg0: i32, %arg1: i32) -> (i32, i32) {
    %c0_i32 = arith.constant 0 : i32
    %c0_i32_0 = arith.constant 0 : i32
    %c0_i32_1 = arith.constant 0 : i32
    return %c0_i32, %c0_i32_0 : i32, i32
  }
  func.func @transform_4(%arg0: i32, %arg1: i32) -> (i32, i32) {
    %c0_i32 = arith.constant 0 : i32
    %c0_i32_0 = arith.constant 0 : i32
    %c0_i32_1 = arith.constant 0 : i32
    return %c0_i32, %c0_i32_0 : i32, i32
  }
  func.func @transform_5(%arg0: i32, %arg1: i32) -> (i32, i32) {
    %c0_i32 = arith.constant 0 : i32
    %c0_i32_0 = arith.constant 0 : i32
    %c0_i32_1 = arith.constant 0 : i32
    return %c0_i32, %c0_i32_0 : i32, i32
  }
  func.func @transform_6(%arg0: i32, %arg1: i32) -> (i32, i32, i32) {
    %c0_i32 = arith.constant 0 : i32
    %c0_i32_0 = arith.constant 0 : i32
    %c0_i32_1 = arith.constant 0 : i32
    return %arg0, %c0_i32, %c0_i32_0 : i32, i32, i32
  }
  func.func @transform_7(%arg0: i32, %arg1: i32) -> (i32, i32, i32) {
    %c0_i32 = arith.constant 0 : i32
    %c0_i32_0 = arith.constant 0 : i32
    %c0_i32_1 = arith.constant 0 : i32
    return %arg0, %c0_i32, %c0_i32_0 : i32, i32, i32
  }
  func.func @transform_8(%arg0: i32, %arg1: i32) -> (i32, i32, i32) {
    %c0_i32 = arith.constant 0 : i32
    %c0_i32_0 = arith.constant 0 : i32
    %c0_i32_1 = arith.constant 0 : i32
    return %arg0, %c0_i32, %c0_i32_0 : i32, i32, i32
  }
}

module attributes {stable_mosaic.version = 11 : i64} {
  func.func @conv2_stats_kernel(%arg0: i32, %arg1: i32, %arg2: memref<1x8x128xf32, #tpu.memory_space<vmem>>, %arg3: memref<8x64xf32, #tpu.memory_space<vmem>>, %arg4: memref<1x64xf32, #tpu.memory_space<vmem>>, %arg5: memref<64x128xbf16, #tpu.memory_space<vmem>>, %arg6: memref<1x1x128xf32, #tpu.memory_space<vmem>>, %arg7: memref<1x1x128xf32, #tpu.memory_space<vmem>>) attributes {dimension_semantics = [#tpu.dimension_semantics<parallel>, #tpu.dimension_semantics<arbitrary>], iteration_bounds = array<i64: 2, 1>, scalar_prefetch = 0 : i64, scratch_operands = 0 : i64, tpu.core_type = #tpu.core_type<tc>, window_params = [{transform_indices = @transform_0, window_bounds = array<i64: 1, 8, 128>}, {pipeline_mode = #tpu.pipeline_mode<synchronous>, transform_indices = @transform_1, window_bounds = array<i64: 8, 64>}, {pipeline_mode = #tpu.pipeline_mode<synchronous>, transform_indices = @transform_2, window_bounds = array<i64: 1, 64>}, {pipeline_mode = #tpu.pipeline_mode<synchronous>, transform_indices = @transform_3, window_bounds = array<i64: 64, 128>}, {transform_indices = @transform_4, window_bounds = array<i64: 1, 1, 128>}, {transform_indices = @transform_5, window_bounds = array<i64: 1, 1, 128>}]} {
    %c0_i32 = arith.constant 0 : i32
    %0 = arith.cmpi eq, %arg1, %c0_i32 : i32
    %1 = arith.extui %0 : i1 to i32
    %c0_i32_0 = arith.constant 0 : i32
    %2 = arith.cmpi ne, %1, %c0_i32_0 : i32
    scf.if %2 {
      %cst_24 = arith.constant 0.000000e+00 : f32
      %55 = vector.broadcast %cst_24 : f32 to vector<1x1x128xf32>
      %c0_25 = arith.constant 0 : index
      %c0_26 = arith.constant 0 : index
      %c0_27 = arith.constant 0 : index
      %56 = vector.load %arg6[%c0_25, %c0_26, %c0_27] : memref<1x1x128xf32, #tpu.memory_space<vmem>>, vector<1x1x128xf32>
      tpu.vector_store %arg6[%c0_25, %c0_26, %c0_27], %55 {strides = array<i32>} : memref<1x1x128xf32, #tpu.memory_space<vmem>>, vector<1x1x128xf32>,
      %cst_28 = arith.constant 0.000000e+00 : f32
      %57 = vector.broadcast %cst_28 : f32 to vector<1x1x128xf32>
      %c0_29 = arith.constant 0 : index
      %c0_30 = arith.constant 0 : index
      %c0_31 = arith.constant 0 : index
      %58 = vector.load %arg7[%c0_29, %c0_30, %c0_31] : memref<1x1x128xf32, #tpu.memory_space<vmem>>, vector<1x1x128xf32>
      tpu.vector_store %arg7[%c0_29, %c0_30, %c0_31], %57 {strides = array<i32>} : memref<1x1x128xf32, #tpu.memory_space<vmem>>, vector<1x1x128xf32>,
    } else {
    }
    %c0 = arith.constant 0 : index
    %c0_1 = arith.constant 0 : index
    %c0_2 = arith.constant 0 : index
    %3 = vector.load %arg2[%c0, %c0_1, %c0_2] : memref<1x8x128xf32, #tpu.memory_space<vmem>>, vector<1x8x128xf32>
    %4 = vector.shape_cast %3 : vector<1x8x128xf32> to vector<8x128xf32>
    %5 = tpu.transpose %4, [1, 0] : vector<8x128xf32> -> vector<128x8xf32>
    %c0_3 = arith.constant 0 : index
    %c0_4 = arith.constant 0 : index
    %6 = vector.load %arg3[%c0_3, %c0_4] : memref<8x64xf32, #tpu.memory_space<vmem>>, vector<8x64xf32>
    %c0_5 = arith.constant 0 : index
    %c0_6 = arith.constant 0 : index
    %7 = vector.load %arg4[%c0_5, %c0_6] : memref<1x64xf32, #tpu.memory_space<vmem>>, vector<1x64xf32>
    %8 = vector.extract_strided_slice %5 {offsets = [0, 0], sizes = [128, 1], strides = [1, 1]} : vector<128x8xf32> to vector<128x1xf32>
    %9 = vector.extract_strided_slice %6 {offsets = [0, 0], sizes = [1, 64], strides = [1, 1]} : vector<8x64xf32> to vector<1x64xf32>
    %10 = vector.broadcast %8 : vector<128x1xf32> to vector<128x64xf32>
    %11 = vector.broadcast %9 : vector<1x64xf32> to vector<128x64xf32>
    %12 = arith.mulf %10, %11 : vector<128x64xf32>
    %13 = vector.extract_strided_slice %5 {offsets = [0, 1], sizes = [128, 1], strides = [1, 1]} : vector<128x8xf32> to vector<128x1xf32>
    %14 = vector.extract_strided_slice %6 {offsets = [1, 0], sizes = [1, 64], strides = [1, 1]} : vector<8x64xf32> to vector<1x64xf32>
    %15 = vector.broadcast %13 : vector<128x1xf32> to vector<128x64xf32>
    %16 = vector.broadcast %14 : vector<1x64xf32> to vector<128x64xf32>
    %17 = arith.mulf %15, %16 : vector<128x64xf32>
    %18 = arith.addf %12, %17 : vector<128x64xf32>
    %19 = vector.extract_strided_slice %5 {offsets = [0, 2], sizes = [128, 1], strides = [1, 1]} : vector<128x8xf32> to vector<128x1xf32>
    %20 = vector.extract_strided_slice %6 {offsets = [2, 0], sizes = [1, 64], strides = [1, 1]} : vector<8x64xf32> to vector<1x64xf32>
    %21 = vector.broadcast %19 : vector<128x1xf32> to vector<128x64xf32>
    %22 = vector.broadcast %20 : vector<1x64xf32> to vector<128x64xf32>
    %23 = arith.mulf %21, %22 : vector<128x64xf32>
    %24 = arith.addf %18, %23 : vector<128x64xf32>
    %25 = vector.broadcast %7 : vector<1x64xf32> to vector<128x64xf32>
    %26 = arith.addf %24, %25 : vector<128x64xf32>
    %cst = arith.constant 0.000000e+00 : f32
    %27 = vector.broadcast %cst : f32 to vector<128x64xf32>
    %28 = arith.maximumf %26, %27 : vector<128x64xf32>
    %29 = arith.truncf %28 : vector<128x64xf32> to vector<128x64xbf16>
    %c0_7 = arith.constant 0 : index
    %c0_8 = arith.constant 0 : index
    %30 = vector.load %arg5[%c0_7, %c0_8] : memref<64x128xbf16, #tpu.memory_space<vmem>>, vector<64x128xbf16>
    %cst_9 = arith.constant dense<0.000000e+00> : vector<128x128xf32>
    %31 = tpu.matmul %29, %30, %cst_9 {dimension_numbers = #tpu.dot_dimension_numbers<[1], [0], [0], [1], [0, 0, 1, 1], [], []>} : vector<128x64xbf16>, vector<64x128xbf16>, vector<128x128xf32> -> vector<128x128xf32>
    %32 = tpu.iota {dimensions = array<i32: 0>} : vector<128x1xi32>
    %c128_i32 = arith.constant 128 : i32
    %33 = arith.muli %arg1, %c128_i32 : i32
    %34 = vector.broadcast %33 : i32 to vector<128x1xi32>
    %35 = arith.addi %32, %34 : vector<128x1xi32>
    %c16_i32 = arith.constant 16 : i32
    %36 = vector.broadcast %c16_i32 : i32 to vector<128x1xi32>
    %37 = arith.cmpi slt, %35, %36 : vector<128x1xi32>
    %38 = arith.extui %37 : vector<128x1xi1> to vector<128x1xi32>
    %39 = arith.sitofp %38 : vector<128x1xi32> to vector<128x1xf32>
    %40 = vector.broadcast %39 : vector<128x1xf32> to vector<128x128xf32>
    %41 = arith.mulf %31, %40 : vector<128x128xf32>
    %c0_10 = arith.constant 0 : index
    %c0_11 = arith.constant 0 : index
    %c0_12 = arith.constant 0 : index
    %42 = vector.load %arg6[%c0_10, %c0_11, %c0_12] : memref<1x1x128xf32, #tpu.memory_space<vmem>>, vector<1x1x128xf32>
    %cst_13 = arith.constant dense<0.000000e+00> : vector<128xf32>
    %43 = vector.multi_reduction <add>, %41, %cst_13 [0] : vector<128x128xf32> to vector<128xf32>
    %44 = vector.shape_cast %43 : vector<128xf32> to vector<1x128xf32>
    %45 = vector.shape_cast %44 : vector<1x128xf32> to vector<1x1x128xf32>
    %46 = arith.addf %42, %45 : vector<1x1x128xf32>
    %c0_14 = arith.constant 0 : index
    %c0_15 = arith.constant 0 : index
    %c0_16 = arith.constant 0 : index
    %47 = vector.load %arg6[%c0_14, %c0_15, %c0_16] : memref<1x1x128xf32, #tpu.memory_space<vmem>>, vector<1x1x128xf32>
    tpu.vector_store %arg6[%c0_14, %c0_15, %c0_16], %46 {strides = array<i32>} : memref<1x1x128xf32, #tpu.memory_space<vmem>>, vector<1x1x128xf32>,
    %c0_17 = arith.constant 0 : index
    %c0_18 = arith.constant 0 : index
    %c0_19 = arith.constant 0 : index
    %48 = vector.load %arg7[%c0_17, %c0_18, %c0_19] : memref<1x1x128xf32, #tpu.memory_space<vmem>>, vector<1x1x128xf32>
    %49 = arith.mulf %41, %31 : vector<128x128xf32>
    %cst_20 = arith.constant dense<0.000000e+00> : vector<128xf32>
    %50 = vector.multi_reduction <add>, %49, %cst_20 [0] : vector<128x128xf32> to vector<128xf32>
    %51 = vector.shape_cast %50 : vector<128xf32> to vector<1x128xf32>
    %52 = vector.shape_cast %51 : vector<1x128xf32> to vector<1x1x128xf32>
    %53 = arith.addf %48, %52 : vector<1x1x128xf32>
    %c0_21 = arith.constant 0 : index
    %c0_22 = arith.constant 0 : index
    %c0_23 = arith.constant 0 : index
    %54 = vector.load %arg7[%c0_21, %c0_22, %c0_23] : memref<1x1x128xf32, #tpu.memory_space<vmem>>, vector<1x1x128xf32>
    tpu.vector_store %arg7[%c0_21, %c0_22, %c0_23], %53 {strides = array<i32>} : memref<1x1x128xf32, #tpu.memory_space<vmem>>, vector<1x1x128xf32>,
    return
  }
  func.func @transform_0(%arg0: i32, %arg1: i32) -> (i32, i32, i32) {
    %c0_i32 = arith.constant 0 : i32
    %c0_i32_0 = arith.constant 0 : i32
    return %arg0, %c0_i32, %arg1 : i32, i32, i32
  }
  func.func @transform_1(%arg0: i32, %arg1: i32) -> (i32, i32) {
    %c0_i32 = arith.constant 0 : i32
    %c0_i32_0 = arith.constant 0 : i32
    %c0_i32_1 = arith.constant 0 : i32
    return %c0_i32, %c0_i32_0 : i32, i32
  }
  func.func @transform_2(%arg0: i32, %arg1: i32) -> (i32, i32) {
    %c0_i32 = arith.constant 0 : i32
    %c0_i32_0 = arith.constant 0 : i32
    %c0_i32_1 = arith.constant 0 : i32
    return %c0_i32, %c0_i32_0 : i32, i32
  }
  func.func @transform_3(%arg0: i32, %arg1: i32) -> (i32, i32) {
    %c0_i32 = arith.constant 0 : i32
    %c0_i32_0 = arith.constant 0 : i32
    %c0_i32_1 = arith.constant 0 : i32
    return %c0_i32, %c0_i32_0 : i32, i32
  }
  func.func @transform_4(%arg0: i32, %arg1: i32) -> (i32, i32, i32) {
    %c0_i32 = arith.constant 0 : i32
    %c0_i32_0 = arith.constant 0 : i32
    %c0_i32_1 = arith.constant 0 : i32
    return %arg0, %c0_i32, %c0_i32_0 : i32, i32, i32
  }
  func.func @transform_5(%arg0: i32, %arg1: i32) -> (i32, i32, i32) {
    %c0_i32 = arith.constant 0 : i32
    %c0_i32_0 = arith.constant 0 : i32
    %c0_i32_1 = arith.constant 0 : i32
    return %arg0, %c0_i32, %c0_i32_0 : i32, i32, i32
  }
}

module attributes {stable_mosaic.version = 11 : i64} {
  func.func @fc_head_kernel(%arg0: memref<2x1024xf32, #tpu.memory_space<vmem>>, %arg1: memref<2x1024xf32, #tpu.memory_space<vmem>>, %arg2: memref<1024x512xbf16, #tpu.memory_space<vmem>>, %arg3: memref<512x256xf32, #tpu.memory_space<vmem>>, %arg4: memref<256x128xf32, #tpu.memory_space<vmem>>, %arg5: memref<1x128xf32, #tpu.memory_space<vmem>>, %arg6: memref<2x128xf32, #tpu.memory_space<vmem>>) attributes {dimension_semantics = [], scalar_prefetch = 0 : i64, scratch_operands = 0 : i64, tpu.core_type = #tpu.core_type<tc>} {
    %c0 = arith.constant 0 : index
    %c0_0 = arith.constant 0 : index
    %0 = vector.load %arg0[%c0, %c0_0] : memref<2x1024xf32, #tpu.memory_space<vmem>>, vector<2x1024xf32>
    %c0_1 = arith.constant 0 : index
    %c0_2 = arith.constant 0 : index
    %1 = vector.load %arg1[%c0_1, %c0_2] : memref<2x1024xf32, #tpu.memory_space<vmem>>, vector<1x1024xf32>
    %2 = vector.broadcast %1 : vector<1x1024xf32> to vector<2x1024xf32>
    %3 = arith.subf %0, %2 : vector<2x1024xf32>
    %c1 = arith.constant 1 : index
    %c0_3 = arith.constant 0 : index
    %4 = vector.load %arg1[%c1, %c0_3] : memref<2x1024xf32, #tpu.memory_space<vmem>>, vector<1x1024xf32>
    %5 = vector.broadcast %4 : vector<1x1024xf32> to vector<2x1024xf32>
    %6 = arith.mulf %3, %5 : vector<2x1024xf32>
    %cst = arith.constant 0.000000e+00 : f32
    %7 = vector.broadcast %cst : f32 to vector<2x1024xf32>
    %8 = arith.maximumf %6, %7 : vector<2x1024xf32>
    %9 = arith.truncf %8 : vector<2x1024xf32> to vector<2x1024xbf16>
    %c0_4 = arith.constant 0 : index
    %c0_5 = arith.constant 0 : index
    %10 = vector.load %arg2[%c0_4, %c0_5] : memref<1024x512xbf16, #tpu.memory_space<vmem>>, vector<1024x512xbf16>
    %cst_6 = arith.constant dense<0.000000e+00> : vector<2x512xf32>
    %11 = tpu.matmul %9, %10, %cst_6 {dimension_numbers = #tpu.dot_dimension_numbers<[1], [0], [0], [1], [0, 0, 1, 1], [], []>} : vector<2x1024xbf16>, vector<1024x512xbf16>, vector<2x512xf32> -> vector<2x512xf32>
    %cst_7 = arith.constant dense<0.000000e+00> : vector<512xf32>
    %12 = vector.multi_reduction <add>, %11, %cst_7 [0] : vector<2x512xf32> to vector<512xf32>
    %13 = vector.shape_cast %12 : vector<512xf32> to vector<1x512xf32>
    %cst_8 = arith.constant 2.000000e+00 : f32
    %14 = vector.broadcast %cst_8 : f32 to vector<1x512xf32>
    %15 = arith.divf %13, %14 : vector<1x512xf32>
    %16 = vector.broadcast %15 : vector<1x512xf32> to vector<2x512xf32>
    %17 = arith.subf %11, %16 : vector<2x512xf32>
    %18 = arith.mulf %17, %17 : vector<2x512xf32>
    %cst_9 = arith.constant dense<0.000000e+00> : vector<512xf32>
    %19 = vector.multi_reduction <add>, %18, %cst_9 [0] : vector<2x512xf32> to vector<512xf32>
    %20 = vector.shape_cast %19 : vector<512xf32> to vector<1x512xf32>
    %cst_10 = arith.constant 2.000000e+00 : f32
    %21 = vector.broadcast %cst_10 : f32 to vector<1x512xf32>
    %22 = arith.divf %20, %21 : vector<1x512xf32>
    %23 = vector.broadcast %15 : vector<1x512xf32> to vector<2x512xf32>
    %24 = arith.subf %11, %23 : vector<2x512xf32>
    %cst_11 = arith.constant 9.99999974E-6 : f32
    %25 = vector.broadcast %cst_11 : f32 to vector<1x512xf32>
    %26 = arith.addf %22, %25 : vector<1x512xf32>
    %27 = math.rsqrt %26 : vector<1x512xf32>
    %28 = vector.broadcast %27 : vector<1x512xf32> to vector<2x512xf32>
    %29 = arith.mulf %24, %28 : vector<2x512xf32>
    %cst_12 = arith.constant 0.000000e+00 : f32
    %30 = vector.broadcast %cst_12 : f32 to vector<2x512xf32>
    %31 = arith.maximumf %29, %30 : vector<2x512xf32>
    %c0_13 = arith.constant 0 : index
    %c0_14 = arith.constant 0 : index
    %32 = vector.load %arg3[%c0_13, %c0_14] : memref<512x256xf32, #tpu.memory_space<vmem>>, vector<512x256xf32>
    %cst_15 = arith.constant dense<0.000000e+00> : vector<2x256xf32>
    %33 = tpu.matmul %31, %32, %cst_15 {dimension_numbers = #tpu.dot_dimension_numbers<[1], [0], [0], [1], [0, 0, 1, 1], [], []>} : vector<2x512xf32>, vector<512x256xf32>, vector<2x256xf32> -> vector<2x256xf32>
    %cst_16 = arith.constant dense<0.000000e+00> : vector<256xf32>
    %34 = vector.multi_reduction <add>, %33, %cst_16 [0] : vector<2x256xf32> to vector<256xf32>
    %35 = vector.shape_cast %34 : vector<256xf32> to vector<1x256xf32>
    %cst_17 = arith.constant 2.000000e+00 : f32
    %36 = vector.broadcast %cst_17 : f32 to vector<1x256xf32>
    %37 = arith.divf %35, %36 : vector<1x256xf32>
    %38 = vector.broadcast %37 : vector<1x256xf32> to vector<2x256xf32>
    %39 = arith.subf %33, %38 : vector<2x256xf32>
    %40 = arith.mulf %39, %39 : vector<2x256xf32>
    %cst_18 = arith.constant dense<0.000000e+00> : vector<256xf32>
    %41 = vector.multi_reduction <add>, %40, %cst_18 [0] : vector<2x256xf32> to vector<256xf32>
    %42 = vector.shape_cast %41 : vector<256xf32> to vector<1x256xf32>
    %cst_19 = arith.constant 2.000000e+00 : f32
    %43 = vector.broadcast %cst_19 : f32 to vector<1x256xf32>
    %44 = arith.divf %42, %43 : vector<1x256xf32>
    %45 = vector.broadcast %37 : vector<1x256xf32> to vector<2x256xf32>
    %46 = arith.subf %33, %45 : vector<2x256xf32>
    %cst_20 = arith.constant 9.99999974E-6 : f32
    %47 = vector.broadcast %cst_20 : f32 to vector<1x256xf32>
    %48 = arith.addf %44, %47 : vector<1x256xf32>
    %49 = math.rsqrt %48 : vector<1x256xf32>
    %50 = vector.broadcast %49 : vector<1x256xf32> to vector<2x256xf32>
    %51 = arith.mulf %46, %50 : vector<2x256xf32>
    %cst_21 = arith.constant 0.000000e+00 : f32
    %52 = vector.broadcast %cst_21 : f32 to vector<2x256xf32>
    %53 = arith.maximumf %51, %52 : vector<2x256xf32>
    %c0_22 = arith.constant 0 : index
    %c0_23 = arith.constant 0 : index
    %54 = vector.load %arg4[%c0_22, %c0_23] : memref<256x128xf32, #tpu.memory_space<vmem>>, vector<256x128xf32>
    %cst_24 = arith.constant dense<0.000000e+00> : vector<2x128xf32>
    %55 = tpu.matmul %53, %54, %cst_24 {dimension_numbers = #tpu.dot_dimension_numbers<[1], [0], [0], [1], [0, 0, 1, 1], [], []>} : vector<2x256xf32>, vector<256x128xf32>, vector<2x128xf32> -> vector<2x128xf32>
    %c0_25 = arith.constant 0 : index
    %c0_26 = arith.constant 0 : index
    %56 = vector.load %arg5[%c0_25, %c0_26] : memref<1x128xf32, #tpu.memory_space<vmem>>, vector<1x128xf32>
    %57 = vector.broadcast %56 : vector<1x128xf32> to vector<2x128xf32>
    %58 = arith.addf %55, %57 : vector<2x128xf32>
    %c0_27 = arith.constant 0 : index
    %c0_28 = arith.constant 0 : index
    %59 = vector.load %arg6[%c0_27, %c0_28] : memref<2x128xf32, #tpu.memory_space<vmem>>, vector<2x128xf32>
    tpu.vector_store %arg6[%c0_27, %c0_28], %58 {strides = array<i32>} : memref<2x128xf32, #tpu.memory_space<vmem>>, vector<2x128xf32>,
    return
  }
}

</mosaic_0001>

<llo_original>
// kernel: stn3d_forward.3
$region0: #{stn3d_forward.3}
  #allocation0 [shape = 'u32[]', space=smem, size = 0x4, offset = 0x4, fixed_abs, tag = 'smem constant byte address 0x4 - core index']
  #allocation1 [shape = 'u32[144,128]{1,0:T(1,128)}', space=vmem, size = 0x12000, scoped, tag = 'internal scratch']
  %s0 = inlined_call_operand.vmem [shape: f32[2,8,128], index: 0, kind: input, shape index: {}]
  %s1 = inlined_call_operand.vmem [shape: f32[8,64], index: 1, kind: input, shape index: {}]
  %s2 = inlined_call_operand.vmem [shape: f32[1,64], index: 2, kind: input, shape index: {}]
  %s3 = inlined_call_operand.vmem [shape: bf16[64,128], index: 3, kind: input, shape index: {}]
  %s4 = inlined_call_operand.vmem [shape: f32[2,1,128], index: 4, kind: output, shape index: {0}]
  %s5 = inlined_call_operand.vmem [shape: f32[2,1,128], index: 5, kind: output, shape index: {1}]
  %6 = xla_tuple %s4, %s5
  %s7 = sld [smem:[#allocation0]]
  $region61: #{stn3d_forward.3} parent=0
    _
  %s9 = ssub.s32 1, %s7
  %s10 = scalar_select 0, %s9, %s7
  loop: start=0, step=1, limit=4
  $region2: #{stn3d_forward.3} parent=0 // loop_pre_header
    _
  $region3: #{stn3d_forward.3} parent=0 // loop_header
    %s12 = sphi 0, %s16
    %p13 = scmp.ge.s32.totalorder %s12, 4
    %s19 = sphi 0, %s31
    %s20 = sphi 0, %s27
    %s21 = sphi 0, %s19
    %s22 = sphi 0, %s20
    %s23 = sphi 0, %s21
    %s24 = sphi 0, %s22
    %s36 = sphi 0, %s38
    %s39 = sphi 0, %s36
    %s40 = sphi 0, %s39
    %s56 = sphi 0, %s40
    %s60 = sphi 0, %s60
    %s62 = sphi 0, %s60
    %s63 = sphi 0, %s62
    %s77 = sphi 0, %s63
    %s81 = sphi 0, %s81
    %s83 = sphi 0, %s81
    %s84 = sphi 0, %s83
    %s98 = sphi 0, %s84
    %s102 = sphi 0, %s102
    %s104 = sphi 0, %s102
    %s105 = sphi 0, %s104
    %s119 = sphi 0, %s105
    %s125 = sphi 0, %s127
    %s128 = sphi 0, %s125
    %s129 = sphi 0, %s128
    %s145 = sphi 0, %s129
    %s151 = sphi 0, %s153
    %s154 = sphi 0, %s151
    %s155 = sphi 0, %s154
    %s171 = sphi 0, %s155
  $region4: #{stn3d_forward.3} parent=0 // loop_header_branch
    %15 = sbr.rel (%p13) target = $region8
  $region5: #{stn3d_forward.3} parent=0 // loop_body
    %s17 = ssub.s32 %s12, 1
    %s18 = ssub.s32 %s12, 2
    %s25 = sadd.s32 1, %s20
    %p26 = scmp.ge.s32.totalorder %s25, 1
    %s27 = scalar_select %p26, 0, %s25
    %s28 = sadd.s32 1, %s19
    %s29 = scalar_select %p26, %s28, %s19
    %p30 = scmp.ge.s32.totalorder %s29, 2
    %s31 = scalar_select %p30, 0, %s29
    %s32 = ssub.s32 %s19, %s31
    %s33 = ssub.s32 %s20, %s27
    %s34 = sor.u32 %s32, %s33
    %p35 = scmp.eq.s32.totalorder %s34, 0
    %s37 = sadd.s32 %s36, 1
    %s38 = scalar_select %p35, %s36, %s37
    %p41 = pneg %p35
    %p42 = scmp.eq.s32.totalorder %s12, 1
    %p43 = por %p41, %p42
    %p44 = scmp.ne.s32.totalorder %s36, %s39
    %p45 = scmp.eq.s32.totalorder %s12, 0
    %p46 = por %p44, %p45
    %p47 = scmp.ne.s32.totalorder %s36, %s39
    %p48 = scmp.eq.s32.totalorder %s17, 1
    %p49 = por %p47, %p48
    %p50 = scmp.ne.s32.totalorder %s39, %s40
    %p51 = scmp.eq.s32.totalorder %s17, 0
    %p52 = por %p50, %p51
    %p53 = scmp.ne.s32.totalorder %s39, %s40
    %p54 = scmp.eq.s32.totalorder %s18, 1
    %p55 = por %p53, %p54
    %p57 = scmp.ne.s32.totalorder %s40, %s56
    %p58 = scmp.eq.s32.totalorder %s18, 0
    %p59 = por %p57, %p58
    %s61 = sadd.s32 %s60, 1
    %p64 = scmp.eq.s32.totalorder %s12, 1
    %p65 = scmp.ne.s32.totalorder %s60, %s62
    %p66 = scmp.eq.s32.totalorder %s12, 0
    %p67 = por %p65, %p66
    %p68 = scmp.ne.s32.totalorder %s60, %s62
    %p69 = scmp.eq.s32.totalorder %s17, 1
    %p70 = por %p68, %p69
    %p71 = scmp.ne.s32.totalorder %s62, %s63
    %p72 = scmp.eq.s32.totalorder %s17, 0
    %p73 = por %p71, %p72
    %p74 = scmp.ne.s32.totalorder %s62, %s63
    %p75 = scmp.eq.s32.totalorder %s18, 1
    %p76 = por %p74, %p75
    %p78 = scmp.ne.s32.totalorder %s63, %s77
    %p79 = scmp.eq.s32.totalorder %s18, 0
    %p80 = por %p78, %p79
    %s82 = sadd.s32 %s81, 1
    %p85 = scmp.eq.s32.totalorder %s12, 1
    %p86 = scmp.ne.s32.totalorder %s81, %s83
    %p87 = scmp.eq.s32.totalorder %s12, 0
    %p88 = por %p86, %p87
    %p89 = scmp.ne.s32.totalorder %s81, %s83
    %p90 = scmp.eq.s32.totalorder %s17, 1
    %p91 = por %p89, %p90
    %p92 = scmp.ne.s32.totalorder %s83, %s84
    %p93 = scmp.eq.s32.totalorder %s17, 0
    %p94 = por %p92, %p93
    %p95 = scmp.ne.s32.totalorder %s83, %s84
    %p96 = scmp.eq.s32.totalorder %s18, 1
    %p97 = por %p95, %p96
    %p99 = scmp.ne.s32.totalorder %s84, %s98
    %p100 = scmp.eq.s32.totalorder %s18, 0
    %p101 = por %p99, %p100
    %s103 = sadd.s32 %s102, 1
    %p106 = scmp.eq.s32.totalorder %s12, 1
    %p107 = scmp.ne.s32.totalorder %s102, %s104
    %p108 = scmp.eq.s32.totalorder %s12, 0
    %p109 = por %p107, %p108
    %p110 = scmp.ne.s32.totalorder %s102, %s104
    %p111 = scmp.eq.s32.totalorder %s17, 1
    %p112 = por %p110, %p111
    %p113 = scmp.ne.s32.totalorder %s104, %s105
    %p114 = scmp.eq.s32.totalorder %s17, 0
    %p115 = por %p113, %p114
    %p116 = scmp.ne.s32.totalorder %s104, %s105
    %p117 = scmp.eq.s32.totalorder %s18, 1
    %p118 = por %p116, %p117
    %p120 = scmp.ne.s32.totalorder %s105, %s119
    %p121 = scmp.eq.s32.totalorder %s18, 0
    %p122 = por %p120, %p121
    %s123 = ssub.s32 %s19, %s31
    %p124 = scmp.eq.s32.totalorder %s123, 0
    %s126 = sadd.s32 %s125, 1
    %s127 = scalar_select %p124, %s125, %s126
    %p130 = pneg %p124
    %p131 = scmp.eq.s32.totalorder %s12, 1
    %p132 = por %p130, %p131
    %p133 = scmp.ne.s32.totalorder %s125, %s128
    %p134 = scmp.eq.s32.totalorder %s12, 0
    %p135 = por %p133, %p134
    %p136 = scmp.ne.s32.totalorder %s125, %s128
    %p137 = scmp.eq.s32.totalorder %s17, 1
    %p138 = por %p136, %p137
    %p139 = scmp.ne.s32.totalorder %s128, %s129
    %p140 = scmp.eq.s32.totalorder %s17, 0
    %p141 = por %p139, %p140
    %p142 = scmp.ne.s32.totalorder %s128, %s129
    %p143 = scmp.eq.s32.totalorder %s18, 1
    %p144 = por %p142, %p143
    %p146 = scmp.ne.s32.totalorder %s129, %s145
    %p147 = scmp.eq.s32.totalorder %s18, 0
    %p148 = por %p146, %p147
    %s149 = ssub.s32 %s19, %s31
    %p150 = scmp.eq.s32.totalorder %s149, 0
    %s152 = sadd.s32 %s151, 1
    %s153 = scalar_select %p150, %s151, %s152
    %p156 = pneg %p150
    %p157 = scmp.eq.s32.totalorder %s12, 1
    %p158 = por %p156, %p157
    %p159 = scmp.ne.s32.totalorder %s151, %s154
    %p160 = scmp.eq.s32.totalorder %s12, 0
    %p161 = por %p159, %p160
    %p162 = scmp.ne.s32.totalorder %s151, %s154
    %p163 = scmp.eq.s32.totalorder %s17, 1
    %p164 = por %p162, %p163
    %p165 = scmp.ne.s32.totalorder %s154, %s155
    %p166 = scmp.eq.s32.totalorder %s17, 0
    %p167 = por %p165, %p166
    %p168 = scmp.ne.s32.totalorder %s154, %s155
    %p169 = scmp.eq.s32.totalorder %s18, 1
    %p170 = por %p168, %p169
    %p172 = scmp.ne.s32.totalorder %s155, %s171
    %p173 = scmp.eq.s32.totalorder %s18, 0
    %p174 = por %p172, %p173
    %p175 = scmp.le.s32.totalorder 1, %s12
    %p176 = scmp.lt.s32.totalorder %s12, 3
    %p177 = pnand %p175, %p176
    %p178 = pneg %p177
    // Predicated region
    $region9: #{stn3d_forward.3} parent=5 // pred_check
      _
    $region10: #{stn3d_forward.3} parent=5 // pred_check_branch
      %180 = sbr.rel (%p177) target = $region12
    $region11: #{stn3d_forward.3} parent=5 // pred_region
      %s181 = ssub.s32 %s12, 1
      // Predicated region
      $region13: #{stn3d_forward.3} parent=11 // pred_check
        %p182 = pneg %p73
      $region14: #{stn3d_forward.3} parent=11 // pred_check_branch
        %184 = sbr.rel (%p182) target = $region16
      $region15: #{stn3d_forward.3} parent=11 // pred_region
        _
      $region16: #{stn3d_forward.3} parent=11 // pred_fallthru
        _
      // Predicated region
      $region17: #{stn3d_forward.3} parent=11 // pred_check
        %p185 = pneg %p94
      $region18: #{stn3d_forward.3} parent=11 // pred_check_branch
        %187 = sbr.rel (%p185) target = $region20
      $region19: #{stn3d_forward.3} parent=11 // pred_region
        _
      $region20: #{stn3d_forward.3} parent=11 // pred_fallthru
        _
      // Predicated region
      $region21: #{stn3d_forward.3} parent=11 // pred_check
        %p188 = pneg %p115
      $region22: #{stn3d_forward.3} parent=11 // pred_check_branch
        %190 = sbr.rel (%p188) target = $region24
      $region23: #{stn3d_forward.3} parent=11 // pred_region
        _
      $region24: #{stn3d_forward.3} parent=11 // pred_fallthru
        _
    $region12: #{stn3d_forward.3} parent=5 // pred_fallthru
      _
    %p191 = scmp.lt.s32.totalorder %s12, 2
    // Predicated region
    $region25: #{stn3d_forward.3} parent=5 // pred_check
      %p192 = pneg %p191
    $region26: #{stn3d_forward.3} parent=5 // pred_check_branch
      %194 = sbr.rel (%p192) target = $region28
    $region27: #{stn3d_forward.3} parent=5 // pred_region
      // Predicated region
      $region29: #{stn3d_forward.3} parent=27 // pred_check
        %p195 = pneg %p46
      $region30: #{stn3d_forward.3} parent=27 // pred_check_branch
        %197 = sbr.rel (%p195) target = $region32
      $region31: #{stn3d_forward.3} parent=27 // pred_region
        %p198 = scmp.lt.s32.totalorder %s19, 1
        %s199 = scalar_select %p198, %s19, 1
        %p200 = scmp.lt.s32.totalorder %s20, 0
        %s201 = scalar_select %p200, %s20, 0
        %s202 = sadd.s32 %s201, %s199
        %s203 = smul.addr %s202, 8
        %s204 = scalar_lea.vmem %s0, %s203
      $region32: #{stn3d_forward.3} parent=27 // pred_fallthru
        _
    $region28: #{stn3d_forward.3} parent=5 // pred_fallthru
      _
    %p205 = scmp.le.s32.totalorder 1, %s12
    %p206 = scmp.lt.s32.totalorder %s12, 3
    %p207 = pnand %p205, %p206
    %p208 = pneg %p207
    // Predicated region
    $region33: #{stn3d_forward.3} parent=5 // pred_check
      _
    $region34: #{stn3d_forward.3} parent=5 // pred_check_branch
      %210 = sbr.rel (%p207) target = $region36
    $region35: #{stn3d_forward.3} parent=5 // pred_region
      %s211 = ssub.s32 %s12, 1
      %p212 = scmp.lt.s32.totalorder %s21, 1
      %s213 = scalar_select %p212, %s21, 1
      %p214 = scmp.lt.s32.totalorder %s22, 0
      %s215 = scalar_select %p214, %s22, 0
      %s216 = sadd.s32 %s215, %s213
      %s217 = smul.addr %s216, 8
      %s218 = scalar_lea.vmem %s0, %s217
      %p219 = pneg %p52
      %p220 = pneg %p49
      %p221 = pneg %p73
      %p222 = pneg %p70
      %p223 = pneg %p94
      %p224 = pneg %p91
      %p225 = pneg %p115
      %p226 = pneg %p112
      %p227 = pneg %p141
      %p228 = pneg %p138
      %p229 = scmp.lt.s32.totalorder %s21, 1
      %s230 = scalar_select %p229, %s21, 1
      %s231 = scalar_lea.vmem %s4, %s230
      %p232 = pneg %p167
      %p233 = pneg %p164
      %p234 = scmp.lt.s32.totalorder %s21, 1
      %s235 = scalar_select %p234, %s21, 1
      %s236 = scalar_lea.vmem %s5, %s235
      %p237 = scmp.lt.s32.totalorder %s21, 1
      %s238 = scalar_select %p237, %s21, 1
      %p239 = scmp.lt.s32.totalorder %s22, 0
      %s240 = scalar_select %p239, %s22, 0
      %s241 = sadd.s32 %s240, %s238
      %s242 = smul.addr %s241, 8
      %s243 = scalar_lea.vmem %s0, %s242
      %p244 = scmp.lt.s32.totalorder %s21, 1
      %s245 = scalar_select %p244, %s21, 1
      %s246 = scalar_lea.vmem %s4, %s245
      %p247 = scmp.lt.s32.totalorder %s21, 1
      %s248 = scalar_select %p247, %s21, 1
      %s249 = scalar_lea.vmem %s5, %s248
      %p251 = scmp.eq.s32.totalorder %s22, 0
      // Predicated region
      $region37: #{stn3d_forward.3} parent=35 // pred_check
        %p252 = pneg %p251
      $region38: #{stn3d_forward.3} parent=35 // pred_check_branch
        %254 = sbr.rel (%p252) target = $region40
      $region39: #{stn3d_forward.3} parent=35 // pred_region
        %255 = vst [vmem:[%s246] sm:$0x1] 0.0
        %256 = vst [vmem:[%s249] sm:$0x1] 0.0
      $region40: #{stn3d_forward.3} parent=35 // pred_fallthru
        _
      %v257 = vld [vmem:[%s243] sm:$0xff]
      %258 = vxpose.xlu0.b32.start [1/16] %v257, 128
      %259 = vxpose.xlu0.b32.cont [2/16] 0.0, 128
      %260 = vxpose.xlu0.b32.cont [3/16] 0.0, 128
      %261 = vxpose.xlu0.b32.cont [4/16] 0.0, 128
      %262 = vxpose.xlu0.b32.cont [5/16] 0.0, 128
      %263 = vxpose.xlu0.b32.cont [6/16] 0.0, 128
      %264 = vxpose.xlu0.b32.cont [7/16] 0.0, 128
      %265 = vxpose.xlu0.b32.cont [8/16] 0.0, 128
      %266 = vxpose.xlu0.b32.cont [9/16] 0.0, 128
      %267 = vxpose.xlu0.b32.cont [10/16] 0.0, 128
      %268 = vxpose.xlu0.b32.cont [11/16] 0.0, 128
      %269 = vxpose.xlu0.b32.cont [12/16] 0.0, 128
      %270 = vxpose.xlu0.b32.cont [13/16] 0.0, 128
      %271 = vxpose.xlu0.b32.cont [14/16] 0.0, 128
      %272 = vxpose.xlu0.b32.cont [15/16] 0.0, 128
      %273 = vxpose.xlu0.b32.end [16/16] 0.0, 128
      %v274 = vpop.trf.xlu0
      %v275 = vpop.trf.xlu0
      %v276 = vpop.trf.xlu0
      %v277 = vpop.trf.xlu0
      %v278 = vpop.trf.xlu0
      %v279 = vpop.trf.xlu0
      %v280 = vpop.trf.xlu0
      %v281 = vpop.trf.xlu0
      %v282 = vpop.trf.xlu0
      %v283 = vpop.trf.xlu0
      %v284 = vpop.trf.xlu0
      %v285 = vpop.trf.xlu0
      %v286 = vpop.trf.xlu0
      %v287 = vpop.trf.xlu0
      %v288 = vpop.trf.xlu0
      %v289 = vpop.trf.xlu0
      %v290 = vld [vmem:[%s1] sm:$0xff]
      %v291 = vld [vmem:[%s2] sm:$0x1]
      %293 = vset.pattern.permute.xlu0 0
      %294 = vperm.xlu0 %293, %v274
      %v295 = vpop.permute.xlu0 %294
      %298 = vset.pattern.permute.xlu0 0
      %299 = vperm.xlu0 %298, %v275
      %v300 = vpop.permute.xlu0 %299
      %303 = vset.pattern.permute.xlu0 0
      %304 = vperm.xlu0 %303, %v276
      %v305 = vpop.permute.xlu0 %304
      %308 = vset.pattern.permute.xlu0 0
      %309 = vperm.xlu0 %308, %v277
      %v310 = vpop.permute.xlu0 %309
      %313 = vset.pattern.permute.xlu0 0
      %314 = vperm.xlu0 %313, %v278
      %v315 = vpop.permute.xlu0 %314
      %318 = vset.pattern.permute.xlu0 0
      %319 = vperm.xlu0 %318, %v279
      %v320 = vpop.permute.xlu0 %319
      %323 = vset.pattern.permute.xlu0 0
      %324 = vperm.xlu0 %323, %v280
      %v325 = vpop.permute.xlu0 %324
      %328 = vset.pattern.permute.xlu0 0
      %329 = vperm.xlu0 %328, %v281
      %v330 = vpop.permute.xlu0 %329
      %333 = vset.pattern.permute.xlu0 0
      %334 = vperm.xlu0 %333, %v282
      %v335 = vpop.permute.xlu0 %334
      %338 = vset.pattern.permute.xlu0 0
      %339 = vperm.xlu0 %338, %v283
      %v340 = vpop.permute.xlu0 %339
      %343 = vset.pattern.permute.xlu0 0
      %344 = vperm.xlu0 %343, %v284
      %v345 = vpop.permute.xlu0 %344
      %348 = vset.pattern.permute.xlu0 0
      %349 = vperm.xlu0 %348, %v285
      %v350 = vpop.permute.xlu0 %349
      %353 = vset.pattern.permute.xlu0 0
      %354 = vperm.xlu0 %353, %v286
      %v355 = vpop.permute.xlu0 %354
      %358 = vset.pattern.permute.xlu0 0
      %359 = vperm.xlu0 %358, %v287
      %v360 = vpop.permute.xlu0 %359
      %363 = vset.pattern.permute.xlu0 0
      %364 = vperm.xlu0 %363, %v288
      %v365 = vpop.permute.xlu0 %364
      %368 = vset.pattern.permute.xlu0 0
      %369 = vperm.xlu0 %368, %v289
      %v370 = vpop.permute.xlu0 %369
      %v372 = vlaneseq
      %v373 = vshrl.u32 %v372, 7
      %v374 = vsub.s32 0, %v373
      %v375 = vrot.slane %v290, %v374
      %v376 = vmul.f32 %v295, %v375
      %v377 = vmul.f32 %v300, %v375
      %v378 = vmul.f32 %v305, %v375
      %v379 = vmul.f32 %v310, %v375
      %v380 = vmul.f32 %v315, %v375
      %v381 = vmul.f32 %v320, %v375
      %v382 = vmul.f32 %v325, %v375
      %v383 = vmul.f32 %v330, %v375
      %v384 = vmul.f32 %v335, %v375
      %v385 = vmul.f32 %v340, %v375
      %v386 = vmul.f32 %v345, %v375
      %v387 = vmul.f32 %v350, %v375
      %v388 = vmul.f32 %v355, %v375
      %v389 = vmul.f32 %v360, %v375
      %v390 = vmul.f32 %v365, %v375
      %v391 = vmul.f32 %v370, %v375
      %392 = vset.pattern.permute.xlu0 1
      %393 = vperm.xlu0 %392, %v274
      %v394 = vpop.permute.xlu0 %393
      %396 = vset.pattern.permute.xlu0 1
      %397 = vperm.xlu0 %396, %v275
      %v398 = vpop.permute.xlu0 %397
      %400 = vset.pattern.permute.xlu0 1
      %401 = vperm.xlu0 %400, %v276
      %v402 = vpop.permute.xlu0 %401
      %404 = vset.pattern.permute.xlu0 1
      %405 = vperm.xlu0 %404, %v277
      %v406 = vpop.permute.xlu0 %405
      %408 = vset.pattern.permute.xlu0 1
      %409 = vperm.xlu0 %408, %v278
      %v410 = vpop.permute.xlu0 %409
      %412 = vset.pattern.permute.xlu0 1
      %413 = vperm.xlu0 %412, %v279
      %v414 = vpop.permute.xlu0 %413
      %416 = vset.pattern.permute.xlu0 1
      %417 = vperm.xlu0 %416, %v280
      %v418 = vpop.permute.xlu0 %417
      %420 = vset.pattern.permute.xlu0 1
      %421 = vperm.xlu0 %420, %v281
      %v422 = vpop.permute.xlu0 %421
      %424 = vset.pattern.permute.xlu0 1
      %425 = vperm.xlu0 %424, %v282
      %v426 = vpop.permute.xlu0 %425
      %428 = vset.pattern.permute.xlu0 1
      %429 = vperm.xlu0 %428, %v283
      %v430 = vpop.permute.xlu0 %429
      %432 = vset.pattern.permute.xlu0 1
      %433 = vperm.xlu0 %432, %v284
      %v434 = vpop.permute.xlu0 %433
      %436 = vset.pattern.permute.xlu0 1
      %437 = vperm.xlu0 %436, %v285
      %v438 = vpop.permute.xlu0 %437
      %440 = vset.pattern.permute.xlu0 1
      %441 = vperm.xlu0 %440, %v286
      %v442 = vpop.permute.xlu0 %441
      %444 = vset.pattern.permute.xlu0 1
      %445 = vperm.xlu0 %444, %v287
      %v446 = vpop.permute.xlu0 %445
      %448 = vset.pattern.permute.xlu0 1
      %449 = vperm.xlu0 %448, %v288
      %v450 = vpop.permute.xlu0 %449
      %452 = vset.pattern.permute.xlu0 1
      %453 = vperm.xlu0 %452, %v289
      %v454 = vpop.permute.xlu0 %453
      %v456 = vlaneseq
      %v457 = vshrl.u32 %v456, 7
      %v458 = vsub.s32 1, %v457
      %v459 = vrot.slane %v290, %v458
      %v460 = vmul.f32 %v394, %v459
      %v461 = vmul.f32 %v398, %v459
      %v462 = vmul.f32 %v402, %v459
      %v463 = vmul.f32 %v406, %v459
      %v464 = vmul.f32 %v410, %v459
      %v465 = vmul.f32 %v414, %v459
      %v466 = vmul.f32 %v418, %v459
      %v467 = vmul.f32 %v422, %v459
      %v468 = vmul.f32 %v426, %v459
      %v469 = vmul.f32 %v430, %v459
      %v470 = vmul.f32 %v434, %v459
      %v471 = vmul.f32 %v438, %v459
      %v472 = vmul.f32 %v442, %v459
      %v473 = vmul.f32 %v446, %v459
      %v474 = vmul.f32 %v450, %v459
      %v475 = vmul.f32 %v454, %v459
      %v476 = vadd.f32 %v376, %v460
      %v477 = vadd.f32 %v377, %v461
      %v478 = vadd.f32 %v378, %v462
      %v479 = vadd.f32 %v379, %v463
      %v480 = vadd.f32 %v380, %v464
      %v481 = vadd.f32 %v381, %v465
      %v482 = vadd.f32 %v382, %v466
      %v483 = vadd.f32 %v383, %v467
      %v484 = vadd.f32 %v384, %v468
      %v485 = vadd.f32 %v385, %v469
      %v486 = vadd.f32 %v386, %v470
      %v487 = vadd.f32 %v387, %v471
      %v488 = vadd.f32 %v388, %v472
      %v489 = vadd.f32 %v389, %v473
      %v490 = vadd.f32 %v390, %v474
      %v491 = vadd.f32 %v391, %v475
      %492 = vset.pattern.permute.xlu0 2
      %493 = vperm.xlu0 %492, %v274
      %v494 = vpop.permute.xlu0 %493
      %496 = vset.pattern.permute.xlu0 2
      %497 = vperm.xlu0 %496, %v275
      %v498 = vpop.permute.xlu0 %497
      %500 = vset.pattern.permute.xlu0 2
      %501 = vperm.xlu0 %500, %v276
      %v502 = vpop.permute.xlu0 %501
      %504 = vset.pattern.permute.xlu0 2
      %505 = vperm.xlu0 %504, %v277
      %v506 = vpop.permute.xlu0 %505
      %508 = vset.pattern.permute.xlu0 2
      %509 = vperm.xlu0 %508, %v278
      %v510 = vpop.permute.xlu0 %509
      %512 = vset.pattern.permute.xlu0 2
      %513 = vperm.xlu0 %512, %v279
      %v514 = vpop.permute.xlu0 %513
      %516 = vset.pattern.permute.xlu0 2
      %517 = vperm.xlu0 %516, %v280
      %v518 = vpop.permute.xlu0 %517
      %520 = vset.pattern.permute.xlu0 2
      %521 = vperm.xlu0 %520, %v281
      %v522 = vpop.permute.xlu0 %521
      %524 = vset.pattern.permute.xlu0 2
      %525 = vperm.xlu0 %524, %v282
      %v526 = vpop.permute.xlu0 %525
      %528 = vset.pattern.permute.xlu0 2
      %529 = vperm.xlu0 %528, %v283
      %v530 = vpop.permute.xlu0 %529
      %532 = vset.pattern.permute.xlu0 2
      %533 = vperm.xlu0 %532, %v284
      %v534 = vpop.permute.xlu0 %533
      %536 = vset.pattern.permute.xlu0 2
      %537 = vperm.xlu0 %536, %v285
      %v538 = vpop.permute.xlu0 %537
      %540 = vset.pattern.permute.xlu0 2
      %541 = vperm.xlu0 %540, %v286
      %v542 = vpop.permute.xlu0 %541
      %544 = vset.pattern.permute.xlu0 2
      %545 = vperm.xlu0 %544, %v287
      %v546 = vpop.permute.xlu0 %545
      %548 = vset.pattern.permute.xlu0 2
      %549 = vperm.xlu0 %548, %v288
      %v550 = vpop.permute.xlu0 %549
      %552 = vset.pattern.permute.xlu0 2
      %553 = vperm.xlu0 %552, %v289
      %v554 = vpop.permute.xlu0 %553
      %v556 = vlaneseq
      %v557 = vshrl.u32 %v556, 7
      %v558 = vsub.s32 2, %v557
      %v559 = vrot.slane %v290, %v558
      %v560 = vmul.f32 %v494, %v559
      %v561 = vmul.f32 %v498, %v559
      %v562 = vmul.f32 %v502, %v559
      %v563 = vmul.f32 %v506, %v559
      %v564 = vmul.f32 %v510, %v559
      %v565 = vmul.f32 %v514, %v559
      %v566 = vmul.f32 %v518, %v559
      %v567 = vmul.f32 %v522, %v559
      %v568 = vmul.f32 %v526, %v559
      %v569 = vmul.f32 %v530, %v559
      %v570 = vmul.f32 %v534, %v559
      %v571 = vmul.f32 %v538, %v559
      %v572 = vmul.f32 %v542, %v559
      %v573 = vmul.f32 %v546, %v559
      %v574 = vmul.f32 %v550, %v559
      %v575 = vmul.f32 %v554, %v559
      %v576 = vadd.f32 %v476, %v560
      %v577 = vadd.f32 %v477, %v561
      %v578 = vadd.f32 %v478, %v562
      %v579 = vadd.f32 %v479, %v563
      %v580 = vadd.f32 %v480, %v564
      %v581 = vadd.f32 %v481, %v565
      %v582 = vadd.f32 %v482, %v566
      %v583 = vadd.f32 %v483, %v567
      %v584 = vadd.f32 %v484, %v568
      %v585 = vadd.f32 %v485, %v569
      %v586 = vadd.f32 %v486, %v570
      %v587 = vadd.f32 %v487, %v571
      %v588 = vadd.f32 %v488, %v572
      %v589 = vadd.f32 %v489, %v573
      %v590 = vadd.f32 %v490, %v574
      %v591 = vadd.f32 %v491, %v575
      %v593 = vlaneseq
      %v594 = vshrl.u32 %v593, 7
      %v595 = vsub.s32 0, %v594
      %v596 = vrot.slane %v291, %v595
      %v598 = vadd.f32 %v576, %v596
      %v599 = vadd.f32 %v577, %v596
      %v600 = vadd.f32 %v578, %v596
      %v601 = vadd.f32 %v579, %v596
      %v602 = vadd.f32 %v580, %v596
      %v603 = vadd.f32 %v581, %v596
      %v604 = vadd.f32 %v582, %v596
      %v605 = vadd.f32 %v583, %v596
      %v606 = vadd.f32 %v584, %v596
      %v607 = vadd.f32 %v585, %v596
      %v608 = vadd.f32 %v586, %v596
      %v609 = vadd.f32 %v587, %v596
      %v610 = vadd.f32 %v588, %v596
      %v611 = vadd.f32 %v589, %v596
      %v612 = vadd.f32 %v590, %v596
      %v613 = vadd.f32 %v591, %v596
      %v614 = vmax.f32 %v598, 0.0
      %v615 = vmax.f32 %v599, 0.0
      %v616 = vmax.f32 %v600, 0.0
      %v617 = vmax.f32 %v601, 0.0
      %v618 = vmax.f32 %v602, 0.0
      %v619 = vmax.f32 %v603, 0.0
      %v620 = vmax.f32 %v604, 0.0
      %v621 = vmax.f32 %v605, 0.0
      %v622 = vmax.f32 %v606, 0.0
      %v623 = vmax.f32 %v607, 0.0
      %v624 = vmax.f32 %v608, 0.0
      %v625 = vmax.f32 %v609, 0.0
      %v626 = vmax.f32 %v610, 0.0
      %v627 = vmax.f32 %v611, 0.0
      %v628 = vmax.f32 %v612, 0.0
      %v629 = vmax.f32 %v613, 0.0
      %v630 = vpack.c.bf16 %v615, %v614
      %v631 = vpack.c.bf16 %v617, %v616
      %v632 = vpack.c.bf16 %v619, %v618
      %v633 = vpack.c.bf16 %v621, %v620
      %v634 = vpack.c.bf16 %v623, %v622
      %v635 = vpack.c.bf16 %v625, %v624
      %v636 = vpack.c.bf16 %v627, %v626
      %v637 = vpack.c.bf16 %v629, %v628
      %v638 = vld [vmem:[%s3] sm:$0xf]
      %v639 = vld [vmem:[%s3 + $0x4] sm:$0xf]
      %v640 = vld [vmem:[%s3 + $0x8] sm:$0xf]
      %v641 = vld [vmem:[%s3 + $0xc] sm:$0xf]
      %v642 = vld [vmem:[%s3 + $0x10] sm:$0xf]
      %v643 = vld [vmem:[%s3 + $0x14] sm:$0xf]
      %v644 = vld [vmem:[%s3 + $0x18] sm:$0xf]
      %v645 = vld [vmem:[%s3 + $0x1c] sm:$0xf]
      %v654 = vunpack.c.l.b16 %v638
      %v655 = vunpack.c.l.b16 %v639
      %v656 = vunpack.c.l.b16 %v640
      %v657 = vunpack.c.l.b16 %v641
      %v658 = vunpack.c.l.b16 %v642
      %v659 = vunpack.c.l.b16 %v643
      %v660 = vunpack.c.l.b16 %v644
      %v661 = vunpack.c.l.b16 %v645
      %v662 = vpack.c.b16 %v655, %v654
      %v663 = vpack.c.b16 %v657, %v656
      %v664 = vpack.c.b16 %v659, %v658
      %v665 = vpack.c.b16 %v661, %v660
      %vm670 = vcmask 523264
      %v672 = vsel %vm670, %v630, 0
      %v675 = vsel %vm670, %v631, 0
      %v678 = vsel %vm670, %v632, 0
      %v681 = vsel %vm670, %v633, 0
      %v684 = vsel %vm670, %v634, 0
      %v687 = vsel %vm670, %v635, 0
      %v690 = vsel %vm670, %v636, 0
      %v693 = vsel %vm670, %v637, 0
      %695 = vmatprep.subr.bf16.mxu0 0
      %696 = vmatpush1.bf16.msra.mxu0 %v662
      %697 = vmatprep.subr.bf16.mxu0 0
      %698 = vmatpush1.bf16.msra.mxu0 %v663
      %699 = vmatprep.subr.bf16.mxu0 0
      %700 = vmatpush1.bf16.msra.mxu0 %v664
      %701 = vmatprep.subr.bf16.mxu0 0
      %702 = vmatpush1.bf16.msra.mxu0 %v665
      %703 = vmatprep.subr.bf16.mxu0 0
      %704 = vmatpush1.bf16.msra.mxu0 0
      %705 = vmatprep.subr.bf16.mxu0 0
      %706 = vmatpush1.bf16.msra.mxu0 0
      %707 = vmatprep.subr.bf16.mxu0 0
      %708 = vmatpush1.bf16.msra.mxu0 0
      %709 = vmatprep.subr.bf16.mxu0 0
      %710 = vmatpush1.bf16.msra.mxu0 0
      %711 = vmatprep.subr.bf16.mxu0 0
      %712 = vmatpush1.bf16.msra.mxu0 0
      %713 = vmatprep.subr.bf16.mxu0 0
      %714 = vmatpush1.bf16.msra.mxu0 0
      %715 = vmatprep.subr.bf16.mxu0 0
      %716 = vmatpush1.bf16.msra.mxu0 0
      %717 = vmatprep.subr.bf16.mxu0 0
      %718 = vmatpush1.bf16.msra.mxu0 0
      %719 = vmatprep.subr.bf16.mxu0 0
      %720 = vmatpush1.bf16.msra.mxu0 0
      %721 = vmatprep.subr.bf16.mxu0 0
      %722 = vmatpush1.bf16.msra.mxu0 0
      %723 = vmatprep.subr.bf16.mxu0 0
      %724 = vmatpush1.bf16.msra.mxu0 0
      %725 = vmatprep.subr.bf16.mxu0 0
      %726 = vmatpush1.bf16.msra.mxu0 0
      %727 = vmatprep.mubr.bf16.mxu0 0
      %728 = vmatmul.mubr.bf16.gmra.mrb[0].mxu0 %v672
      %v729 = vpop.f32.mrb[0].mxu0
      %v730 = vadd.f32 0.0, %v729
      %v731 = vpop.f32.mrb[0].mxu0
      %v732 = vpop.f32.mrb[0].mxu0
      %v733 = vadd.f32 0.0, %v732
      %v734 = vpop.f32.mrb[0].mxu0
      %735 = vmatprep.mubr.bf16.mxu0 0
      %736 = vmatmul.mubr.bf16.gmra.mrb[0].mxu0 %v675
      %v737 = vpop.f32.mrb[0].mxu0
      %v738 = vadd.f32 0.0, %v737
      %v739 = vpop.f32.mrb[0].mxu0
      %v740 = vpop.f32.mrb[0].mxu0
      %v741 = vadd.f32 0.0, %v740
      %v742 = vpop.f32.mrb[0].mxu0
      %743 = vmatprep.mubr.bf16.mxu0 0
      %744 = vmatmul.mubr.bf16.gmra.mrb[0].mxu0 %v678
      %v745 = vpop.f32.mrb[0].mxu0
      %v746 = vadd.f32 0.0, %v745
      %v747 = vpop.f32.mrb[0].mxu0
      %v748 = vpop.f32.mrb[0].mxu0
      %v749 = vadd.f32 0.0, %v748
      %v750 = vpop.f32.mrb[0].mxu0
      %751 = vmatprep.mubr.bf16.mxu0 0
      %752 = vmatmul.mubr.bf16.gmra.mrb[0].mxu0 %v681
      %v753 = vpop.f32.mrb[0].mxu0
      %v754 = vadd.f32 0.0, %v753
      %v755 = vpop.f32.mrb[0].mxu0
      %v756 = vpop.f32.mrb[0].mxu0
      %v757 = vadd.f32 0.0, %v756
      %v758 = vpop.f32.mrb[0].mxu0
      %759 = vmatprep.mubr.bf16.mxu0 0
      %760 = vmatmul.mubr.bf16.gmra.mrb[0].mxu0 %v684
      %v761 = vpop.f32.mrb[0].mxu0
      %v762 = vadd.f32 0.0, %v761
      %v763 = vpop.f32.mrb[0].mxu0
      %v764 = vpop.f32.mrb[0].mxu0
      %v765 = vadd.f32 0.0, %v764
      %v766 = vpop.f32.mrb[0].mxu0
      %767 = vmatprep.mubr.bf16.mxu0 0
      %768 = vmatmul.mubr.bf16.gmra.mrb[0].mxu0 %v687
      %v769 = vpop.f32.mrb[0].mxu0
      %v770 = vadd.f32 0.0, %v769
      %v771 = vpop.f32.mrb[0].mxu0
      %v772 = vpop.f32.mrb[0].mxu0
      %v773 = vadd.f32 0.0, %v772
      %v774 = vpop.f32.mrb[0].mxu0
      %775 = vmatprep.mubr.bf16.mxu0 0
      %776 = vmatmul.mubr.bf16.gmra.mrb[0].mxu0 %v690
      %v777 = vpop.f32.mrb[0].mxu0
      %v778 = vadd.f32 0.0, %v777
      %v779 = vpop.f32.mrb[0].mxu0
      %v780 = vpop.f32.mrb[0].mxu0
      %v781 = vadd.f32 0.0, %v780
      %v782 = vpop.f32.mrb[0].mxu0
      %783 = vmatprep.mubr.bf16.mxu0 0
      %784 = vmatmul.mubr.bf16.gmra.mrb[0].mxu0 %v693
      %v785 = vpop.f32.mrb[0].mxu0
      %v786 = vadd.f32 0.0, %v785
      %v787 = vpop.f32.mrb[0].mxu0
      %v788 = vpop.f32.mrb[0].mxu0
      %v789 = vadd.f32 0.0, %v788
      %v790 = vpop.f32.mrb[0].mxu0
      %791 = vdwg.mxu0
      %v792 = vlaneseq
      %v793 = vshrl.u32 %v792, 7
      %v794 = vadd.s32 %v793, 8
      %v795 = vadd.s32 %v793, 16
      %v796 = vadd.s32 %v793, 24
      %v797 = vadd.s32 %v793, 32
      %v798 = vadd.s32 %v793, 40
      %v799 = vadd.s32 %v793, 48
      %v800 = vadd.s32 %v793, 56
      %v801 = vadd.s32 %v793, 64
      %v802 = vadd.s32 %v793, 72
      %v803 = vadd.s32 %v793, 80
      %v804 = vadd.s32 %v793, 88
      %v805 = vadd.s32 %v793, 96
      %v806 = vadd.s32 %v793, 104
      %v807 = vadd.s32 %v793, 112
      %v808 = vadd.s32 %v793, 120
      %s809 = smul.u32 %s22, 128
      %v810 = vstv %s809
      %v811 = vadd.s32 %v793, %v810
      %v812 = vadd.s32 %v794, %v810
      %v813 = vadd.s32 %v795, %v810
      %v814 = vadd.s32 %v796, %v810
      %v815 = vadd.s32 %v797, %v810
      %v816 = vadd.s32 %v798, %v810
      %v817 = vadd.s32 %v799, %v810
      %v818 = vadd.s32 %v800, %v810
      %v819 = vadd.s32 %v801, %v810
      %v820 = vadd.s32 %v802, %v810
      %v821 = vadd.s32 %v803, %v810
      %v822 = vadd.s32 %v804, %v810
      %v823 = vadd.s32 %v805, %v810
      %v824 = vadd.s32 %v806, %v810
      %v825 = vadd.s32 %v807, %v810
      %v826 = vadd.s32 %v808, %v810
      %vm827 = vcmp.lt.s32.totalorder %v811, 16
      %vm828 = vcmp.lt.s32.totalorder %v812, 16
      %vm829 = vcmp.lt.s32.totalorder %v813, 16
      %vm830 = vcmp.lt.s32.totalorder %v814, 16
      %vm831 = vcmp.lt.s32.totalorder %v815, 16
      %vm832 = vcmp.lt.s32.totalorder %v816, 16
      %vm833 = vcmp.lt.s32.totalorder %v817, 16
      %vm834 = vcmp.lt.s32.totalorder %v818, 16
      %vm835 = vcmp.lt.s32.totalorder %v819, 16
      %vm836 = vcmp.lt.s32.totalorder %v820, 16
      %vm837 = vcmp.lt.s32.totalorder %v821, 16
      %vm838 = vcmp.lt.s32.totalorder %v822, 16
      %vm839 = vcmp.lt.s32.totalorder %v823, 16
      %vm840 = vcmp.lt.s32.totalorder %v824, 16
      %vm841 = vcmp.lt.s32.totalorder %v825, 16
      %vm842 = vcmp.lt.s32.totalorder %v826, 16
      %v843 = vsel %vm827, 1, 0
      %v844 = vsel %vm828, 1, 0
      %v845 = vsel %vm829, 1, 0
      %v846 = vsel %vm830, 1, 0
      %v847 = vsel %vm831, 1, 0
      %v848 = vsel %vm832, 1, 0
      %v849 = vsel %vm833, 1, 0
      %v850 = vsel %vm834, 1, 0
      %v851 = vsel %vm835, 1, 0
      %v852 = vsel %vm836, 1, 0
      %v853 = vsel %vm837, 1, 0
      %v854 = vsel %vm838, 1, 0
      %v855 = vsel %vm839, 1, 0
      %v856 = vsel %vm840, 1, 0
      %v857 = vsel %vm841, 1, 0
      %v858 = vsel %vm842, 1, 0
      %v859 = vcvt.s32.f32 %v843
      %v860 = vcvt.s32.f32 %v844
      %v861 = vcvt.s32.f32 %v845
      %v862 = vcvt.s32.f32 %v846
      %v863 = vcvt.s32.f32 %v847
      %v864 = vcvt.s32.f32 %v848
      %v865 = vcvt.s32.f32 %v849
      %v866 = vcvt.s32.f32 %v850
      %v867 = vcvt.s32.f32 %v851
      %v868 = vcvt.s32.f32 %v852
      %v869 = vcvt.s32.f32 %v853
      %v870 = vcvt.s32.f32 %v854
      %v871 = vcvt.s32.f32 %v855
      %v872 = vcvt.s32.f32 %v856
      %v873 = vcvt.s32.f32 %v857
      %v874 = vcvt.s32.f32 %v858
      %v875 = vmul.f32 %v730, %v859
      %v876 = vmul.f32 %v733, %v860
      %v877 = vmul.f32 %v738, %v861
      %v878 = vmul.f32 %v741, %v862
      %v879 = vmul.f32 %v746, %v863
      %v880 = vmul.f32 %v749, %v864
      %v881 = vmul.f32 %v754, %v865
      %v882 = vmul.f32 %v757, %v866
      %v883 = vmul.f32 %v762, %v867
      %v884 = vmul.f32 %v765, %v868
      %v885 = vmul.f32 %v770, %v869
      %v886 = vmul.f32 %v773, %v870
      %v887 = vmul.f32 %v778, %v871
      %v888 = vmul.f32 %v781, %v872
      %v889 = vmul.f32 %v786, %v873
      %v890 = vmul.f32 %v789, %v874
      %v891 = vld [vmem:[%s246] sm:$0x1]
      %v892 = vadd.f32 %v875, %v876
      %v893 = vadd.f32 %v892, %v877
      %v894 = vadd.f32 %v893, %v878
      %v895 = vadd.f32 %v894, %v879
      %v896 = vadd.f32 %v895, %v880
      %v897 = vadd.f32 %v896, %v881
      %v898 = vadd.f32 %v897, %v882
      %v899 = vadd.f32 %v898, %v883
      %v900 = vadd.f32 %v899, %v884
      %v901 = vadd.f32 %v900, %v885
      %v902 = vadd.f32 %v901, %v886
      %v903 = vadd.f32 %v902, %v887
      %v904 = vadd.f32 %v903, %v888
      %v905 = vadd.f32 %v904, %v889
      %v906 = vadd.f32 %v905, %v890
      %v907 = vrot.slane %v906, 4
      %v908 = vadd.f32 %v906, %v907
      %v909 = vrot.slane %v908, 2
      %v910 = vadd.f32 %v908, %v909
      %v911 = vrot.slane %v910, 1
      %v912 = vadd.f32 %v910, %v911
      %v913 = vadd.f32 %v891, %v912
      %914 = vst [vmem:[%s246] sm:$0x1] %v913
      %v915 = vld [vmem:[%s249] sm:$0x1]
      %v916 = vmul.f32 %v875, %v730
      %v917 = vmul.f32 %v876, %v733
      %v918 = vmul.f32 %v877, %v738
      %v919 = vmul.f32 %v878, %v741
      %v920 = vmul.f32 %v879, %v746
      %v921 = vmul.f32 %v880, %v749
      %v922 = vmul.f32 %v881, %v754
      %v923 = vmul.f32 %v882, %v757
      %v924 = vmul.f32 %v883, %v762
      %v925 = vmul.f32 %v884, %v765
      %v926 = vmul.f32 %v885, %v770
      %v927 = vmul.f32 %v886, %v773
      %v928 = vmul.f32 %v887, %v778
      %v929 = vmul.f32 %v888, %v781
      %v930 = vmul.f32 %v889, %v786
      %v931 = vmul.f32 %v890, %v789
      %v932 = vadd.f32 %v916, %v917
      %v933 = vadd.f32 %v932, %v918
      %v934 = vadd.f32 %v933, %v919
      %v935 = vadd.f32 %v934, %v920
      %v936 = vadd.f32 %v935, %v921
      %v937 = vadd.f32 %v936, %v922
      %v938 = vadd.f32 %v937, %v923
      %v939 = vadd.f32 %v938, %v924
      %v940 = vadd.f32 %v939, %v925
      %v941 = vadd.f32 %v940, %v926
      %v942 = vadd.f32 %v941, %v927
      %v943 = vadd.f32 %v942, %v928
      %v944 = vadd.f32 %v943, %v929
      %v945 = vadd.f32 %v944, %v930
      %v946 = vadd.f32 %v945, %v931
      %v947 = vrot.slane %v946, 4
      %v948 = vadd.f32 %v946, %v947
      %v949 = vrot.slane %v948, 2
      %v950 = vadd.f32 %v948, %v949
      %v951 = vrot.slane %v950, 1
      %v952 = vadd.f32 %v950, %v951
      %v953 = vadd.f32 %v915, %v952
      %954 = vst [vmem:[%s249] sm:$0x1] %v953
      %p955 = scmp.lt.s32.totalorder %s21, 1
      %s956 = scalar_select %p955, %s21, 1
      %s957 = scalar_lea.vmem %s4, %s956
      %p958 = scmp.lt.s32.totalorder %s21, 1
      %s959 = scalar_select %p958, %s21, 1
      %s960 = scalar_lea.vmem %s5, %s959
      // Predicated region
      $region41: #{stn3d_forward.3} parent=35 // pred_check
        %p961 = pneg %p138
      $region42: #{stn3d_forward.3} parent=35 // pred_check_branch
        %963 = sbr.rel (%p961) target = $region44
      $region43: #{stn3d_forward.3} parent=35 // pred_region
        _
      $region44: #{stn3d_forward.3} parent=35 // pred_fallthru
        _
      // Predicated region
      $region45: #{stn3d_forward.3} parent=35 // pred_check
        %p964 = pneg %p164
      $region46: #{stn3d_forward.3} parent=35 // pred_check_branch
        %966 = sbr.rel (%p964) target = $region48
      $region47: #{stn3d_forward.3} parent=35 // pred_region
        _
      $region48: #{stn3d_forward.3} parent=35 // pred_fallthru
        _
    $region36: #{stn3d_forward.3} parent=5 // pred_fallthru
      _
    %p967 = scmp.le.s32.totalorder 2, %s12
    // Predicated region
    $region49: #{stn3d_forward.3} parent=5 // pred_check
      %p968 = pneg %p967
    $region50: #{stn3d_forward.3} parent=5 // pred_check_branch
      %970 = sbr.rel (%p968) target = $region52
    $region51: #{stn3d_forward.3} parent=5 // pred_region
      %s971 = ssub.s32 %s12, 2
      // Predicated region
      $region53: #{stn3d_forward.3} parent=51 // pred_check
        %p972 = pneg %p144
      $region54: #{stn3d_forward.3} parent=51 // pred_check_branch
        %974 = sbr.rel (%p972) target = $region56
      $region55: #{stn3d_forward.3} parent=51 // pred_region
        %p975 = scmp.lt.s32.totalorder %s23, 1
        %s976 = scalar_select %p975, %s23, 1
        %s977 = scalar_lea.vmem %s4, %s976
      $region56: #{stn3d_forward.3} parent=51 // pred_fallthru
        _
      // Predicated region
      $region57: #{stn3d_forward.3} parent=51 // pred_check
        %p978 = pneg %p170
      $region58: #{stn3d_forward.3} parent=51 // pred_check_branch
        %980 = sbr.rel (%p978) target = $region60
      $region59: #{stn3d_forward.3} parent=51 // pred_region
        %p981 = scmp.lt.s32.totalorder %s23, 1
        %s982 = scalar_select %p981, %s23, 1
        %s983 = scalar_lea.vmem %s5, %s982
      $region60: #{stn3d_forward.3} parent=51 // pred_fallthru
        _
    $region52: #{stn3d_forward.3} parent=5 // pred_fallthru
      _
  $region6: #{stn3d_forward.3} parent=0 // loop_footer
    %s16 = sadd.s32 1, %s12
  $region7: #{stn3d_forward.3} parent=0 // loop_footer_branch
    %11 = sbr.rel target = $region3
  $region8: #{stn3d_forward.3} parent=0 // loop_exit
    _

// kernel: stn3d_forward.4
$region0: #{stn3d_forward.4}
  #allocation0 [shape = 'u32[]', space=smem, size = 0x4, offset = 0x4, fixed_abs, tag = 'smem constant byte address 0x4 - core index']
  #allocation1 [shape = 'u32[144,128]{1,0:T(1,128)}', space=vmem, size = 0x12000, scoped, tag = 'internal scratch']
  %s0 = inlined_call_operand.vmem [shape: f32[2,8,128], index: 0, kind: input, shape index: {}]
  %s1 = inlined_call_operand.vmem [shape: f32[8,64], index: 1, kind: input, shape index: {}]
  %s2 = inlined_call_operand.vmem [shape: f32[1,64], index: 2, kind: input, shape index: {}]
  %s3 = inlined_call_operand.vmem [shape: bf16[64,128], index: 3, kind: input, shape index: {}]
  %s4 = inlined_call_operand.vmem [shape: f32[1,128], index: 4, kind: input, shape index: {}]
  %s5 = inlined_call_operand.vmem [shape: bf16[128,1024], index: 5, kind: input, shape index: {}]
  %s6 = inlined_call_operand.vmem [shape: f32[2,1,128], index: 6, kind: output, shape index: {0}]
  %s7 = inlined_call_operand.vmem [shape: f32[2,128,128], index: 7, kind: output, shape index: {1}]
  %s8 = inlined_call_operand.vmem [shape: f32[2,1,1024], index: 8, kind: output, shape index: {2}]
  %9 = xla_tuple %s6, %s7, %s8
  %s10 = sld [smem:[#allocation0]]
  $region77: #{stn3d_forward.4} parent=0
    _
  %s12 = ssub.s32 1, %s10
  %s13 = scalar_select 0, %s12, %s10
  loop: start=0, step=1, limit=4
  $region2: #{stn3d_forward.4} parent=0 // loop_pre_header
    _
  $region3: #{stn3d_forward.4} parent=0 // loop_header
    %s15 = sphi 0, %s19
    %p16 = scmp.ge.s32.totalorder %s15, 4
    %s22 = sphi 0, %s34
    %s23 = sphi 0, %s30
    %s24 = sphi 0, %s22
    %s25 = sphi 0, %s23
    %s26 = sphi 0, %s24
    %s27 = sphi 0, %s25
    %s39 = sphi 0, %s41
    %s42 = sphi 0, %s39
    %s43 = sphi 0, %s42
    %s59 = sphi 0, %s43
    %s63 = sphi 0, %s63
    %s65 = sphi 0, %s63
    %s66 = sphi 0, %s65
    %s80 = sphi 0, %s66
    %s84 = sphi 0, %s84
    %s86 = sphi 0, %s84
    %s87 = sphi 0, %s86
    %s101 = sphi 0, %s87
    %s105 = sphi 0, %s105
    %s107 = sphi 0, %s105
    %s108 = sphi 0, %s107
    %s122 = sphi 0, %s108
    %s126 = sphi 0, %s126
    %s128 = sphi 0, %s126
    %s129 = sphi 0, %s128
    %s143 = sphi 0, %s129
    %s147 = sphi 0, %s147
    %s149 = sphi 0, %s147
    %s150 = sphi 0, %s149
    %s164 = sphi 0, %s150
    %s170 = sphi 0, %s172
    %s173 = sphi 0, %s170
    %s174 = sphi 0, %s173
    %s190 = sphi 0, %s174
    %s196 = sphi 0, %s198
    %s199 = sphi 0, %s196
    %s200 = sphi 0, %s199
    %s216 = sphi 0, %s200
    %s222 = sphi 0, %s224
    %s225 = sphi 0, %s222
    %s226 = sphi 0, %s225
    %s242 = sphi 0, %s226
  $region4: #{stn3d_forward.4} parent=0 // loop_header_branch
    %18 = sbr.rel (%p16) target = $region8
  $region5: #{stn3d_forward.4} parent=0 // loop_body
    %s20 = ssub.s32 %s15, 1
    %s21 = ssub.s32 %s15, 2
    %s28 = sadd.s32 1, %s23
    %p29 = scmp.ge.s32.totalorder %s28, 1
    %s30 = scalar_select %p29, 0, %s28
    %s31 = sadd.s32 1, %s22
    %s32 = scalar_select %p29, %s31, %s22
    %p33 = scmp.ge.s32.totalorder %s32, 2
    %s34 = scalar_select %p33, 0, %s32
    %s35 = ssub.s32 %s22, %s34
    %s36 = ssub.s32 %s23, %s30
    %s37 = sor.u32 %s35, %s36
    %p38 = scmp.eq.s32.totalorder %s37, 0
    %s40 = sadd.s32 %s39, 1
    %s41 = scalar_select %p38, %s39, %s40
    %p44 = pneg %p38
    %p45 = scmp.eq.s32.totalorder %s15, 1
    %p46 = por %p44, %p45
    %p47 = scmp.ne.s32.totalorder %s39, %s42
    %p48 = scmp.eq.s32.totalorder %s15, 0
    %p49 = por %p47, %p48
    %p50 = scmp.ne.s32.totalorder %s39, %s42
    %p51 = scmp.eq.s32.totalorder %s20, 1
    %p52 = por %p50, %p51
    %p53 = scmp.ne.s32.totalorder %s42, %s43
    %p54 = scmp.eq.s32.totalorder %s20, 0
    %p55 = por %p53, %p54
    %p56 = scmp.ne.s32.totalorder %s42, %s43
    %p57 = scmp.eq.s32.totalorder %s21, 1
    %p58 = por %p56, %p57
    %p60 = scmp.ne.s32.totalorder %s43, %s59
    %p61 = scmp.eq.s32.totalorder %s21, 0
    %p62 = por %p60, %p61
    %s64 = sadd.s32 %s63, 1
    %p67 = scmp.eq.s32.totalorder %s15, 1
    %p68 = scmp.ne.s32.totalorder %s63, %s65
    %p69 = scmp.eq.s32.totalorder %s15, 0
    %p70 = por %p68, %p69
    %p71 = scmp.ne.s32.totalorder %s63, %s65
    %p72 = scmp.eq.s32.totalorder %s20, 1
    %p73 = por %p71, %p72
    %p74 = scmp.ne.s32.totalorder %s65, %s66
    %p75 = scmp.eq.s32.totalorder %s20, 0
    %p76 = por %p74, %p75
    %p77 = scmp.ne.s32.totalorder %s65, %s66
    %p78 = scmp.eq.s32.totalorder %s21, 1
    %p79 = por %p77, %p78
    %p81 = scmp.ne.s32.totalorder %s66, %s80
    %p82 = scmp.eq.s32.totalorder %s21, 0
    %p83 = por %p81, %p82
    %s85 = sadd.s32 %s84, 1
    %p88 = scmp.eq.s32.totalorder %s15, 1
    %p89 = scmp.ne.s32.totalorder %s84, %s86
    %p90 = scmp.eq.s32.totalorder %s15, 0
    %p91 = por %p89, %p90
    %p92 = scmp.ne.s32.totalorder %s84, %s86
    %p93 = scmp.eq.s32.totalorder %s20, 1
    %p94 = por %p92, %p93
    %p95 = scmp.ne.s32.totalorder %s86, %s87
    %p96 = scmp.eq.s32.totalorder %s20, 0
    %p97 = por %p95, %p96
    %p98 = scmp.ne.s32.totalorder %s86, %s87
    %p99 = scmp.eq.s32.totalorder %s21, 1
    %p100 = por %p98, %p99
    %p102 = scmp.ne.s32.totalorder %s87, %s101
    %p103 = scmp.eq.s32.totalorder %s21, 0
    %p104 = por %p102, %p103
    %s106 = sadd.s32 %s105, 1
    %p109 = scmp.eq.s32.totalorder %s15, 1
    %p110 = scmp.ne.s32.totalorder %s105, %s107
    %p111 = scmp.eq.s32.totalorder %s15, 0
    %p112 = por %p110, %p111
    %p113 = scmp.ne.s32.totalorder %s105, %s107
    %p114 = scmp.eq.s32.totalorder %s20, 1
    %p115 = por %p113, %p114
    %p116 = scmp.ne.s32.totalorder %s107, %s108
    %p117 = scmp.eq.s32.totalorder %s20, 0
    %p118 = por %p116, %p117
    %p119 = scmp.ne.s32.totalorder %s107, %s108
    %p120 = scmp.eq.s32.totalorder %s21, 1
    %p121 = por %p119, %p120
    %p123 = scmp.ne.s32.totalorder %s108, %s122
    %p124 = scmp.eq.s32.totalorder %s21, 0
    %p125 = por %p123, %p124
    %s127 = sadd.s32 %s126, 1
    %p130 = scmp.eq.s32.totalorder %s15, 1
    %p131 = scmp.ne.s32.totalorder %s126, %s128
    %p132 = scmp.eq.s32.totalorder %s15, 0
    %p133 = por %p131, %p132
    %p134 = scmp.ne.s32.totalorder %s126, %s128
    %p135 = scmp.eq.s32.totalorder %s20, 1
    %p136 = por %p134, %p135
    %p137 = scmp.ne.s32.totalorder %s128, %s129
    %p138 = scmp.eq.s32.totalorder %s20, 0
    %p139 = por %p137, %p138
    %p140 = scmp.ne.s32.totalorder %s128, %s129
    %p141 = scmp.eq.s32.totalorder %s21, 1
    %p142 = por %p140, %p141
    %p144 = scmp.ne.s32.totalorder %s129, %s143
    %p145 = scmp.eq.s32.totalorder %s21, 0
    %p146 = por %p144, %p145
    %s148 = sadd.s32 %s147, 1
    %p151 = scmp.eq.s32.totalorder %s15, 1
    %p152 = scmp.ne.s32.totalorder %s147, %s149
    %p153 = scmp.eq.s32.totalorder %s15, 0
    %p154 = por %p152, %p153
    %p155 = scmp.ne.s32.totalorder %s147, %s149
    %p156 = scmp.eq.s32.totalorder %s20, 1
    %p157 = por %p155, %p156
    %p158 = scmp.ne.s32.totalorder %s149, %s150
    %p159 = scmp.eq.s32.totalorder %s20, 0
    %p160 = por %p158, %p159
    %p161 = scmp.ne.s32.totalorder %s149, %s150
    %p162 = scmp.eq.s32.totalorder %s21, 1
    %p163 = por %p161, %p162
    %p165 = scmp.ne.s32.totalorder %s150, %s164
    %p166 = scmp.eq.s32.totalorder %s21, 0
    %p167 = por %p165, %p166
    %s168 = ssub.s32 %s22, %s34
    %p169 = scmp.eq.s32.totalorder %s168, 0
    %s171 = sadd.s32 %s170, 1
    %s172 = scalar_select %p169, %s170, %s171
    %p175 = pneg %p169
    %p176 = scmp.eq.s32.totalorder %s15, 1
    %p177 = por %p175, %p176
    %p178 = scmp.ne.s32.totalorder %s170, %s173
    %p179 = scmp.eq.s32.totalorder %s15, 0
    %p180 = por %p178, %p179
    %p181 = scmp.ne.s32.totalorder %s170, %s173
    %p182 = scmp.eq.s32.totalorder %s20, 1
    %p183 = por %p181, %p182
    %p184 = scmp.ne.s32.totalorder %s173, %s174
    %p185 = scmp.eq.s32.totalorder %s20, 0
    %p186 = por %p184, %p185
    %p187 = scmp.ne.s32.totalorder %s173, %s174
    %p188 = scmp.eq.s32.totalorder %s21, 1
    %p189 = por %p187, %p188
    %p191 = scmp.ne.s32.totalorder %s174, %s190
    %p192 = scmp.eq.s32.totalorder %s21, 0
    %p193 = por %p191, %p192
    %s194 = ssub.s32 %s22, %s34
    %p195 = scmp.eq.s32.totalorder %s194, 0
    %s197 = sadd.s32 %s196, 1
    %s198 = scalar_select %p195, %s196, %s197
    %p201 = pneg %p195
    %p202 = scmp.eq.s32.totalorder %s15, 1
    %p203 = por %p201, %p202
    %p204 = scmp.ne.s32.totalorder %s196, %s199
    %p205 = scmp.eq.s32.totalorder %s15, 0
    %p206 = por %p204, %p205
    %p207 = scmp.ne.s32.totalorder %s196, %s199
    %p208 = scmp.eq.s32.totalorder %s20, 1
    %p209 = por %p207, %p208
    %p210 = scmp.ne.s32.totalorder %s199, %s200
    %p211 = scmp.eq.s32.totalorder %s20, 0
    %p212 = por %p210, %p211
    %p213 = scmp.ne.s32.totalorder %s199, %s200
    %p214 = scmp.eq.s32.totalorder %s21, 1
    %p215 = por %p213, %p214
    %p217 = scmp.ne.s32.totalorder %s200, %s216
    %p218 = scmp.eq.s32.totalorder %s21, 0
    %p219 = por %p217, %p218
    %s220 = ssub.s32 %s22, %s34
    %p221 = scmp.eq.s32.totalorder %s220, 0
    %s223 = sadd.s32 %s222, 1
    %s224 = scalar_select %p221, %s222, %s223
    %p227 = pneg %p221
    %p228 = scmp.eq.s32.totalorder %s15, 1
    %p229 = por %p227, %p228
    %p230 = scmp.ne.s32.totalorder %s222, %s225
    %p231 = scmp.eq.s32.totalorder %s15, 0
    %p232 = por %p230, %p231
    %p233 = scmp.ne.s32.totalorder %s222, %s225
    %p234 = scmp.eq.s32.totalorder %s20, 1
    %p235 = por %p233, %p234
    %p236 = scmp.ne.s32.totalorder %s225, %s226
    %p237 = scmp.eq.s32.totalorder %s20, 0
    %p238 = por %p236, %p237
    %p239 = scmp.ne.s32.totalorder %s225, %s226
    %p240 = scmp.eq.s32.totalorder %s21, 1
    %p241 = por %p239, %p240
    %p243 = scmp.ne.s32.totalorder %s226, %s242
    %p244 = scmp.eq.s32.totalorder %s21, 0
    %p245 = por %p243, %p244
    %p246 = scmp.le.s32.totalorder 1, %s15
    %p247 = scmp.lt.s32.totalorder %s15, 3
    %p248 = pnand %p246, %p247
    %p249 = pneg %p248
    // Predicated region
    $region9: #{stn3d_forward.4} parent=5 // pred_check
      _
    $region10: #{stn3d_forward.4} parent=5 // pred_check_branch
      %251 = sbr.rel (%p248) target = $region12
    $region11: #{stn3d_forward.4} parent=5 // pred_region
      %s252 = ssub.s32 %s15, 1
      // Predicated region
      $region13: #{stn3d_forward.4} parent=11 // pred_check
        %p253 = pneg %p76
      $region14: #{stn3d_forward.4} parent=11 // pred_check_branch
        %255 = sbr.rel (%p253) target = $region16
      $region15: #{stn3d_forward.4} parent=11 // pred_region
        _
      $region16: #{stn3d_forward.4} parent=11 // pred_fallthru
        _
      // Predicated region
      $region17: #{stn3d_forward.4} parent=11 // pred_check
        %p256 = pneg %p97
      $region18: #{stn3d_forward.4} parent=11 // pred_check_branch
        %258 = sbr.rel (%p256) target = $region20
      $region19: #{stn3d_forward.4} parent=11 // pred_region
        _
      $region20: #{stn3d_forward.4} parent=11 // pred_fallthru
        _
      // Predicated region
      $region21: #{stn3d_forward.4} parent=11 // pred_check
        %p259 = pneg %p118
      $region22: #{stn3d_forward.4} parent=11 // pred_check_branch
        %261 = sbr.rel (%p259) target = $region24
      $region23: #{stn3d_forward.4} parent=11 // pred_region
        _
      $region24: #{stn3d_forward.4} parent=11 // pred_fallthru
        _
      // Predicated region
      $region25: #{stn3d_forward.4} parent=11 // pred_check
        %p262 = pneg %p139
      $region26: #{stn3d_forward.4} parent=11 // pred_check_branch
        %264 = sbr.rel (%p262) target = $region28
      $region27: #{stn3d_forward.4} parent=11 // pred_region
        _
      $region28: #{stn3d_forward.4} parent=11 // pred_fallthru
        _
      // Predicated region
      $region29: #{stn3d_forward.4} parent=11 // pred_check
        %p265 = pneg %p160
      $region30: #{stn3d_forward.4} parent=11 // pred_check_branch
        %267 = sbr.rel (%p265) target = $region32
      $region31: #{stn3d_forward.4} parent=11 // pred_region
        _
      $region32: #{stn3d_forward.4} parent=11 // pred_fallthru
        _
    $region12: #{stn3d_forward.4} parent=5 // pred_fallthru
      _
    %p268 = scmp.lt.s32.totalorder %s15, 2
    // Predicated region
    $region33: #{stn3d_forward.4} parent=5 // pred_check
      %p269 = pneg %p268
    $region34: #{stn3d_forward.4} parent=5 // pred_check_branch
      %271 = sbr.rel (%p269) target = $region36
    $region35: #{stn3d_forward.4} parent=5 // pred_region
      // Predicated region
      $region37: #{stn3d_forward.4} parent=35 // pred_check
        %p272 = pneg %p49
      $region38: #{stn3d_forward.4} parent=35 // pred_check_branch
        %274 = sbr.rel (%p272) target = $region40
      $region39: #{stn3d_forward.4} parent=35 // pred_region
        %p275 = scmp.lt.s32.totalorder %s22, 1
        %s276 = scalar_select %p275, %s22, 1
        %p277 = scmp.lt.s32.totalorder %s23, 0
        %s278 = scalar_select %p277, %s23, 0
        %s279 = sadd.s32 %s278, %s276
        %s280 = smul.addr %s279, 8
        %s281 = scalar_lea.vmem %s0, %s280
      $region40: #{stn3d_forward.4} parent=35 // pred_fallthru
        _
    $region36: #{stn3d_forward.4} parent=5 // pred_fallthru
      _
    %p282 = scmp.le.s32.totalorder 1, %s15
    %p283 = scmp.lt.s32.totalorder %s15, 3
    %p284 = pnand %p282, %p283
    %p285 = pneg %p284
    // Predicated region
    $region41: #{stn3d_forward.4} parent=5 // pred_check
      _
    $region42: #{stn3d_forward.4} parent=5 // pred_check_branch
      %287 = sbr.rel (%p284) target = $region44
    $region43: #{stn3d_forward.4} parent=5 // pred_region
      %s288 = ssub.s32 %s15, 1
      %p289 = scmp.lt.s32.totalorder %s24, 1
      %s290 = scalar_select %p289, %s24, 1
      %p291 = scmp.lt.s32.totalorder %s25, 0
      %s292 = scalar_select %p291, %s25, 0
      %s293 = sadd.s32 %s292, %s290
      %s294 = smul.addr %s293, 8
      %s295 = scalar_lea.vmem %s0, %s294
      %p296 = pneg %p55
      %p297 = pneg %p52
      %p298 = pneg %p76
      %p299 = pneg %p73
      %p300 = pneg %p97
      %p301 = pneg %p94
      %p302 = pneg %p118
      %p303 = pneg %p115
      %p304 = pneg %p139
      %p305 = pneg %p136
      %p306 = pneg %p160
      %p307 = pneg %p157
      %p308 = pneg %p186
      %p309 = pneg %p183
      %p310 = scmp.lt.s32.totalorder %s24, 1
      %s311 = scalar_select %p310, %s24, 1
      %s312 = scalar_lea.vmem %s6, %s311
      %p313 = pneg %p212
      %p314 = pneg %p209
      %p315 = scmp.lt.s32.totalorder %s24, 1
      %s316 = scalar_select %p315, %s24, 1
      %s317 = smul.addr %s316, 16
      %s318 = smul.addr %s317, 8
      %s319 = scalar_lea.vmem %s7, %s318
      %p320 = pneg %p238
      %p321 = pneg %p235
      %p322 = scmp.lt.s32.totalorder %s24, 1
      %s323 = scalar_select %p322, %s24, 1
      %s324 = smul.addr %s323, 8
      %s325 = scalar_lea.vmem %s8, %s324
      %p326 = scmp.lt.s32.totalorder %s24, 1
      %s327 = scalar_select %p326, %s24, 1
      %p328 = scmp.lt.s32.totalorder %s25, 0
      %s329 = scalar_select %p328, %s25, 0
      %s330 = sadd.s32 %s329, %s327
      %s331 = smul.addr %s330, 8
      %s332 = scalar_lea.vmem %s0, %s331
      %p333 = scmp.lt.s32.totalorder %s24, 1
      %s334 = scalar_select %p333, %s24, 1
      %s335 = scalar_lea.vmem %s6, %s334
      %p336 = scmp.lt.s32.totalorder %s24, 1
      %s337 = scalar_select %p336, %s24, 1
      %s338 = smul.addr %s337, 16
      %s339 = smul.addr %s338, 8
      %s340 = scalar_lea.vmem %s7, %s339
      %p341 = scmp.lt.s32.totalorder %s24, 1
      %s342 = scalar_select %p341, %s24, 1
      %s343 = smul.addr %s342, 8
      %s344 = scalar_lea.vmem %s8, %s343
      %p346 = scmp.eq.s32.totalorder %s25, 0
      // Predicated region
      $region45: #{stn3d_forward.4} parent=43 // pred_check
        %p347 = pneg %p346
      $region46: #{stn3d_forward.4} parent=43 // pred_check_branch
        %349 = sbr.rel (%p347) target = $region48
      $region47: #{stn3d_forward.4} parent=43 // pred_region
        %350 = vst [vmem:[%s335] sm:$0x1] 0.0
        %351 = vst [vmem:[%s340] sm:$0xff] 0.0
        %352 = vst [vmem:[%s340 + $0x8] sm:$0xff] 0.0
        %353 = vst [vmem:[%s340 + $0x10] sm:$0xff] 0.0
        %354 = vst [vmem:[%s340 + $0x18] sm:$0xff] 0.0
        %355 = vst [vmem:[%s340 + $0x20] sm:$0xff] 0.0
        %356 = vst [vmem:[%s340 + $0x28] sm:$0xff] 0.0
        %357 = vst [vmem:[%s340 + $0x30] sm:$0xff] 0.0
        %358 = vst [vmem:[%s340 + $0x38] sm:$0xff] 0.0
        %359 = vst [vmem:[%s340 + $0x40] sm:$0xff] 0.0
        %360 = vst [vmem:[%s340 + $0x48] sm:$0xff] 0.0
        %361 = vst [vmem:[%s340 + $0x50] sm:$0xff] 0.0
        %362 = vst [vmem:[%s340 + $0x58] sm:$0xff] 0.0
        %363 = vst [vmem:[%s340 + $0x60] sm:$0xff] 0.0
        %364 = vst [vmem:[%s340 + $0x68] sm:$0xff] 0.0
        %365 = vst [vmem:[%s340 + $0x70] sm:$0xff] 0.0
        %366 = vst [vmem:[%s340 + $0x78] sm:$0xff] 0.0
        %367 = vst [vmem:[%s344] sm:$0xff] -inf
      $region48: #{stn3d_forward.4} parent=43 // pred_fallthru
        _
      %v368 = vld [vmem:[%s332] sm:$0xff]
      %369 = vxpose.xlu0.b32.start [1/16] %v368, 128
      %370 = vxpose.xlu0.b32.cont [2/16] 0.0, 128
      %371 = vxpose.xlu0.b32.cont [3/16] 0.0, 128
      %372 = vxpose.xlu0.b32.cont [4/16] 0.0, 128
      %373 = vxpose.xlu0.b32.cont [5/16] 0.0, 128
      %374 = vxpose.xlu0.b32.cont [6/16] 0.0, 128
      %375 = vxpose.xlu0.b32.cont [7/16] 0.0, 128
      %376 = vxpose.xlu0.b32.cont [8/16] 0.0, 128
      %377 = vxpose.xlu0.b32.cont [9/16] 0.0, 128
      %378 = vxpose.xlu0.b32.cont [10/16] 0.0, 128
      %379 = vxpose.xlu0.b32.cont [11/16] 0.0, 128
      %380 = vxpose.xlu0.b32.cont [12/16] 0.0, 128
      %381 = vxpose.xlu0.b32.cont [13/16] 0.0, 128
      %382 = vxpose.xlu0.b32.cont [14/16] 0.0, 128
      %383 = vxpose.xlu0.b32.cont [15/16] 0.0, 128
      %384 = vxpose.xlu0.b32.end [16/16] 0.0, 128
      %v385 = vpop.trf.xlu0
      %v386 = vpop.trf.xlu0
      %v387 = vpop.trf.xlu0
      %v388 = vpop.trf.xlu0
      %v389 = vpop.trf.xlu0
      %v390 = vpop.trf.xlu0
      %v391 = vpop.trf.xlu0
      %v392 = vpop.trf.xlu0
      %v393 = vpop.trf.xlu0
      %v394 = vpop.trf.xlu0
      %v395 = vpop.trf.xlu0
      %v396 = vpop.trf.xlu0
      %v397 = vpop.trf.xlu0
      %v398 = vpop.trf.xlu0
      %v399 = vpop.trf.xlu0
      %v400 = vpop.trf.xlu0
      %v401 = vld [vmem:[%s1] sm:$0xff]
      %v402 = vld [vmem:[%s2] sm:$0x1]
      %404 = vset.pattern.permute.xlu0 0
      %405 = vperm.xlu0 %404, %v385
      %v406 = vpop.permute.xlu0 %405
      %409 = vset.pattern.permute.xlu0 0
      %410 = vperm.xlu0 %409, %v386
      %v411 = vpop.permute.xlu0 %410
      %414 = vset.pattern.permute.xlu0 0
      %415 = vperm.xlu0 %414, %v387
      %v416 = vpop.permute.xlu0 %415
      %419 = vset.pattern.permute.xlu0 0
      %420 = vperm.xlu0 %419, %v388
      %v421 = vpop.permute.xlu0 %420
      %424 = vset.pattern.permute.xlu0 0
      %425 = vperm.xlu0 %424, %v389
      %v426 = vpop.permute.xlu0 %425
      %429 = vset.pattern.permute.xlu0 0
      %430 = vperm.xlu0 %429, %v390
      %v431 = vpop.permute.xlu0 %430
      %434 = vset.pattern.permute.xlu0 0
      %435 = vperm.xlu0 %434, %v391
      %v436 = vpop.permute.xlu0 %435
      %439 = vset.pattern.permute.xlu0 0
      %440 = vperm.xlu0 %439, %v392
      %v441 = vpop.permute.xlu0 %440
      %444 = vset.pattern.permute.xlu0 0
      %445 = vperm.xlu0 %444, %v393
      %v446 = vpop.permute.xlu0 %445
      %449 = vset.pattern.permute.xlu0 0
      %450 = vperm.xlu0 %449, %v394
      %v451 = vpop.permute.xlu0 %450
      %454 = vset.pattern.permute.xlu0 0
      %455 = vperm.xlu0 %454, %v395
      %v456 = vpop.permute.xlu0 %455
      %459 = vset.pattern.permute.xlu0 0
      %460 = vperm.xlu0 %459, %v396
      %v461 = vpop.permute.xlu0 %460
      %464 = vset.pattern.permute.xlu0 0
      %465 = vperm.xlu0 %464, %v397
      %v466 = vpop.permute.xlu0 %465
      %469 = vset.pattern.permute.xlu0 0
      %470 = vperm.xlu0 %469, %v398
      %v471 = vpop.permute.xlu0 %470
      %474 = vset.pattern.permute.xlu0 0
      %475 = vperm.xlu0 %474, %v399
      %v476 = vpop.permute.xlu0 %475
      %479 = vset.pattern.permute.xlu0 0
      %480 = vperm.xlu0 %479, %v400
      %v481 = vpop.permute.xlu0 %480
      %v483 = vlaneseq
      %v484 = vshrl.u32 %v483, 7
      %v485 = vsub.s32 0, %v484
      %v486 = vrot.slane %v401, %v485
      %v487 = vmul.f32 %v406, %v486
      %v488 = vmul.f32 %v411, %v486
      %v489 = vmul.f32 %v416, %v486
      %v490 = vmul.f32 %v421, %v486
      %v491 = vmul.f32 %v426, %v486
      %v492 = vmul.f32 %v431, %v486
      %v493 = vmul.f32 %v436, %v486
      %v494 = vmul.f32 %v441, %v486
      %v495 = vmul.f32 %v446, %v486
      %v496 = vmul.f32 %v451, %v486
      %v497 = vmul.f32 %v456, %v486
      %v498 = vmul.f32 %v461, %v486
      %v499 = vmul.f32 %v466, %v486
      %v500 = vmul.f32 %v471, %v486
      %v501 = vmul.f32 %v476, %v486
      %v502 = vmul.f32 %v481, %v486
      %503 = vset.pattern.permute.xlu0 1
      %504 = vperm.xlu0 %503, %v385
      %v505 = vpop.permute.xlu0 %504
      %507 = vset.pattern.permute.xlu0 1
      %508 = vperm.xlu0 %507, %v386
      %v509 = vpop.permute.xlu0 %508
      %511 = vset.pattern.permute.xlu0 1
      %512 = vperm.xlu0 %511, %v387
      %v513 = vpop.permute.xlu0 %512
      %515 = vset.pattern.permute.xlu0 1
      %516 = vperm.xlu0 %515, %v388
      %v517 = vpop.permute.xlu0 %516
      %519 = vset.pattern.permute.xlu0 1
      %520 = vperm.xlu0 %519, %v389
      %v521 = vpop.permute.xlu0 %520
      %523 = vset.pattern.permute.xlu0 1
      %524 = vperm.xlu0 %523, %v390
      %v525 = vpop.permute.xlu0 %524
      %527 = vset.pattern.permute.xlu0 1
      %528 = vperm.xlu0 %527, %v391
      %v529 = vpop.permute.xlu0 %528
      %531 = vset.pattern.permute.xlu0 1
      %532 = vperm.xlu0 %531, %v392
      %v533 = vpop.permute.xlu0 %532
      %535 = vset.pattern.permute.xlu0 1
      %536 = vperm.xlu0 %535, %v393
      %v537 = vpop.permute.xlu0 %536
      %539 = vset.pattern.permute.xlu0 1
      %540 = vperm.xlu0 %539, %v394
      %v541 = vpop.permute.xlu0 %540
      %543 = vset.pattern.permute.xlu0 1
      %544 = vperm.xlu0 %543, %v395
      %v545 = vpop.permute.xlu0 %544
      %547 = vset.pattern.permute.xlu0 1
      %548 = vperm.xlu0 %547, %v396
      %v549 = vpop.permute.xlu0 %548
      %551 = vset.pattern.permute.xlu0 1
      %552 = vperm.xlu0 %551, %v397
      %v553 = vpop.permute.xlu0 %552
      %555 = vset.pattern.permute.xlu0 1
      %556 = vperm.xlu0 %555, %v398
      %v557 = vpop.permute.xlu0 %556
      %559 = vset.pattern.permute.xlu0 1
      %560 = vperm.xlu0 %559, %v399
      %v561 = vpop.permute.xlu0 %560
      %563 = vset.pattern.permute.xlu0 1
      %564 = vperm.xlu0 %563, %v400
      %v565 = vpop.permute.xlu0 %564
      %v567 = vlaneseq
      %v568 = vshrl.u32 %v567, 7
      %v569 = vsub.s32 1, %v568
      %v570 = vrot.slane %v401, %v569
      %v571 = vmul.f32 %v505, %v570
      %v572 = vmul.f32 %v509, %v570
      %v573 = vmul.f32 %v513, %v570
      %v574 = vmul.f32 %v517, %v570
      %v575 = vmul.f32 %v521, %v570
      %v576 = vmul.f32 %v525, %v570
      %v577 = vmul.f32 %v529, %v570
      %v578 = vmul.f32 %v533, %v570
      %v579 = vmul.f32 %v537, %v570
      %v580 = vmul.f32 %v541, %v570
      %v581 = vmul.f32 %v545, %v570
      %v582 = vmul.f32 %v549, %v570
      %v583 = vmul.f32 %v553, %v570
      %v584 = vmul.f32 %v557, %v570
      %v585 = vmul.f32 %v561, %v570
      %v586 = vmul.f32 %v565, %v570
      %v587 = vadd.f32 %v487, %v571
      %v588 = vadd.f32 %v488, %v572
      %v589 = vadd.f32 %v489, %v573
      %v590 = vadd.f32 %v490, %v574
      %v591 = vadd.f32 %v491, %v575
      %v592 = vadd.f32 %v492, %v576
      %v593 = vadd.f32 %v493, %v577
      %v594 = vadd.f32 %v494, %v578
      %v595 = vadd.f32 %v495, %v579
      %v596 = vadd.f32 %v496, %v580
      %v597 = vadd.f32 %v497, %v581
      %v598 = vadd.f32 %v498, %v582
      %v599 = vadd.f32 %v499, %v583
      %v600 = vadd.f32 %v500, %v584
      %v601 = vadd.f32 %v501, %v585
      %v602 = vadd.f32 %v502, %v586
      %603 = vset.pattern.permute.xlu0 2
      %604 = vperm.xlu0 %603, %v385
      %v605 = vpop.permute.xlu0 %604
      %607 = vset.pattern.permute.xlu0 2
      %608 = vperm.xlu0 %607, %v386
      %v609 = vpop.permute.xlu0 %608
      %611 = vset.pattern.permute.xlu0 2
      %612 = vperm.xlu0 %611, %v387
      %v613 = vpop.permute.xlu0 %612
      %615 = vset.pattern.permute.xlu0 2
      %616 = vperm.xlu0 %615, %v388
      %v617 = vpop.permute.xlu0 %616
      %619 = vset.pattern.permute.xlu0 2
      %620 = vperm.xlu0 %619, %v389
      %v621 = vpop.permute.xlu0 %620
      %623 = vset.pattern.permute.xlu0 2
      %624 = vperm.xlu0 %623, %v390
      %v625 = vpop.permute.xlu0 %624
      %627 = vset.pattern.permute.xlu0 2
      %628 = vperm.xlu0 %627, %v391
      %v629 = vpop.permute.xlu0 %628
      %631 = vset.pattern.permute.xlu0 2
      %632 = vperm.xlu0 %631, %v392
      %v633 = vpop.permute.xlu0 %632
      %635 = vset.pattern.permute.xlu0 2
      %636 = vperm.xlu0 %635, %v393
      %v637 = vpop.permute.xlu0 %636
      %639 = vset.pattern.permute.xlu0 2
      %640 = vperm.xlu0 %639, %v394
      %v641 = vpop.permute.xlu0 %640
      %643 = vset.pattern.permute.xlu0 2
      %644 = vperm.xlu0 %643, %v395
      %v645 = vpop.permute.xlu0 %644
      %647 = vset.pattern.permute.xlu0 2
      %648 = vperm.xlu0 %647, %v396
      %v649 = vpop.permute.xlu0 %648
      %651 = vset.pattern.permute.xlu0 2
      %652 = vperm.xlu0 %651, %v397
      %v653 = vpop.permute.xlu0 %652
      %655 = vset.pattern.permute.xlu0 2
      %656 = vperm.xlu0 %655, %v398
      %v657 = vpop.permute.xlu0 %656
      %659 = vset.pattern.permute.xlu0 2
      %660 = vperm.xlu0 %659, %v399
      %v661 = vpop.permute.xlu0 %660
      %663 = vset.pattern.permute.xlu0 2
      %664 = vperm.xlu0 %663, %v400
      %v665 = vpop.permute.xlu0 %664
      %v667 = vlaneseq
      %v668 = vshrl.u32 %v667, 7
      %v669 = vsub.s32 2, %v668
      %v670 = vrot.slane %v401, %v669
      %v671 = vmul.f32 %v605, %v670
      %v672 = vmul.f32 %v609, %v670
      %v673 = vmul.f32 %v613, %v670
      %v674 = vmul.f32 %v617, %v670
      %v675 = vmul.f32 %v621, %v670
      %v676 = vmul.f32 %v625, %v670
      %v677 = vmul.f32 %v629, %v670
      %v678 = vmul.f32 %v633, %v670
      %v679 = vmul.f32 %v637, %v670
      %v680 = vmul.f32 %v641, %v670
      %v681 = vmul.f32 %v645, %v670
      %v682 = vmul.f32 %v649, %v670
      %v683 = vmul.f32 %v653, %v670
      %v684 = vmul.f32 %v657, %v670
      %v685 = vmul.f32 %v661, %v670
      %v686 = vmul.f32 %v665, %v670
      %v687 = vadd.f32 %v587, %v671
      %v688 = vadd.f32 %v588, %v672
      %v689 = vadd.f32 %v589, %v673
      %v690 = vadd.f32 %v590, %v674
      %v691 = vadd.f32 %v591, %v675
      %v692 = vadd.f32 %v592, %v676
      %v693 = vadd.f32 %v593, %v677
      %v694 = vadd.f32 %v594, %v678
      %v695 = vadd.f32 %v595, %v679
      %v696 = vadd.f32 %v596, %v680
      %v697 = vadd.f32 %v597, %v681
      %v698 = vadd.f32 %v598, %v682
      %v699 = vadd.f32 %v599, %v683
      %v700 = vadd.f32 %v600, %v684
      %v701 = vadd.f32 %v601, %v685
      %v702 = vadd.f32 %v602, %v686
      %v704 = vlaneseq
      %v705 = vshrl.u32 %v704, 7
      %v706 = vsub.s32 0, %v705
      %v707 = vrot.slane %v402, %v706
      %v709 = vadd.f32 %v687, %v707
      %v710 = vadd.f32 %v688, %v707
      %v711 = vadd.f32 %v689, %v707
      %v712 = vadd.f32 %v690, %v707
      %v713 = vadd.f32 %v691, %v707
      %v714 = vadd.f32 %v692, %v707
      %v715 = vadd.f32 %v693, %v707
      %v716 = vadd.f32 %v694, %v707
      %v717 = vadd.f32 %v695, %v707
      %v718 = vadd.f32 %v696, %v707
      %v719 = vadd.f32 %v697, %v707
      %v720 = vadd.f32 %v698, %v707
      %v721 = vadd.f32 %v699, %v707
      %v722 = vadd.f32 %v700, %v707
      %v723 = vadd.f32 %v701, %v707
      %v724 = vadd.f32 %v702, %v707
      %v725 = vmax.f32 %v709, 0.0
      %v726 = vmax.f32 %v710, 0.0
      %v727 = vmax.f32 %v711, 0.0
      %v728 = vmax.f32 %v712, 0.0
      %v729 = vmax.f32 %v713, 0.0
      %v730 = vmax.f32 %v714, 0.0
      %v731 = vmax.f32 %v715, 0.0
      %v732 = vmax.f32 %v716, 0.0
      %v733 = vmax.f32 %v717, 0.0
      %v734 = vmax.f32 %v718, 0.0
      %v735 = vmax.f32 %v719, 0.0
      %v736 = vmax.f32 %v720, 0.0
      %v737 = vmax.f32 %v721, 0.0
      %v738 = vmax.f32 %v722, 0.0
      %v739 = vmax.f32 %v723, 0.0
      %v740 = vmax.f32 %v724, 0.0
      %v741 = vpack.c.bf16 %v726, %v725
      %v742 = vpack.c.bf16 %v728, %v727
      %v743 = vpack.c.bf16 %v730, %v729
      %v744 = vpack.c.bf16 %v732, %v731
      %v745 = vpack.c.bf16 %v734, %v733
      %v746 = vpack.c.bf16 %v736, %v735
      %v747 = vpack.c.bf16 %v738, %v737
      %v748 = vpack.c.bf16 %v740, %v739
      %v749 = vld [vmem:[%s3] sm:$0xf]
      %v750 = vld [vmem:[%s3 + $0x4] sm:$0xf]
      %v751 = vld [vmem:[%s3 + $0x8] sm:$0xf]
      %v752 = vld [vmem:[%s3 + $0xc] sm:$0xf]
      %v753 = vld [vmem:[%s3 + $0x10] sm:$0xf]
      %v754 = vld [vmem:[%s3 + $0x14] sm:$0xf]
      %v755 = vld [vmem:[%s3 + $0x18] sm:$0xf]
      %v756 = vld [vmem:[%s3 + $0x1c] sm:$0xf]
      %v757 = vld [vmem:[%s4] sm:$0x1]
      %v759 = vlaneseq
      %v760 = vshrl.u32 %v759, 7
      %v761 = vsub.s32 0, %v760
      %v762 = vrot.slane %v757, %v761
      %v772 = vunpack.c.l.b16 %v749
      %v773 = vunpack.c.l.b16 %v750
      %v774 = vunpack.c.l.b16 %v751
      %v775 = vunpack.c.l.b16 %v752
      %v776 = vunpack.c.l.b16 %v753
      %v777 = vunpack.c.l.b16 %v754
      %v778 = vunpack.c.l.b16 %v755
      %v779 = vunpack.c.l.b16 %v756
      %v780 = vpack.c.b16 %v773, %v772
      %v781 = vpack.c.b16 %v775, %v774
      %v782 = vpack.c.b16 %v777, %v776
      %v783 = vpack.c.b16 %v779, %v778
      %vm788 = vcmask 523264
      %v790 = vsel %vm788, %v741, 0
      %v793 = vsel %vm788, %v742, 0
      %v796 = vsel %vm788, %v743, 0
      %v799 = vsel %vm788, %v744, 0
      %v802 = vsel %vm788, %v745, 0
      %v805 = vsel %vm788, %v746, 0
      %v808 = vsel %vm788, %v747, 0
      %v811 = vsel %vm788, %v748, 0
      %813 = vmatprep.subr.bf16.mxu0 0
      %814 = vmatpush1.bf16.msra.mxu0 %v780
      %815 = vmatprep.subr.bf16.mxu0 0
      %816 = vmatpush1.bf16.msra.mxu0 %v781
      %817 = vmatprep.subr.bf16.mxu0 0
      %818 = vmatpush1.bf16.msra.mxu0 %v782
      %819 = vmatprep.subr.bf16.mxu0 0
      %820 = vmatpush1.bf16.msra.mxu0 %v783
      %821 = vmatprep.subr.bf16.mxu0 0
      %822 = vmatpush1.bf16.msra.mxu0 0
      %823 = vmatprep.subr.bf16.mxu0 0
      %824 = vmatpush1.bf16.msra.mxu0 0
      %825 = vmatprep.subr.bf16.mxu0 0
      %826 = vmatpush1.bf16.msra.mxu0 0
      %827 = vmatprep.subr.bf16.mxu0 0
      %828 = vmatpush1.bf16.msra.mxu0 0
      %829 = vmatprep.subr.bf16.mxu0 0
      %830 = vmatpush1.bf16.msra.mxu0 0
      %831 = vmatprep.subr.bf16.mxu0 0
      %832 = vmatpush1.bf16.msra.mxu0 0
      %833 = vmatprep.subr.bf16.mxu0 0
      %834 = vmatpush1.bf16.msra.mxu0 0
      %835 = vmatprep.subr.bf16.mxu0 0
      %836 = vmatpush1.bf16.msra.mxu0 0
      %837 = vmatprep.subr.bf16.mxu0 0
      %838 = vmatpush1.bf16.msra.mxu0 0
      %839 = vmatprep.subr.bf16.mxu0 0
      %840 = vmatpush1.bf16.msra.mxu0 0
      %841 = vmatprep.subr.bf16.mxu0 0
      %842 = vmatpush1.bf16.msra.mxu0 0
      %843 = vmatprep.subr.bf16.mxu0 0
      %844 = vmatpush1.bf16.msra.mxu0 0
      %845 = vmatprep.mubr.bf16.mxu0 0
      %846 = vmatmul.mubr.bf16.gmra.mrb[0].mxu0 %v790
      %v847 = vpop.f32.mrb[0].mxu0
      %v848 = vadd.f32 %v762, %v847
      %v849 = vpop.f32.mrb[0].mxu0
      %v850 = vpop.f32.mrb[0].mxu0
      %v851 = vadd.f32 %v762, %v850
      %v852 = vpop.f32.mrb[0].mxu0
      %853 = vmatprep.mubr.bf16.mxu0 0
      %854 = vmatmul.mubr.bf16.gmra.mrb[0].mxu0 %v793
      %v855 = vpop.f32.mrb[0].mxu0
      %v856 = vadd.f32 %v762, %v855
      %v857 = vpop.f32.mrb[0].mxu0
      %v858 = vpop.f32.mrb[0].mxu0
      %v859 = vadd.f32 %v762, %v858
      %v860 = vpop.f32.mrb[0].mxu0
      %861 = vmatprep.mubr.bf16.mxu0 0
      %862 = vmatmul.mubr.bf16.gmra.mrb[0].mxu0 %v796
      %v863 = vpop.f32.mrb[0].mxu0
      %v864 = vadd.f32 %v762, %v863
      %v865 = vpop.f32.mrb[0].mxu0
      %v866 = vpop.f32.mrb[0].mxu0
      %v867 = vadd.f32 %v762, %v866
      %v868 = vpop.f32.mrb[0].mxu0
      %869 = vmatprep.mubr.bf16.mxu0 0
      %870 = vmatmul.mubr.bf16.gmra.mrb[0].mxu0 %v799
      %v871 = vpop.f32.mrb[0].mxu0
      %v872 = vadd.f32 %v762, %v871
      %v873 = vpop.f32.mrb[0].mxu0
      %v874 = vpop.f32.mrb[0].mxu0
      %v875 = vadd.f32 %v762, %v874
      %v876 = vpop.f32.mrb[0].mxu0
      %877 = vmatprep.mubr.bf16.mxu0 0
      %878 = vmatmul.mubr.bf16.gmra.mrb[0].mxu0 %v802
      %v879 = vpop.f32.mrb[0].mxu0
      %v880 = vadd.f32 %v762, %v879
      %v881 = vpop.f32.mrb[0].mxu0
      %v882 = vpop.f32.mrb[0].mxu0
      %v883 = vadd.f32 %v762, %v882
      %v884 = vpop.f32.mrb[0].mxu0
      %885 = vmatprep.mubr.bf16.mxu0 0
      %886 = vmatmul.mubr.bf16.gmra.mrb[0].mxu0 %v805
      %v887 = vpop.f32.mrb[0].mxu0
      %v888 = vadd.f32 %v762, %v887
      %v889 = vpop.f32.mrb[0].mxu0
      %v890 = vpop.f32.mrb[0].mxu0
      %v891 = vadd.f32 %v762, %v890
      %v892 = vpop.f32.mrb[0].mxu0
      %893 = vmatprep.mubr.bf16.mxu0 0
      %894 = vmatmul.mubr.bf16.gmra.mrb[0].mxu0 %v808
      %v895 = vpop.f32.mrb[0].mxu0
      %v896 = vadd.f32 %v762, %v895
      %v897 = vpop.f32.mrb[0].mxu0
      %v898 = vpop.f32.mrb[0].mxu0
      %v899 = vadd.f32 %v762, %v898
      %v900 = vpop.f32.mrb[0].mxu0
      %901 = vmatprep.mubr.bf16.mxu0 0
      %902 = vmatmul.mubr.bf16.gmra.mrb[0].mxu0 %v811
      %v903 = vpop.f32.mrb[0].mxu0
      %v904 = vadd.f32 %v762, %v903
      %v905 = vpop.f32.mrb[0].mxu0
      %v906 = vpop.f32.mrb[0].mxu0
      %v907 = vadd.f32 %v762, %v906
      %v908 = vpop.f32.mrb[0].mxu0
      %909 = vdwg.mxu0
      %v910 = vmax.f32 %v848, 0.0
      %v911 = vmax.f32 %v851, 0.0
      %v912 = vmax.f32 %v856, 0.0
      %v913 = vmax.f32 %v859, 0.0
      %v914 = vmax.f32 %v864, 0.0
      %v915 = vmax.f32 %v867, 0.0
      %v916 = vmax.f32 %v872, 0.0
      %v917 = vmax.f32 %v875, 0.0
      %v918 = vmax.f32 %v880, 0.0
      %v919 = vmax.f32 %v883, 0.0
      %v920 = vmax.f32 %v888, 0.0
      %v921 = vmax.f32 %v891, 0.0
      %v922 = vmax.f32 %v896, 0.0
      %v923 = vmax.f32 %v899, 0.0
      %v924 = vmax.f32 %v904, 0.0
      %v925 = vmax.f32 %v907, 0.0
      %v926 = vpack.c.bf16 %v911, %v910
      %v927 = vpack.c.bf16 %v913, %v912
      %v928 = vpack.c.bf16 %v915, %v914
      %v929 = vpack.c.bf16 %v917, %v916
      %v930 = vpack.c.bf16 %v919, %v918
      %v931 = vpack.c.bf16 %v921, %v920
      %v932 = vpack.c.bf16 %v923, %v922
      %v933 = vpack.c.bf16 %v925, %v924
      %v934 = vld [vmem:[%s5] sm:$0xff]
      %v935 = vld [vmem:[%s5 + $0x8] sm:$0xff]
      %v936 = vld [vmem:[%s5 + $0x10] sm:$0xff]
      %v937 = vld [vmem:[%s5 + $0x18] sm:$0xff]
      %v938 = vld [vmem:[%s5 + $0x20] sm:$0xff]
      %v939 = vld [vmem:[%s5 + $0x28] sm:$0xff]
      %v940 = vld [vmem:[%s5 + $0x30] sm:$0xff]
      %v941 = vld [vmem:[%s5 + $0x38] sm:$0xff]
      %v942 = vld [vmem:[%s5 + $0x40] sm:$0xff]
      %v943 = vld [vmem:[%s5 + $0x48] sm:$0xff]
      %v944 = vld [vmem:[%s5 + $0x50] sm:$0xff]
      %v945 = vld [vmem:[%s5 + $0x58] sm:$0xff]
      %v946 = vld [vmem:[%s5 + $0x60] sm:$0xff]
      %v947 = vld [vmem:[%s5 + $0x68] sm:$0xff]
      %v948 = vld [vmem:[%s5 + $0x70] sm:$0xff]
      %v949 = vld [vmem:[%s5 + $0x78] sm:$0xff]
      %v950 = vld [vmem:[%s5 + $0x80] sm:$0xff]
      %v951 = vld [vmem:[%s5 + $0x88] sm:$0xff]
      %v952 = vld [vmem:[%s5 + $0x90] sm:$0xff]
      %v953 = vld [vmem:[%s5 + $0x98] sm:$0xff]
      %v954 = vld [vmem:[%s5 + $0xa0] sm:$0xff]
      %v955 = vld [vmem:[%s5 + $0xa8] sm:$0xff]
      %v956 = vld [vmem:[%s5 + $0xb0] sm:$0xff]
      %v957 = vld [vmem:[%s5 + $0xb8] sm:$0xff]
      %v958 = vld [vmem:[%s5 + $0xc0] sm:$0xff]
      %v959 = vld [vmem:[%s5 + $0xc8] sm:$0xff]
      %v960 = vld [vmem:[%s5 + $0xd0] sm:$0xff]
      %v961 = vld [vmem:[%s5 + $0xd8] sm:$0xff]
      %v962 = vld [vmem:[%s5 + $0xe0] sm:$0xff]
      %v963 = vld [vmem:[%s5 + $0xe8] sm:$0xff]
      %v964 = vld [vmem:[%s5 + $0xf0] sm:$0xff]
      %v965 = vld [vmem:[%s5 + $0xf8] sm:$0xff]
      %v966 = vld [vmem:[%s5 + $0x100] sm:$0xff]
      %v967 = vld [vmem:[%s5 + $0x108] sm:$0xff]
      %v968 = vld [vmem:[%s5 + $0x110] sm:$0xff]
      %v969 = vld [vmem:[%s5 + $0x118] sm:$0xff]
      %v970 = vld [vmem:[%s5 + $0x120] sm:$0xff]
      %v971 = vld [vmem:[%s5 + $0x128] sm:$0xff]
      %v972 = vld [vmem:[%s5 + $0x130] sm:$0xff]
      %v973 = vld [vmem:[%s5 + $0x138] sm:$0xff]
      %v974 = vld [vmem:[%s5 + $0x140] sm:$0xff]
      %v975 = vld [vmem:[%s5 + $0x148] sm:$0xff]
      %v976 = vld [vmem:[%s5 + $0x150] sm:$0xff]
      %v977 = vld [vmem:[%s5 + $0x158] sm:$0xff]
      %v978 = vld [vmem:[%s5 + $0x160] sm:$0xff]
      %v979 = vld [vmem:[%s5 + $0x168] sm:$0xff]
      %v980 = vld [vmem:[%s5 + $0x170] sm:$0xff]
      %v981 = vld [vmem:[%s5 + $0x178] sm:$0xff]
      %v982 = vld [vmem:[%s5 + $0x180] sm:$0xff]
      %v983 = vld [vmem:[%s5 + $0x188] sm:$0xff]
      %v984 = vld [vmem:[%s5 + $0x190] sm:$0xff]
      %v985 = vld [vmem:[%s5 + $0x198] sm:$0xff]
      %v986 = vld [vmem:[%s5 + $0x1a0] sm:$0xff]
      %v987 = vld [vmem:[%s5 + $0x1a8] sm:$0xff]
      %v988 = vld [vmem:[%s5 + $0x1b0] sm:$0xff]
      %v989 = vld [vmem:[%s5 + $0x1b8] sm:$0xff]
      %v990 = vld [vmem:[%s5 + $0x1c0] sm:$0xff]
      %v991 = vld [vmem:[%s5 + $0x1c8] sm:$0xff]
      %v992 = vld [vmem:[%s5 + $0x1d0] sm:$0xff]
      %v993 = vld [vmem:[%s5 + $0x1d8] sm:$0xff]
      %v994 = vld [vmem:[%s5 + $0x1e0] sm:$0xff]
      %v995 = vld [vmem:[%s5 + $0x1e8] sm:$0xff]
      %v996 = vld [vmem:[%s5 + $0x1f0] sm:$0xff]
      %v997 = vld [vmem:[%s5 + $0x1f8] sm:$0xff]
      %v1062 = vunpack.c.l.b16 %v934
      %v1063 = vunpack.c.h.b16 %v934
      %v1064 = vunpack.c.l.b16 %v935
      %v1065 = vunpack.c.h.b16 %v935
      %v1066 = vunpack.c.l.b16 %v936
      %v1067 = vunpack.c.h.b16 %v936
      %v1068 = vunpack.c.l.b16 %v937
      %v1069 = vunpack.c.h.b16 %v937
      %v1070 = vunpack.c.l.b16 %v938
      %v1071 = vunpack.c.h.b16 %v938
      %v1072 = vunpack.c.l.b16 %v939
      %v1073 = vunpack.c.h.b16 %v939
      %v1074 = vunpack.c.l.b16 %v940
      %v1075 = vunpack.c.h.b16 %v940
      %v1076 = vunpack.c.l.b16 %v941
      %v1077 = vunpack.c.h.b16 %v941
      %v1078 = vunpack.c.l.b16 %v942
      %v1079 = vunpack.c.h.b16 %v942
      %v1080 = vunpack.c.l.b16 %v943
      %v1081 = vunpack.c.h.b16 %v943
      %v1082 = vunpack.c.l.b16 %v944
      %v1083 = vunpack.c.h.b16 %v944
      %v1084 = vunpack.c.l.b16 %v945
      %v1085 = vunpack.c.h.b16 %v945
      %v1086 = vunpack.c.l.b16 %v946
      %v1087 = vunpack.c.h.b16 %v946
      %v1088 = vunpack.c.l.b16 %v947
      %v1089 = vunpack.c.h.b16 %v947
      %v1090 = vunpack.c.l.b16 %v948
      %v1091 = vunpack.c.h.b16 %v948
      %v1092 = vunpack.c.l.b16 %v949
      %v1093 = vunpack.c.h.b16 %v949
      %v1094 = vunpack.c.l.b16 %v950
      %v1095 = vunpack.c.h.b16 %v950
      %v1096 = vunpack.c.l.b16 %v951
      %v1097 = vunpack.c.h.b16 %v951
      %v1098 = vunpack.c.l.b16 %v952
      %v1099 = vunpack.c.h.b16 %v952
      %v1100 = vunpack.c.l.b16 %v953
      %v1101 = vunpack.c.h.b16 %v953
      %v1102 = vunpack.c.l.b16 %v954
      %v1103 = vunpack.c.h.b16 %v954
      %v1104 = vunpack.c.l.b16 %v955
      %v1105 = vunpack.c.h.b16 %v955
      %v1106 = vunpack.c.l.b16 %v956
      %v1107 = vunpack.c.h.b16 %v956
      %v1108 = vunpack.c.l.b16 %v957
      %v1109 = vunpack.c.h.b16 %v957
      %v1110 = vunpack.c.l.b16 %v958
      %v1111 = vunpack.c.h.b16 %v958
      %v1112 = vunpack.c.l.b16 %v959
      %v1113 = vunpack.c.h.b16 %v959
      %v1114 = vunpack.c.l.b16 %v960
      %v1115 = vunpack.c.h.b16 %v960
      %v1116 = vunpack.c.l.b16 %v961
      %v1117 = vunpack.c.h.b16 %v961
      %v1118 = vunpack.c.l.b16 %v962
      %v1119 = vunpack.c.h.b16 %v962
      %v1120 = vunpack.c.l.b16 %v963
      %v1121 = vunpack.c.h.b16 %v963
      %v1122 = vunpack.c.l.b16 %v964
      %v1123 = vunpack.c.h.b16 %v964
      %v1124 = vunpack.c.l.b16 %v965
      %v1125 = vunpack.c.h.b16 %v965
      %v1126 = vunpack.c.l.b16 %v966
      %v1127 = vunpack.c.h.b16 %v966
      %v1128 = vunpack.c.l.b16 %v967
      %v1129 = vunpack.c.h.b16 %v967
      %v1130 = vunpack.c.l.b16 %v968
      %v1131 = vunpack.c.h.b16 %v968
      %v1132 = vunpack.c.l.b16 %v969
      %v1133 = vunpack.c.h.b16 %v969
      %v1134 = vunpack.c.l.b16 %v970
      %v1135 = vunpack.c.h.b16 %v970
      %v1136 = vunpack.c.l.b16 %v971
      %v1137 = vunpack.c.h.b16 %v971
      %v1138 = vunpack.c.l.b16 %v972
      %v1139 = vunpack.c.h.b16 %v972
      %v1140 = vunpack.c.l.b16 %v973
      %v1141 = vunpack.c.h.b16 %v973
      %v1142 = vunpack.c.l.b16 %v974
      %v1143 = vunpack.c.h.b16 %v974
      %v1144 = vunpack.c.l.b16 %v975
      %v1145 = vunpack.c.h.b16 %v975
      %v1146 = vunpack.c.l.b16 %v976
      %v1147 = vunpack.c.h.b16 %v976
      %v1148 = vunpack.c.l.b16 %v977
      %v1149 = vunpack.c.h.b16 %v977
      %v1150 = vunpack.c.l.b16 %v978
      %v1151 = vunpack.c.h.b16 %v978
      %v1152 = vunpack.c.l.b16 %v979
      %v1153 = vunpack.c.h.b16 %v979
      %v1154 = vunpack.c.l.b16 %v980
      %v1155 = vunpack.c.h.b16 %v980
      %v1156 = vunpack.c.l.b16 %v981
      %v1157 = vunpack.c.h.b16 %v981
      %v1158 = vunpack.c.l.b16 %v982
      %v1159 = vunpack.c.h.b16 %v982
      %v1160 = vunpack.c.l.b16 %v983
      %v1161 = vunpack.c.h.b16 %v983
      %v1162 = vunpack.c.l.b16 %v984
      %v1163 = vunpack.c.h.b16 %v984
      %v1164 = vunpack.c.l.b16 %v985
      %v1165 = vunpack.c.h.b16 %v985
      %v1166 = vunpack.c.l.b16 %v986
      %v1167 = vunpack.c.h.b16 %v986
      %v1168 = vunpack.c.l.b16 %v987
      %v1169 = vunpack.c.h.b16 %v987
      %v1170 = vunpack.c.l.b16 %v988
      %v1171 = vunpack.c.h.b16 %v988
      %v1172 = vunpack.c.l.b16 %v989
      %v1173 = vunpack.c.h.b16 %v989
      %v1174 = vunpack.c.l.b16 %v990
      %v1175 = vunpack.c.h.b16 %v990
      %v1176 = vunpack.c.l.b16 %v991
      %v1177 = vunpack.c.h.b16 %v991
      %v1178 = vunpack.c.l.b16 %v992
      %v1179 = vunpack.c.h.b16 %v992
      %v1180 = vunpack.c.l.b16 %v993
      %v1181 = vunpack.c.h.b16 %v993
      %v1182 = vunpack.c.l.b16 %v994
      %v1183 = vunpack.c.h.b16 %v994
      %v1184 = vunpack.c.l.b16 %v995
      %v1185 = vunpack.c.h.b16 %v995
      %v1186 = vunpack.c.l.b16 %v996
      %v1187 = vunpack.c.h.b16 %v996
      %v1188 = vunpack.c.l.b16 %v997
      %v1189 = vunpack.c.h.b16 %v997
      %v1190 = vpack.c.b16 %v1070, %v1062
      %v1191 = vpack.c.b16 %v1071, %v1063
      %v1192 = vpack.c.b16 %v1072, %v1064
      %v1193 = vpack.c.b16 %v1073, %v1065
      %v1194 = vpack.c.b16 %v1074, %v1066
      %v1195 = vpack.c.b16 %v1075, %v1067
      %v1196 = vpack.c.b16 %v1076, %v1068
      %v1197 = vpack.c.b16 %v1077, %v1069
      %v1198 = vpack.c.b16 %v1086, %v1078
      %v1199 = vpack.c.b16 %v1087, %v1079
      %v1200 = vpack.c.b16 %v1088, %v1080
      %v1201 = vpack.c.b16 %v1089, %v1081
      %v1202 = vpack.c.b16 %v1090, %v1082
      %v1203 = vpack.c.b16 %v1091, %v1083
      %v1204 = vpack.c.b16 %v1092, %v1084
      %v1205 = vpack.c.b16 %v1093, %v1085
      %v1206 = vpack.c.b16 %v1102, %v1094
      %v1207 = vpack.c.b16 %v1103, %v1095
      %v1208 = vpack.c.b16 %v1104, %v1096
      %v1209 = vpack.c.b16 %v1105, %v1097
      %v1210 = vpack.c.b16 %v1106, %v1098
      %v1211 = vpack.c.b16 %v1107, %v1099
      %v1212 = vpack.c.b16 %v1108, %v1100
      %v1213 = vpack.c.b16 %v1109, %v1101
      %v1214 = vpack.c.b16 %v1118, %v1110
      %v1215 = vpack.c.b16 %v1119, %v1111
      %v1216 = vpack.c.b16 %v1120, %v1112
      %v1217 = vpack.c.b16 %v1121, %v1113
      %v1218 = vpack.c.b16 %v1122, %v1114
      %v1219 = vpack.c.b16 %v1123, %v1115
      %v1220 = vpack.c.b16 %v1124, %v1116
      %v1221 = vpack.c.b16 %v1125, %v1117
      %v1222 = vpack.c.b16 %v1134, %v1126
      %v1223 = vpack.c.b16 %v1135, %v1127
      %v1224 = vpack.c.b16 %v1136, %v1128
      %v1225 = vpack.c.b16 %v1137, %v1129
      %v1226 = vpack.c.b16 %v1138, %v1130
      %v1227 = vpack.c.b16 %v1139, %v1131
      %v1228 = vpack.c.b16 %v1140, %v1132
      %v1229 = vpack.c.b16 %v1141, %v1133
      %v1230 = vpack.c.b16 %v1150, %v1142
      %v1231 = vpack.c.b16 %v1151, %v1143
      %v1232 = vpack.c.b16 %v1152, %v1144
      %v1233 = vpack.c.b16 %v1153, %v1145
      %v1234 = vpack.c.b16 %v1154, %v1146
      %v1235 = vpack.c.b16 %v1155, %v1147
      %v1236 = vpack.c.b16 %v1156, %v1148
      %v1237 = vpack.c.b16 %v1157, %v1149
      %v1238 = vpack.c.b16 %v1166, %v1158
      %v1239 = vpack.c.b16 %v1167, %v1159
      %v1240 = vpack.c.b16 %v1168, %v1160
      %v1241 = vpack.c.b16 %v1169, %v1161
      %v1242 = vpack.c.b16 %v1170, %v1162
      %v1243 = vpack.c.b16 %v1171, %v1163
      %v1244 = vpack.c.b16 %v1172, %v1164
      %v1245 = vpack.c.b16 %v1173, %v1165
      %v1246 = vpack.c.b16 %v1182, %v1174
      %v1247 = vpack.c.b16 %v1183, %v1175
      %v1248 = vpack.c.b16 %v1184, %v1176
      %v1249 = vpack.c.b16 %v1185, %v1177
      %v1250 = vpack.c.b16 %v1186, %v1178
      %v1251 = vpack.c.b16 %v1187, %v1179
      %v1252 = vpack.c.b16 %v1188, %v1180
      %v1253 = vpack.c.b16 %v1189, %v1181
      %1318 = vmatprep.subr.bf16.mxu0 %v1191
      %1319 = vmatpush1.bf16.msra.mxu0 %v1190
      %1320 = vmatprep.subr.bf16.mxu0 %v1199
      %1321 = vmatpush1.bf16.msra.mxu0 %v1198
      %1322 = vmatprep.subr.bf16.mxu0 %v1207
      %1323 = vmatpush1.bf16.msra.mxu0 %v1206
      %1324 = vmatprep.subr.bf16.mxu0 %v1215
      %1325 = vmatpush1.bf16.msra.mxu0 %v1214
      %1326 = vmatprep.subr.bf16.mxu0 %v1223
      %1327 = vmatpush1.bf16.msra.mxu0 %v1222
      %1328 = vmatprep.subr.bf16.mxu0 %v1231
      %1329 = vmatpush1.bf16.msra.mxu0 %v1230
      %1330 = vmatprep.subr.bf16.mxu0 %v1239
      %1331 = vmatpush1.bf16.msra.mxu0 %v1238
      %1332 = vmatprep.subr.bf16.mxu0 %v1247
      %1333 = vmatpush1.bf16.msra.mxu0 %v1246
      %1334 = vmatprep.subr.bf16.mxu0 0
      %1335 = vmatpush1.bf16.msra.mxu0 0
      %1336 = vmatprep.subr.bf16.mxu0 0
      %1337 = vmatpush1.bf16.msra.mxu0 0
      %1338 = vmatprep.subr.bf16.mxu0 0
      %1339 = vmatpush1.bf16.msra.mxu0 0
      %1340 = vmatprep.subr.bf16.mxu0 0
      %1341 = vmatpush1.bf16.msra.mxu0 0
      %1342 = vmatprep.subr.bf16.mxu0 0
      %1343 = vmatpush1.bf16.msra.mxu0 0
      %1344 = vmatprep.subr.bf16.mxu0 0
      %1345 = vmatpush1.bf16.msra.mxu0 0
      %1346 = vmatprep.subr.bf16.mxu0 0
      %1347 = vmatpush1.bf16.msra.mxu0 0
      %1348 = vmatprep.subr.bf16.mxu0 0
      %1349 = vmatpush1.bf16.msra.mxu0 0
      %1350 = vmatprep.mubr.bf16.mxu0 0
      %1351 = vmatmul.mubr.bf16.gmra.mrb[0].mxu0 %v926
      %v1352 = vpop.f32.mrb[0].mxu0
      %v1353 = vadd.f32 0.0, %v1352
      %v1354 = vpop.f32.mrb[0].mxu0
      %v1355 = vadd.f32 0.0, %v1354
      %v1356 = vpop.f32.mrb[0].mxu0
      %v1357 = vadd.f32 0.0, %v1356
      %v1358 = vpop.f32.mrb[0].mxu0
      %v1359 = vadd.f32 0.0, %v1358
      %1360 = vmatprep.mubr.bf16.mxu0 0
      %1361 = vmatmul.mubr.bf16.gmra.mrb[0].mxu0 %v927
      %v1362 = vpop.f32.mrb[0].mxu0
      %v1363 = vadd.f32 0.0, %v1362
      %v1364 = vpop.f32.mrb[0].mxu0
      %v1365 = vadd.f32 0.0, %v1364
      %v1366 = vpop.f32.mrb[0].mxu0
      %v1367 = vadd.f32 0.0, %v1366
      %v1368 = vpop.f32.mrb[0].mxu0
      %v1369 = vadd.f32 0.0, %v1368
      %1370 = vmatprep.mubr.bf16.mxu0 0
      %1371 = vmatmul.mubr.bf16.gmra.mrb[0].mxu0 %v928
      %v1372 = vpop.f32.mrb[0].mxu0
      %v1373 = vadd.f32 0.0, %v1372
      %v1374 = vpop.f32.mrb[0].mxu0
      %v1375 = vadd.f32 0.0, %v1374
      %v1376 = vpop.f32.mrb[0].mxu0
      %v1377 = vadd.f32 0.0, %v1376
      %v1378 = vpop.f32.mrb[0].mxu0
      %v1379 = vadd.f32 0.0, %v1378
      %1380 = vmatprep.mubr.bf16.mxu0 0
      %1381 = vmatmul.mubr.bf16.gmra.mrb[0].mxu0 %v929
      %v1382 = vpop.f32.mrb[0].mxu0
      %v1383 = vadd.f32 0.0, %v1382
      %v1384 = vpop.f32.mrb[0].mxu0
      %v1385 = vadd.f32 0.0, %v1384
      %v1386 = vpop.f32.mrb[0].mxu0
      %v1387 = vadd.f32 0.0, %v1386
      %v1388 = vpop.f32.mrb[0].mxu0
      %v1389 = vadd.f32 0.0, %v1388
      %1390 = vmatprep.mubr.bf16.mxu0 0
      %1391 = vmatmul.mubr.bf16.gmra.mrb[0].mxu0 %v930
      %v1392 = vpop.f32.mrb[0].mxu0
      %v1393 = vadd.f32 0.0, %v1392
      %v1394 = vpop.f32.mrb[0].mxu0
      %v1395 = vadd.f32 0.0, %v1394
      %v1396 = vpop.f32.mrb[0].mxu0
      %v1397 = vadd.f32 0.0, %v1396
      %v1398 = vpop.f32.mrb[0].mxu0
      %v1399 = vadd.f32 0.0, %v1398
      %1400 = vmatprep.mubr.bf16.mxu0 0
      %1401 = vmatmul.mubr.bf16.gmra.mrb[0].mxu0 %v931
      %v1402 = vpop.f32.mrb[0].mxu0
      %v1403 = vadd.f32 0.0, %v1402
      %v1404 = vpop.f32.mrb[0].mxu0
      %v1405 = vadd.f32 0.0, %v1404
      %v1406 = vpop.f32.mrb[0].mxu0
      %v1407 = vadd.f32 0.0, %v1406
      %v1408 = vpop.f32.mrb[0].mxu0
      %v1409 = vadd.f32 0.0, %v1408
      %1410 = vmatprep.mubr.bf16.mxu0 0
      %1411 = vmatmul.mubr.bf16.gmra.mrb[0].mxu0 %v932
      %v1412 = vpop.f32.mrb[0].mxu0
      %v1413 = vadd.f32 0.0, %v1412
      %v1414 = vpop.f32.mrb[0].mxu0
      %v1415 = vadd.f32 0.0, %v1414
      %v1416 = vpop.f32.mrb[0].mxu0
      %v1417 = vadd.f32 0.0, %v1416
      %v1418 = vpop.f32.mrb[0].mxu0
      %v1419 = vadd.f32 0.0, %v1418
      %1420 = vmatprep.mubr.bf16.mxu0 0
      %1421 = vmatmul.mubr.bf16.gmra.mrb[0].mxu0 %v933
      %v1422 = vpop.f32.mrb[0].mxu0
      %v1423 = vadd.f32 0.0, %v1422
      %v1424 = vpop.f32.mrb[0].mxu0
      %v1425 = vadd.f32 0.0, %v1424
      %v1426 = vpop.f32.mrb[0].mxu0
      %v1427 = vadd.f32 0.0, %v1426
      %v1428 = vpop.f32.mrb[0].mxu0
      %v1429 = vadd.f32 0.0, %v1428
      %1430 = vdwg.mxu0
      %1431 = vmatprep.subr.bf16.mxu0 %v1193
      %1432 = vmatpush1.bf16.msra.mxu0 %v1192
      %1433 = vmatprep.subr.bf16.mxu0 %v1201
      %1434 = vmatpush1.bf16.msra.mxu0 %v1200
      %1435 = vmatprep.subr.bf16.mxu0 %v1209
      %1436 = vmatpush1.bf16.msra.mxu0 %v1208
      %1437 = vmatprep.subr.bf16.mxu0 %v1217
      %1438 = vmatpush1.bf16.msra.mxu0 %v1216
      %1439 = vmatprep.subr.bf16.mxu0 %v1225
      %1440 = vmatpush1.bf16.msra.mxu0 %v1224
      %1441 = vmatprep.subr.bf16.mxu0 %v1233
      %1442 = vmatpush1.bf16.msra.mxu0 %v1232
      %1443 = vmatprep.subr.bf16.mxu0 %v1241
      %1444 = vmatpush1.bf16.msra.mxu0 %v1240
      %1445 = vmatprep.subr.bf16.mxu0 %v1249
      %1446 = vmatpush1.bf16.msra.mxu0 %v1248
      %1447 = vmatprep.subr.bf16.mxu0 0
      %1448 = vmatpush1.bf16.msra.mxu0 0
      %1449 = vmatprep.subr.bf16.mxu0 0
      %1450 = vmatpush1.bf16.msra.mxu0 0
      %1451 = vmatprep.subr.bf16.mxu0 0
      %1452 = vmatpush1.bf16.msra.mxu0 0
      %1453 = vmatprep.subr.bf16.mxu0 0
      %1454 = vmatpush1.bf16.msra.mxu0 0
      %1455 = vmatprep.subr.bf16.mxu0 0
      %1456 = vmatpush1.bf16.msra.mxu0 0
      %1457 = vmatprep.subr.bf16.mxu0 0
      %1458 = vmatpush1.bf16.msra.mxu0 0
      %1459 = vmatprep.subr.bf16.mxu0 0
      %1460 = vmatpush1.bf16.msra.mxu0 0
      %1461 = vmatprep.subr.bf16.mxu0 0
      %1462 = vmatpush1.bf16.msra.mxu0 0
      %1463 = vmatprep.mubr.bf16.mxu0 0
      %1464 = vmatmul.mubr.bf16.gmra.mrb[0].mxu0 %v926
      %v1465 = vpop.f32.mrb[0].mxu0
      %v1466 = vadd.f32 0.0, %v1465
      %v1467 = vpop.f32.mrb[0].mxu0
      %v1468 = vadd.f32 0.0, %v1467
      %v1469 = vpop.f32.mrb[0].mxu0
      %v1470 = vadd.f32 0.0, %v1469
      %v1471 = vpop.f32.mrb[0].mxu0
      %v1472 = vadd.f32 0.0, %v1471
      %1473 = vmatprep.mubr.bf16.mxu0 0
      %1474 = vmatmul.mubr.bf16.gmra.mrb[0].mxu0 %v927
      %v1475 = vpop.f32.mrb[0].mxu0
      %v1476 = vadd.f32 0.0, %v1475
      %v1477 = vpop.f32.mrb[0].mxu0
      %v1478 = vadd.f32 0.0, %v1477
      %v1479 = vpop.f32.mrb[0].mxu0
      %v1480 = vadd.f32 0.0, %v1479
      %v1481 = vpop.f32.mrb[0].mxu0
      %v1482 = vadd.f32 0.0, %v1481
      %1483 = vmatprep.mubr.bf16.mxu0 0
      %1484 = vmatmul.mubr.bf16.gmra.mrb[0].mxu0 %v928
      %v1485 = vpop.f32.mrb[0].mxu0
      %v1486 = vadd.f32 0.0, %v1485
      %v1487 = vpop.f32.mrb[0].mxu0
      %v1488 = vadd.f32 0.0, %v1487
      %v1489 = vpop.f32.mrb[0].mxu0
      %v1490 = vadd.f32 0.0, %v1489
      %v1491 = vpop.f32.mrb[0].mxu0
      %v1492 = vadd.f32 0.0, %v1491
      %1493 = vmatprep.mubr.bf16.mxu0 0
      %1494 = vmatmul.mubr.bf16.gmra.mrb[0].mxu0 %v929
      %v1495 = vpop.f32.mrb[0].mxu0
      %v1496 = vadd.f32 0.0, %v1495
      %v1497 = vpop.f32.mrb[0].mxu0
      %v1498 = vadd.f32 0.0, %v1497
      %v1499 = vpop.f32.mrb[0].mxu0
      %v1500 = vadd.f32 0.0, %v1499
      %v1501 = vpop.f32.mrb[0].mxu0
      %v1502 = vadd.f32 0.0, %v1501
      %1503 = vmatprep.mubr.bf16.mxu0 0
      %1504 = vmatmul.mubr.bf16.gmra.mrb[0].mxu0 %v930
      %v1505 = vpop.f32.mrb[0].mxu0
      %v1506 = vadd.f32 0.0, %v1505
      %v1507 = vpop.f32.mrb[0].mxu0
      %v1508 = vadd.f32 0.0, %v1507
      %v1509 = vpop.f32.mrb[0].mxu0
      %v1510 = vadd.f32 0.0, %v1509
      %v1511 = vpop.f32.mrb[0].mxu0
      %v1512 = vadd.f32 0.0, %v1511
      %1513 = vmatprep.mubr.bf16.mxu0 0
      %1514 = vmatmul.mubr.bf16.gmra.mrb[0].mxu0 %v931
      %v1515 = vpop.f32.mrb[0].mxu0
      %v1516 = vadd.f32 0.0, %v1515
      %v1517 = vpop.f32.mrb[0].mxu0
      %v1518 = vadd.f32 0.0, %v1517
      %v1519 = vpop.f32.mrb[0].mxu0
      %v1520 = vadd.f32 0.0, %v1519
      %v1521 = vpop.f32.mrb[0].mxu0
      %v1522 = vadd.f32 0.0, %v1521
      %1523 = vmatprep.mubr.bf16.mxu0 0
      %1524 = vmatmul.mubr.bf16.gmra.mrb[0].mxu0 %v932
      %v1525 = vpop.f32.mrb[0].mxu0
      %v1526 = vadd.f32 0.0, %v1525
      %v1527 = vpop.f32.mrb[0].mxu0
      %v1528 = vadd.f32 0.0, %v1527
      %v1529 = vpop.f32.mrb[0].mxu0
      %v1530 = vadd.f32 0.0, %v1529
      %v1531 = vpop.f32.mrb[0].mxu0
      %v1532 = vadd.f32 0.0, %v1531
      %1533 = vmatprep.mubr.bf16.mxu0 0
      %1534 = vmatmul.mubr.bf16.gmra.mrb[0].mxu0 %v933
      %v1535 = vpop.f32.mrb[0].mxu0
      %v1536 = vadd.f32 0.0, %v1535
      %v1537 = vpop.f32.mrb[0].mxu0
      %v1538 = vadd.f32 0.0, %v1537
      %v1539 = vpop.f32.mrb[0].mxu0
      %v1540 = vadd.f32 0.0, %v1539
      %v1541 = vpop.f32.mrb[0].mxu0
      %v1542 = vadd.f32 0.0, %v1541
      %1543 = vdwg.mxu0
      %1544 = vmatprep.subr.bf16.mxu0 %v1195
      %1545 = vmatpush1.bf16.msra.mxu0 %v1194
      %1546 = vmatprep.subr.bf16.mxu0 %v1203
      %1547 = vmatpush1.bf16.msra.mxu0 %v1202
      %1548 = vmatprep.subr.bf16.mxu0 %v1211
      %1549 = vmatpush1.bf16.msra.mxu0 %v1210
      %1550 = vmatprep.subr.bf16.mxu0 %v1219
      %1551 = vmatpush1.bf16.msra.mxu0 %v1218
      %1552 = vmatprep.subr.bf16.mxu0 %v1227
      %1553 = vmatpush1.bf16.msra.mxu0 %v1226
      %1554 = vmatprep.subr.bf16.mxu0 %v1235
      %1555 = vmatpush1.bf16.msra.mxu0 %v1234
      %1556 = vmatprep.subr.bf16.mxu0 %v1243
      %1557 = vmatpush1.bf16.msra.mxu0 %v1242
      %1558 = vmatprep.subr.bf16.mxu0 %v1251
      %1559 = vmatpush1.bf16.msra.mxu0 %v1250
      %1560 = vmatprep.subr.bf16.mxu0 0
      %1561 = vmatpush1.bf16.msra.mxu0 0
      %1562 = vmatprep.subr.bf16.mxu0 0
      %1563 = vmatpush1.bf16.msra.mxu0 0
      %1564 = vmatprep.subr.bf16.mxu0 0
      %1565 = vmatpush1.bf16.msra.mxu0 0
      %1566 = vmatprep.subr.bf16.mxu0 0
      %1567 = vmatpush1.bf16.msra.mxu0 0
      %1568 = vmatprep.subr.bf16.mxu0 0
      %1569 = vmatpush1.bf16.msra.mxu0 0
      %1570 = vmatprep.subr.bf16.mxu0 0
      %1571 = vmatpush1.bf16.msra.mxu0 0
      %1572 = vmatprep.subr.bf16.mxu0 0
      %1573 = vmatpush1.bf16.msra.mxu0 0
      %1574 = vmatprep.subr.bf16.mxu0 0
      %1575 = vmatpush1.bf16.msra.mxu0 0
      %1576 = vmatprep.mubr.bf16.mxu0 0
      %1577 = vmatmul.mubr.bf16.gmra.mrb[0].mxu0 %v926
      %v1578 = vpop.f32.mrb[0].mxu0
      %v1579 = vadd.f32 0.0, %v1578
      %v1580 = vpop.f32.mrb[0].mxu0
      %v1581 = vadd.f32 0.0, %v1580
      %v1582 = vpop.f32.mrb[0].mxu0
      %v1583 = vadd.f32 0.0, %v1582
      %v1584 = vpop.f32.mrb[0].mxu0
      %v1585 = vadd.f32 0.0, %v1584
      %1586 = vmatprep.mubr.bf16.mxu0 0
      %1587 = vmatmul.mubr.bf16.gmra.mrb[0].mxu0 %v927
      %v1588 = vpop.f32.mrb[0].mxu0
      %v1589 = vadd.f32 0.0, %v1588
      %v1590 = vpop.f32.mrb[0].mxu0
      %v1591 = vadd.f32 0.0, %v1590
      %v1592 = vpop.f32.mrb[0].mxu0
      %v1593 = vadd.f32 0.0, %v1592
      %v1594 = vpop.f32.mrb[0].mxu0
      %v1595 = vadd.f32 0.0, %v1594
      %1596 = vmatprep.mubr.bf16.mxu0 0
      %1597 = vmatmul.mubr.bf16.gmra.mrb[0].mxu0 %v928
      %v1598 = vpop.f32.mrb[0].mxu0
      %v1599 = vadd.f32 0.0, %v1598
      %v1600 = vpop.f32.mrb[0].mxu0
      %v1601 = vadd.f32 0.0, %v1600
      %v1602 = vpop.f32.mrb[0].mxu0
      %v1603 = vadd.f32 0.0, %v1602
      %v1604 = vpop.f32.mrb[0].mxu0
      %v1605 = vadd.f32 0.0, %v1604
      %1606 = vmatprep.mubr.bf16.mxu0 0
      %1607 = vmatmul.mubr.bf16.gmra.mrb[0].mxu0 %v929
      %v1608 = vpop.f32.mrb[0].mxu0
      %v1609 = vadd.f32 0.0, %v1608
      %v1610 = vpop.f32.mrb[0].mxu0
      %v1611 = vadd.f32 0.0, %v1610
      %v1612 = vpop.f32.mrb[0].mxu0
      %v1613 = vadd.f32 0.0, %v1612
      %v1614 = vpop.f32.mrb[0].mxu0
      %v1615 = vadd.f32 0.0, %v1614
      %1616 = vmatprep.mubr.bf16.mxu0 0
      %1617 = vmatmul.mubr.bf16.gmra.mrb[0].mxu0 %v930
      %v1618 = vpop.f32.mrb[0].mxu0
      %v1619 = vadd.f32 0.0, %v1618
      %v1620 = vpop.f32.mrb[0].mxu0
      %v1621 = vadd.f32 0.0, %v1620
      %v1622 = vpop.f32.mrb[0].mxu0
      %v1623 = vadd.f32 0.0, %v1622
      %v1624 = vpop.f32.mrb[0].mxu0
      %v1625 = vadd.f32 0.0, %v1624
      %1626 = vmatprep.mubr.bf16.mxu0 0
      %1627 = vmatmul.mubr.bf16.gmra.mrb[0].mxu0 %v931
      %v1628 = vpop.f32.mrb[0].mxu0
      %v1629 = vadd.f32 0.0, %v1628
      %v1630 = vpop.f32.mrb[0].mxu0
      %v1631 = vadd.f32 0.0, %v1630
      %v1632 = vpop.f32.mrb[0].mxu0
      %v1633 = vadd.f32 0.0, %v1632
      %v1634 = vpop.f32.mrb[0].mxu0
      %v1635 = vadd.f32 0.0, %v1634
      %1636 = vmatprep.mubr.bf16.mxu0 0
      %1637 = vmatmul.mubr.bf16.gmra.mrb[0].mxu0 %v932
      %v1638 = vpop.f32.mrb[0].mxu0
      %v1639 = vadd.f32 0.0, %v1638
      %v1640 = vpop.f32.mrb[0].mxu0
      %v1641 = vadd.f32 0.0, %v1640
      %v1642 = vpop.f32.mrb[0].mxu0
      %v1643 = vadd.f32 0.0, %v1642
      %v1644 = vpop.f32.mrb[0].mxu0
      %v1645 = vadd.f32 0.0, %v1644
      %1646 = vmatprep.mubr.bf16.mxu0 0
      %1647 = vmatmul.mubr.bf16.gmra.mrb[0].mxu0 %v933
      %v1648 = vpop.f32.mrb[0].mxu0
      %v1649 = vadd.f32 0.0, %v1648
      %v1650 = vpop.f32.mrb[0].mxu0
      %v1651 = vadd.f32 0.0, %v1650
      %v1652 = vpop.f32.mrb[0].mxu0
      %v1653 = vadd.f32 0.0, %v1652
      %v1654 = vpop.f32.mrb[0].mxu0
      %v1655 = vadd.f32 0.0, %v1654
      %1656 = vdwg.mxu0
      %1657 = vmatprep.subr.bf16.mxu0 %v1197
      %1658 = vmatpush1.bf16.msra.mxu0 %v1196
      %1659 = vmatprep.subr.bf16.mxu0 %v1205
      %1660 = vmatpush1.bf16.msra.mxu0 %v1204
      %1661 = vmatprep.subr.bf16.mxu0 %v1213
      %1662 = vmatpush1.bf16.msra.mxu0 %v1212
      %1663 = vmatprep.subr.bf16.mxu0 %v1221
      %1664 = vmatpush1.bf16.msra.mxu0 %v1220
      %1665 = vmatprep.subr.bf16.mxu0 %v1229
      %1666 = vmatpush1.bf16.msra.mxu0 %v1228
      %1667 = vmatprep.subr.bf16.mxu0 %v1237
      %1668 = vmatpush1.bf16.msra.mxu0 %v1236
      %1669 = vmatprep.subr.bf16.mxu0 %v1245
      %1670 = vmatpush1.bf16.msra.mxu0 %v1244
      %1671 = vmatprep.subr.bf16.mxu0 %v1253
      %1672 = vmatpush1.bf16.msra.mxu0 %v1252
      %1673 = vmatprep.subr.bf16.mxu0 0
      %1674 = vmatpush1.bf16.msra.mxu0 0
      %1675 = vmatprep.subr.bf16.mxu0 0
      %1676 = vmatpush1.bf16.msra.mxu0 0
      %1677 = vmatprep.subr.bf16.mxu0 0
      %1678 = vmatpush1.bf16.msra.mxu0 0
      %1679 = vmatprep.subr.bf16.mxu0 0
      %1680 = vmatpush1.bf16.msra.mxu0 0
      %1681 = vmatprep.subr.bf16.mxu0 0
      %1682 = vmatpush1.bf16.msra.mxu0 0
      %1683 = vmatprep.subr.bf16.mxu0 0
      %1684 = vmatpush1.bf16.msra.mxu0 0
      %1685 = vmatprep.subr.bf16.mxu0 0
      %1686 = vmatpush1.bf16.msra.mxu0 0
      %1687 = vmatprep.subr.bf16.mxu0 0
      %1688 = vmatpush1.bf16.msra.mxu0 0
      %1689 = vmatprep.mubr.bf16.mxu0 0
      %1690 = vmatmul.mubr.bf16.gmra.mrb[0].mxu0 %v926
      %v1691 = vpop.f32.mrb[0].mxu0
      %v1692 = vadd.f32 0.0, %v1691
      %v1693 = vpop.f32.mrb[0].mxu0
      %v1694 = vadd.f32 0.0, %v1693
      %v1695 = vpop.f32.mrb[0].mxu0
      %v1696 = vadd.f32 0.0, %v1695
      %v1697 = vpop.f32.mrb[0].mxu0
      %v1698 = vadd.f32 0.0, %v1697
      %1699 = vmatprep.mubr.bf16.mxu0 0
      %1700 = vmatmul.mubr.bf16.gmra.mrb[0].mxu0 %v927
      %v1701 = vpop.f32.mrb[0].mxu0
      %v1702 = vadd.f32 0.0, %v1701
      %v1703 = vpop.f32.mrb[0].mxu0
      %v1704 = vadd.f32 0.0, %v1703
      %v1705 = vpop.f32.mrb[0].mxu0
      %v1706 = vadd.f32 0.0, %v1705
      %v1707 = vpop.f32.mrb[0].mxu0
      %v1708 = vadd.f32 0.0, %v1707
      %1709 = vmatprep.mubr.bf16.mxu0 0
      %1710 = vmatmul.mubr.bf16.gmra.mrb[0].mxu0 %v928
      %v1711 = vpop.f32.mrb[0].mxu0
      %v1712 = vadd.f32 0.0, %v1711
      %v1713 = vpop.f32.mrb[0].mxu0
      %v1714 = vadd.f32 0.0, %v1713
      %v1715 = vpop.f32.mrb[0].mxu0
      %v1716 = vadd.f32 0.0, %v1715
      %v1717 = vpop.f32.mrb[0].mxu0
      %v1718 = vadd.f32 0.0, %v1717
      %1719 = vmatprep.mubr.bf16.mxu0 0
      %1720 = vmatmul.mubr.bf16.gmra.mrb[0].mxu0 %v929
      %v1721 = vpop.f32.mrb[0].mxu0
      %v1722 = vadd.f32 0.0, %v1721
      %v1723 = vpop.f32.mrb[0].mxu0
      %v1724 = vadd.f32 0.0, %v1723
      %v1725 = vpop.f32.mrb[0].mxu0
      %v1726 = vadd.f32 0.0, %v1725
      %v1727 = vpop.f32.mrb[0].mxu0
      %v1728 = vadd.f32 0.0, %v1727
      %1729 = vmatprep.mubr.bf16.mxu0 0
      %1730 = vmatmul.mubr.bf16.gmra.mrb[0].mxu0 %v930
      %v1731 = vpop.f32.mrb[0].mxu0
      %v1732 = vadd.f32 0.0, %v1731
      %v1733 = vpop.f32.mrb[0].mxu0
      %v1734 = vadd.f32 0.0, %v1733
      %v1735 = vpop.f32.mrb[0].mxu0
      %v1736 = vadd.f32 0.0, %v1735
      %v1737 = vpop.f32.mrb[0].mxu0
      %v1738 = vadd.f32 0.0, %v1737
      %1739 = vmatprep.mubr.bf16.mxu0 0
      %1740 = vmatmul.mubr.bf16.gmra.mrb[0].mxu0 %v931
      %v1741 = vpop.f32.mrb[0].mxu0
      %v1742 = vadd.f32 0.0, %v1741
      %v1743 = vpop.f32.mrb[0].mxu0
      %v1744 = vadd.f32 0.0, %v1743
      %v1745 = vpop.f32.mrb[0].mxu0
      %v1746 = vadd.f32 0.0, %v1745
      %v1747 = vpop.f32.mrb[0].mxu0
      %v1748 = vadd.f32 0.0, %v1747
      %1749 = vmatprep.mubr.bf16.mxu0 0
      %1750 = vmatmul.mubr.bf16.gmra.mrb[0].mxu0 %v932
      %v1751 = vpop.f32.mrb[0].mxu0
      %v1752 = vadd.f32 0.0, %v1751
      %v1753 = vpop.f32.mrb[0].mxu0
      %v1754 = vadd.f32 0.0, %v1753
      %v1755 = vpop.f32.mrb[0].mxu0
      %v1756 = vadd.f32 0.0, %v1755
      %v1757 = vpop.f32.mrb[0].mxu0
      %v1758 = vadd.f32 0.0, %v1757
      %1759 = vmatprep.mubr.bf16.mxu0 0
      %1760 = vmatmul.mubr.bf16.gmra.mrb[0].mxu0 %v933
      %v1761 = vpop.f32.mrb[0].mxu0
      %v1762 = vadd.f32 0.0, %v1761
      %v1763 = vpop.f32.mrb[0].mxu0
      %v1764 = vadd.f32 0.0, %v1763
      %v1765 = vpop.f32.mrb[0].mxu0
      %v1766 = vadd.f32 0.0, %v1765
      %v1767 = vpop.f32.mrb[0].mxu0
      %v1768 = vadd.f32 0.0, %v1767
      %1769 = vdwg.mxu0
      %v1770 = vld [vmem:[%s344] sm:$0xff]
      %v1771 = vmax.f32 %v1353, %v1357
      %v1772 = vmax.f32 %v1771, %v1363
      %v1773 = vmax.f32 %v1772, %v1367
      %v1774 = vmax.f32 %v1773, %v1373
      %v1775 = vmax.f32 %v1774, %v1377
      %v1776 = vmax.f32 %v1775, %v1383
      %v1777 = vmax.f32 %v1776, %v1387
      %v1778 = vmax.f32 %v1777, %v1393
      %v1779 = vmax.f32 %v1778, %v1397
      %v1780 = vmax.f32 %v1779, %v1403
      %v1781 = vmax.f32 %v1780, %v1407
      %v1782 = vmax.f32 %v1781, %v1413
      %v1783 = vmax.f32 %v1782, %v1417
      %v1784 = vmax.f32 %v1783, %v1423
      %v1785 = vmax.f32 %v1784, %v1427
      %v1786 = vrot.slane %v1785, 4
      %v1787 = vmax.f32 %v1785, %v1786
      %v1788 = vrot.slane %v1787, 2
      %v1789 = vmax.f32 %v1787, %v1788
      %v1790 = vrot.slane %v1789, 1
      %v1791 = vmax.f32 %v1789, %v1790
      %v1792 = vmax.f32 %v1355, %v1359
      %v1793 = vmax.f32 %v1792, %v1365
      %v1794 = vmax.f32 %v1793, %v1369
      %v1795 = vmax.f32 %v1794, %v1375
      %v1796 = vmax.f32 %v1795, %v1379
      %v1797 = vmax.f32 %v1796, %v1385
      %v1798 = vmax.f32 %v1797, %v1389
      %v1799 = vmax.f32 %v1798, %v1395
      %v1800 = vmax.f32 %v1799, %v1399
      %v1801 = vmax.f32 %v1800, %v1405
      %v1802 = vmax.f32 %v1801, %v1409
      %v1803 = vmax.f32 %v1802, %v1415
      %v1804 = vmax.f32 %v1803, %v1419
      %v1805 = vmax.f32 %v1804, %v1425
      %v1806 = vmax.f32 %v1805, %v1429
      %v1807 = vrot.slane %v1806, 4
      %v1808 = vmax.f32 %v1806, %v1807
      %v1809 = vrot.slane %v1808, 2
      %v1810 = vmax.f32 %v1808, %v1809
      %v1811 = vrot.slane %v1810, 1
      %v1812 = vmax.f32 %v1810, %v1811
      %v1813 = vmax.f32 %v1466, %v1470
      %v1814 = vmax.f32 %v1813, %v1476
      %v1815 = vmax.f32 %v1814, %v1480
      %v1816 = vmax.f32 %v1815, %v1486
      %v1817 = vmax.f32 %v1816, %v1490
      %v1818 = vmax.f32 %v1817, %v1496
      %v1819 = vmax.f32 %v1818, %v1500
      %v1820 = vmax.f32 %v1819, %v1506
      %v1821 = vmax.f32 %v1820, %v1510
      %v1822 = vmax.f32 %v1821, %v1516
      %v1823 = vmax.f32 %v1822, %v1520
      %v1824 = vmax.f32 %v1823, %v1526
      %v1825 = vmax.f32 %v1824, %v1530
      %v1826 = vmax.f32 %v1825, %v1536
      %v1827 = vmax.f32 %v1826, %v1540
      %v1828 = vrot.slane %v1827, 4
      %v1829 = vmax.f32 %v1827, %v1828
      %v1830 = vrot.slane %v1829, 2
      %v1831 = vmax.f32 %v1829, %v1830
      %v1832 = vrot.slane %v1831, 1
      %v1833 = vmax.f32 %v1831, %v1832
      %v1834 = vmax.f32 %v1468, %v1472
      %v1835 = vmax.f32 %v1834, %v1478
      %v1836 = vmax.f32 %v1835, %v1482
      %v1837 = vmax.f32 %v1836, %v1488
      %v1838 = vmax.f32 %v1837, %v1492
      %v1839 = vmax.f32 %v1838, %v1498
      %v1840 = vmax.f32 %v1839, %v1502
      %v1841 = vmax.f32 %v1840, %v1508
      %v1842 = vmax.f32 %v1841, %v1512
      %v1843 = vmax.f32 %v1842, %v1518
      %v1844 = vmax.f32 %v1843, %v1522
      %v1845 = vmax.f32 %v1844, %v1528
      %v1846 = vmax.f32 %v1845, %v1532
      %v1847 = vmax.f32 %v1846, %v1538
      %v1848 = vmax.f32 %v1847, %v1542
      %v1849 = vrot.slane %v1848, 4
      %v1850 = vmax.f32 %v1848, %v1849
      %v1851 = vrot.slane %v1850, 2
      %v1852 = vmax.f32 %v1850, %v1851
      %v1853 = vrot.slane %v1852, 1
      %v1854 = vmax.f32 %v1852, %v1853
      %v1855 = vmax.f32 %v1579, %v1583
      %v1856 = vmax.f32 %v1855, %v1589
      %v1857 = vmax.f32 %v1856, %v1593
      %v1858 = vmax.f32 %v1857, %v1599
      %v1859 = vmax.f32 %v1858, %v1603
      %v1860 = vmax.f32 %v1859, %v1609
      %v1861 = vmax.f32 %v1860, %v1613
      %v1862 = vmax.f32 %v1861, %v1619
      %v1863 = vmax.f32 %v1862, %v1623
      %v1864 = vmax.f32 %v1863, %v1629
      %v1865 = vmax.f32 %v1864, %v1633
      %v1866 = vmax.f32 %v1865, %v1639
      %v1867 = vmax.f32 %v1866, %v1643
      %v1868 = vmax.f32 %v1867, %v1649
      %v1869 = vmax.f32 %v1868, %v1653
      %v1870 = vrot.slane %v1869, 4
      %v1871 = vmax.f32 %v1869, %v1870
      %v1872 = vrot.slane %v1871, 2
      %v1873 = vmax.f32 %v1871, %v1872
      %v1874 = vrot.slane %v1873, 1
      %v1875 = vmax.f32 %v1873, %v1874
      %v1876 = vmax.f32 %v1581, %v1585
      %v1877 = vmax.f32 %v1876, %v1591
      %v1878 = vmax.f32 %v1877, %v1595
      %v1879 = vmax.f32 %v1878, %v1601
      %v1880 = vmax.f32 %v1879, %v1605
      %v1881 = vmax.f32 %v1880, %v1611
      %v1882 = vmax.f32 %v1881, %v1615
      %v1883 = vmax.f32 %v1882, %v1621
      %v1884 = vmax.f32 %v1883, %v1625
      %v1885 = vmax.f32 %v1884, %v1631
      %v1886 = vmax.f32 %v1885, %v1635
      %v1887 = vmax.f32 %v1886, %v1641
      %v1888 = vmax.f32 %v1887, %v1645
      %v1889 = vmax.f32 %v1888, %v1651
      %v1890 = vmax.f32 %v1889, %v1655
      %v1891 = vrot.slane %v1890, 4
      %v1892 = vmax.f32 %v1890, %v1891
      %v1893 = vrot.slane %v1892, 2
      %v1894 = vmax.f32 %v1892, %v1893
      %v1895 = vrot.slane %v1894, 1
      %v1896 = vmax.f32 %v1894, %v1895
      %v1897 = vmax.f32 %v1692, %v1696
      %v1898 = vmax.f32 %v1897, %v1702
      %v1899 = vmax.f32 %v1898, %v1706
      %v1900 = vmax.f32 %v1899, %v1712
      %v1901 = vmax.f32 %v1900, %v1716
      %v1902 = vmax.f32 %v1901, %v1722
      %v1903 = vmax.f32 %v1902, %v1726
      %v1904 = vmax.f32 %v1903, %v1732
      %v1905 = vmax.f32 %v1904, %v1736
      %v1906 = vmax.f32 %v1905, %v1742
      %v1907 = vmax.f32 %v1906, %v1746
      %v1908 = vmax.f32 %v1907, %v1752
      %v1909 = vmax.f32 %v1908, %v1756
      %v1910 = vmax.f32 %v1909, %v1762
      %v1911 = vmax.f32 %v1910, %v1766
      %v1912 = vrot.slane %v1911, 4
      %v1913 = vmax.f32 %v1911, %v1912
      %v1914 = vrot.slane %v1913, 2
      %v1915 = vmax.f32 %v1913, %v1914
      %v1916 = vrot.slane %v1915, 1
      %v1917 = vmax.f32 %v1915, %v1916
      %v1918 = vmax.f32 %v1694, %v1698
      %v1919 = vmax.f32 %v1918, %v1704
      %v1920 = vmax.f32 %v1919, %v1708
      %v1921 = vmax.f32 %v1920, %v1714
      %v1922 = vmax.f32 %v1921, %v1718
      %v1923 = vmax.f32 %v1922, %v1724
      %v1924 = vmax.f32 %v1923, %v1728
      %v1925 = vmax.f32 %v1924, %v1734
      %v1926 = vmax.f32 %v1925, %v1738
      %v1927 = vmax.f32 %v1926, %v1744
      %v1928 = vmax.f32 %v1927, %v1748
      %v1929 = vmax.f32 %v1928, %v1754
      %v1930 = vmax.f32 %v1929, %v1758
      %v1931 = vmax.f32 %v1930, %v1764
      %v1932 = vmax.f32 %v1931, %v1768
      %v1933 = vrot.slane %v1932, 4
      %v1934 = vmax.f32 %v1932, %v1933
      %v1935 = vrot.slane %v1934, 2
      %v1936 = vmax.f32 %v1934, %v1935
      %v1937 = vrot.slane %v1936, 1
      %v1938 = vmax.f32 %v1936, %v1937
      %v1947 = vcombine.low %v1791, %v1812
      %v1948 = vcombine.low %v1833, %v1854
      %v1949 = vcombine.low %v1875, %v1896
      %v1950 = vcombine.low %v1917, %v1938
      %v1952 = vunpack.c.l.s4 1966171168
      %v1953 = vunpack.c.0.s8 %v1952
      %v1954 = vlaneseq
      %v1955 = vshrl.u32 %v1954, 7
      %v1956 = vsub.s32 %v1953, %v1955
      %v1957 = vrot.slane %v1947, %v1956
      %v1959 = vunpack.c.l.s4 1966171168
      %v1960 = vunpack.c.0.s8 %v1959
      %v1961 = vlaneseq
      %v1962 = vshrl.u32 %v1961, 7
      %v1963 = vsub.s32 %v1960, %v1962
      %v1964 = vrot.slane %v1948, %v1963
      %v1966 = vunpack.c.l.s4 1966171168
      %v1967 = vunpack.c.0.s8 %v1966
      %v1968 = vlaneseq
      %v1969 = vshrl.u32 %v1968, 7
      %v1970 = vsub.s32 %v1967, %v1969
      %v1971 = vrot.slane %v1949, %v1970
      %v1973 = vunpack.c.l.s4 1966171168
      %v1974 = vunpack.c.0.s8 %v1973
      %v1975 = vlaneseq
      %v1976 = vshrl.u32 %v1975, 7
      %v1977 = vsub.s32 %v1974, %v1976
      %v1978 = vrot.slane %v1950, %v1977
      %v1979 = vcombine.low %v1957, %v1964
      %v1980 = vcombine.low %v1971, %v1978
      %v1982 = vunpack.c.l.s4 1966171168
      %v1983 = vunpack.c.0.s8 %v1982
      %v1984 = vlaneseq
      %v1985 = vshrl.u32 %v1984, 7
      %v1986 = vsub.s32 %v1983, %v1985
      %v1987 = vrot.slane %v1979, %v1986
      %v1989 = vunpack.c.l.s4 1966171168
      %v1990 = vunpack.c.0.s8 %v1989
      %v1991 = vlaneseq
      %v1992 = vshrl.u32 %v1991, 7
      %v1993 = vsub.s32 %v1990, %v1992
      %v1994 = vrot.slane %v1980, %v1993
      %v1995 = vcombine.low %v1987, %v1994
      %v1997 = vmax.f32 %v1770, %v1995
      %1998 = vst [vmem:[%s344] sm:$0xff] %v1997
      %v1999 = vlaneseq
      %v2000 = vshrl.u32 %v1999, 7
      %v2001 = vadd.s32 %v2000, 8
      %v2002 = vadd.s32 %v2000, 16
      %v2003 = vadd.s32 %v2000, 24
      %v2004 = vadd.s32 %v2000, 32
      %v2005 = vadd.s32 %v2000, 40
      %v2006 = vadd.s32 %v2000, 48
      %v2007 = vadd.s32 %v2000, 56
      %v2008 = vadd.s32 %v2000, 64
      %v2009 = vadd.s32 %v2000, 72
      %v2010 = vadd.s32 %v2000, 80
      %v2011 = vadd.s32 %v2000, 88
      %v2012 = vadd.s32 %v2000, 96
      %v2013 = vadd.s32 %v2000, 104
      %v2014 = vadd.s32 %v2000, 112
      %v2015 = vadd.s32 %v2000, 120
      %s2016 = smul.u32 %s25, 128
      %v2017 = vstv %s2016
      %v2018 = vadd.s32 %v2000, %v2017
      %v2019 = vadd.s32 %v2001, %v2017
      %v2020 = vadd.s32 %v2002, %v2017
      %v2021 = vadd.s32 %v2003, %v2017
      %v2022 = vadd.s32 %v2004, %v2017
      %v2023 = vadd.s32 %v2005, %v2017
      %v2024 = vadd.s32 %v2006, %v2017
      %v2025 = vadd.s32 %v2007, %v2017
      %v2026 = vadd.s32 %v2008, %v2017
      %v2027 = vadd.s32 %v2009, %v2017
      %v2028 = vadd.s32 %v2010, %v2017
      %v2029 = vadd.s32 %v2011, %v2017
      %v2030 = vadd.s32 %v2012, %v2017
      %v2031 = vadd.s32 %v2013, %v2017
      %v2032 = vadd.s32 %v2014, %v2017
      %v2033 = vadd.s32 %v2015, %v2017
      %vm2034 = vcmp.lt.s32.totalorder %v2018, 16
      %vm2035 = vcmp.lt.s32.totalorder %v2019, 16
      %vm2036 = vcmp.lt.s32.totalorder %v2020, 16
      %vm2037 = vcmp.lt.s32.totalorder %v2021, 16
      %vm2038 = vcmp.lt.s32.totalorder %v2022, 16
      %vm2039 = vcmp.lt.s32.totalorder %v2023, 16
      %vm2040 = vcmp.lt.s32.totalorder %v2024, 16
      %vm2041 = vcmp.lt.s32.totalorder %v2025, 16
      %vm2042 = vcmp.lt.s32.totalorder %v2026, 16
      %vm2043 = vcmp.lt.s32.totalorder %v2027, 16
      %vm2044 = vcmp.lt.s32.totalorder %v2028, 16
      %vm2045 = vcmp.lt.s32.totalorder %v2029, 16
      %vm2046 = vcmp.lt.s32.totalorder %v2030, 16
      %vm2047 = vcmp.lt.s32.totalorder %v2031, 16
      %vm2048 = vcmp.lt.s32.totalorder %v2032, 16
      %vm2049 = vcmp.lt.s32.totalorder %v2033, 16
      %v2050 = vsel %vm2034, 1, 0
      %v2051 = vsel %vm2035, 1, 0
      %v2052 = vsel %vm2036, 1, 0
      %v2053 = vsel %vm2037, 1, 0
      %v2054 = vsel %vm2038, 1, 0
      %v2055 = vsel %vm2039, 1, 0
      %v2056 = vsel %vm2040, 1, 0
      %v2057 = vsel %vm2041, 1, 0
      %v2058 = vsel %vm2042, 1, 0
      %v2059 = vsel %vm2043, 1, 0
      %v2060 = vsel %vm2044, 1, 0
      %v2061 = vsel %vm2045, 1, 0
      %v2062 = vsel %vm2046, 1, 0
      %v2063 = vsel %vm2047, 1, 0
      %v2064 = vsel %vm2048, 1, 0
      %v2065 = vsel %vm2049, 1, 0
      %v2066 = vcvt.s32.f32 %v2050
      %v2067 = vcvt.s32.f32 %v2051
      %v2068 = vcvt.s32.f32 %v2052
      %v2069 = vcvt.s32.f32 %v2053
      %v2070 = vcvt.s32.f32 %v2054
      %v2071 = vcvt.s32.f32 %v2055
      %v2072 = vcvt.s32.f32 %v2056
      %v2073 = vcvt.s32.f32 %v2057
      %v2074 = vcvt.s32.f32 %v2058
      %v2075 = vcvt.s32.f32 %v2059
      %v2076 = vcvt.s32.f32 %v2060
      %v2077 = vcvt.s32.f32 %v2061
      %v2078 = vcvt.s32.f32 %v2062
      %v2079 = vcvt.s32.f32 %v2063
      %v2080 = vcvt.s32.f32 %v2064
      %v2081 = vcvt.s32.f32 %v2065
      %v2082 = vmul.f32 %v910, %v2066
      %v2083 = vmul.f32 %v911, %v2067
      %v2084 = vmul.f32 %v912, %v2068
      %v2085 = vmul.f32 %v913, %v2069
      %v2086 = vmul.f32 %v914, %v2070
      %v2087 = vmul.f32 %v915, %v2071
      %v2088 = vmul.f32 %v916, %v2072
      %v2089 = vmul.f32 %v917, %v2073
      %v2090 = vmul.f32 %v918, %v2074
      %v2091 = vmul.f32 %v919, %v2075
      %v2092 = vmul.f32 %v920, %v2076
      %v2093 = vmul.f32 %v921, %v2077
      %v2094 = vmul.f32 %v922, %v2078
      %v2095 = vmul.f32 %v923, %v2079
      %v2096 = vmul.f32 %v924, %v2080
      %v2097 = vmul.f32 %v925, %v2081
      %v2098 = vld [vmem:[%s335] sm:$0x1]
      %v2099 = vadd.f32 %v2082, %v2083
      %v2100 = vadd.f32 %v2099, %v2084
      %v2101 = vadd.f32 %v2100, %v2085
      %v2102 = vadd.f32 %v2101, %v2086
      %v2103 = vadd.f32 %v2102, %v2087
      %v2104 = vadd.f32 %v2103, %v2088
      %v2105 = vadd.f32 %v2104, %v2089
      %v2106 = vadd.f32 %v2105, %v2090
      %v2107 = vadd.f32 %v2106, %v2091
      %v2108 = vadd.f32 %v2107, %v2092
      %v2109 = vadd.f32 %v2108, %v2093
      %v2110 = vadd.f32 %v2109, %v2094
      %v2111 = vadd.f32 %v2110, %v2095
      %v2112 = vadd.f32 %v2111, %v2096
      %v2113 = vadd.f32 %v2112, %v2097
      %v2114 = vrot.slane %v2113, 4
      %v2115 = vadd.f32 %v2113, %v2114
      %v2116 = vrot.slane %v2115, 2
      %v2117 = vadd.f32 %v2115, %v2116
      %v2118 = vrot.slane %v2117, 1
      %v2119 = vadd.f32 %v2117, %v2118
      %v2120 = vadd.f32 %v2098, %v2119
      %2121 = vst [vmem:[%s335] sm:$0x1] %v2120
      %v2122 = vld [vmem:[%s340] sm:$0xff]
      %v2123 = vld [vmem:[%s340 + $0x8] sm:$0xff]
      %v2124 = vld [vmem:[%s340 + $0x10] sm:$0xff]
      %v2125 = vld [vmem:[%s340 + $0x18] sm:$0xff]
      %v2126 = vld [vmem:[%s340 + $0x20] sm:$0xff]
      %v2127 = vld [vmem:[%s340 + $0x28] sm:$0xff]
      %v2128 = vld [vmem:[%s340 + $0x30] sm:$0xff]
      %v2129 = vld [vmem:[%s340 + $0x38] sm:$0xff]
      %v2130 = vld [vmem:[%s340 + $0x40] sm:$0xff]
      %v2131 = vld [vmem:[%s340 + $0x48] sm:$0xff]
      %v2132 = vld [vmem:[%s340 + $0x50] sm:$0xff]
      %v2133 = vld [vmem:[%s340 + $0x58] sm:$0xff]
      %v2134 = vld [vmem:[%s340 + $0x60] sm:$0xff]
      %v2135 = vld [vmem:[%s340 + $0x68] sm:$0xff]
      %v2136 = vld [vmem:[%s340 + $0x70] sm:$0xff]
      %v2137 = vld [vmem:[%s340 + $0x78] sm:$0xff]
      %2138 = vxpose.xlu0.b32.start [1/16] %v2082, 128
      %2139 = vxpose.xlu0.b32.cont [2/16] %v2083, 128
      %2140 = vxpose.xlu0.b32.cont [3/16] %v2084, 128
      %2141 = vxpose.xlu0.b32.cont [4/16] %v2085, 128
      %2142 = vxpose.xlu0.b32.cont [5/16] %v2086, 128
      %2143 = vxpose.xlu0.b32.cont [6/16] %v2087, 128
      %2144 = vxpose.xlu0.b32.cont [7/16] %v2088, 128
      %2145 = vxpose.xlu0.b32.cont [8/16] %v2089, 128
      %2146 = vxpose.xlu0.b32.cont [9/16] %v2090, 128
      %2147 = vxpose.xlu0.b32.cont [10/16] %v2091, 128
      %2148 = vxpose.xlu0.b32.cont [11/16] %v2092, 128
      %2149 = vxpose.xlu0.b32.cont [12/16] %v2093, 128
      %2150 = vxpose.xlu0.b32.cont [13/16] %v2094, 128
      %2151 = vxpose.xlu0.b32.cont [14/16] %v2095, 128
      %2152 = vxpose.xlu0.b32.cont [15/16] %v2096, 128
      %2153 = vxpose.xlu0.b32.end [16/16] %v2097, 128
      %v2154 = vpop.trf.xlu0
      %v2155 = vpop.trf.xlu0
      %v2156 = vpop.trf.xlu0
      %v2157 = vpop.trf.xlu0
      %v2158 = vpop.trf.xlu0
      %v2159 = vpop.trf.xlu0
      %v2160 = vpop.trf.xlu0
      %v2161 = vpop.trf.xlu0
      %v2162 = vpop.trf.xlu0
      %v2163 = vpop.trf.xlu0
      %v2164 = vpop.trf.xlu0
      %v2165 = vpop.trf.xlu0
      %v2166 = vpop.trf.xlu0
      %v2167 = vpop.trf.xlu0
      %v2168 = vpop.trf.xlu0
      %v2169 = vpop.trf.xlu0
      %v2170 = vpack.c.bf16 %v2155, %v2154
      %v2171 = vpack.c.bf16 %v2157, %v2156
      %v2172 = vpack.c.bf16 %v2159, %v2158
      %v2173 = vpack.c.bf16 %v2161, %v2160
      %v2174 = vpack.c.bf16 %v2163, %v2162
      %v2175 = vpack.c.bf16 %v2165, %v2164
      %v2176 = vpack.c.bf16 %v2167, %v2166
      %v2177 = vpack.c.bf16 %v2169, %v2168
      %v2178 = vpack.c.bf16 %v2083, %v2082
      %v2179 = vpack.c.bf16 %v2085, %v2084
      %v2180 = vpack.c.bf16 %v2087, %v2086
      %v2181 = vpack.c.bf16 %v2089, %v2088
      %v2182 = vpack.c.bf16 %v2091, %v2090
      %v2183 = vpack.c.bf16 %v2093, %v2092
      %v2184 = vpack.c.bf16 %v2095, %v2094
      %v2185 = vpack.c.bf16 %v2097, %v2096
      %2186 = vmatprep.subr.bf16.mxu0 0
      %2187 = vmatpush1.bf16.msra.mxu0 %v2178
      %2188 = vmatprep.subr.bf16.mxu0 0
      %2189 = vmatpush1.bf16.msra.mxu0 %v2179
      %2190 = vmatprep.subr.bf16.mxu0 0
      %2191 = vmatpush1.bf16.msra.mxu0 %v2180
      %2192 = vmatprep.subr.bf16.mxu0 0
      %2193 = vmatpush1.bf16.msra.mxu0 %v2181
      %2194 = vmatprep.subr.bf16.mxu0 0
      %2195 = vmatpush1.bf16.msra.mxu0 %v2182
      %2196 = vmatprep.subr.bf16.mxu0 0
      %2197 = vmatpush1.bf16.msra.mxu0 %v2183
      %2198 = vmatprep.subr.bf16.mxu0 0
      %2199 = vmatpush1.bf16.msra.mxu0 %v2184
      %2200 = vmatprep.subr.bf16.mxu0 0
      %2201 = vmatpush1.bf16.msra.mxu0 %v2185
      %2202 = vmatprep.subr.bf16.mxu0 0
      %2203 = vmatpush1.bf16.msra.mxu0 0
      %2204 = vmatprep.subr.bf16.mxu0 0
      %2205 = vmatpush1.bf16.msra.mxu0 0
      %2206 = vmatprep.subr.bf16.mxu0 0
      %2207 = vmatpush1.bf16.msra.mxu0 0
      %2208 = vmatprep.subr.bf16.mxu0 0
      %2209 = vmatpush1.bf16.msra.mxu0 0
      %2210 = vmatprep.subr.bf16.mxu0 0
      %2211 = vmatpush1.bf16.msra.mxu0 0
      %2212 = vmatprep.subr.bf16.mxu0 0
      %2213 = vmatpush1.bf16.msra.mxu0 0
      %2214 = vmatprep.subr.bf16.mxu0 0
      %2215 = vmatpush1.bf16.msra.mxu0 0
      %2216 = vmatprep.subr.bf16.mxu0 0
      %2217 = vmatpush1.bf16.msra.mxu0 0
      %2218 = vmatprep.mubr.bf16.mxu0 0
      %2219 = vmatmul.mubr.bf16.gmra.mrb[0].mxu0 %v2170
      %v2220 = vpop.f32.mrb[0].mxu0
      %v2221 = vadd.f32 0.0, %v2220
      %v2222 = vpop.f32.mrb[0].mxu0
      %v2223 = vpop.f32.mrb[0].mxu0
      %v2224 = vadd.f32 0.0, %v2223
      %v2225 = vpop.f32.mrb[0].mxu0
      %2226 = vmatprep.mubr.bf16.mxu0 0
      %2227 = vmatmul.mubr.bf16.gmra.mrb[0].mxu0 %v2171
      %v2228 = vpop.f32.mrb[0].mxu0
      %v2229 = vadd.f32 0.0, %v2228
      %v2230 = vpop.f32.mrb[0].mxu0
      %v2231 = vpop.f32.mrb[0].mxu0
      %v2232 = vadd.f32 0.0, %v2231
      %v2233 = vpop.f32.mrb[0].mxu0
      %2234 = vmatprep.mubr.bf16.mxu0 0
      %2235 = vmatmul.mubr.bf16.gmra.mrb[0].mxu0 %v2172
      %v2236 = vpop.f32.mrb[0].mxu0
      %v2237 = vadd.f32 0.0, %v2236
      %v2238 = vpop.f32.mrb[0].mxu0
      %v2239 = vpop.f32.mrb[0].mxu0
      %v2240 = vadd.f32 0.0, %v2239
      %v2241 = vpop.f32.mrb[0].mxu0
      %2242 = vmatprep.mubr.bf16.mxu0 0
      %2243 = vmatmul.mubr.bf16.gmra.mrb[0].mxu0 %v2173
      %v2244 = vpop.f32.mrb[0].mxu0
      %v2245 = vadd.f32 0.0, %v2244
      %v2246 = vpop.f32.mrb[0].mxu0
      %v2247 = vpop.f32.mrb[0].mxu0
      %v2248 = vadd.f32 0.0, %v2247
      %v2249 = vpop.f32.mrb[0].mxu0
      %2250 = vmatprep.mubr.bf16.mxu0 0
      %2251 = vmatmul.mubr.bf16.gmra.mrb[0].mxu0 %v2174
      %v2252 = vpop.f32.mrb[0].mxu0
      %v2253 = vadd.f32 0.0, %v2252
      %v2254 = vpop.f32.mrb[0].mxu0
      %v2255 = vpop.f32.mrb[0].mxu0
      %v2256 = vadd.f32 0.0, %v2255
      %v2257 = vpop.f32.mrb[0].mxu0
      %2258 = vmatprep.mubr.bf16.mxu0 0
      %2259 = vmatmul.mubr.bf16.gmra.mrb[0].mxu0 %v2175
      %v2260 = vpop.f32.mrb[0].mxu0
      %v2261 = vadd.f32 0.0, %v2260
      %v2262 = vpop.f32.mrb[0].mxu0
      %v2263 = vpop.f32.mrb[0].mxu0
      %v2264 = vadd.f32 0.0, %v2263
      %v2265 = vpop.f32.mrb[0].mxu0
      %2266 = vmatprep.mubr.bf16.mxu0 0
      %2267 = vmatmul.mubr.bf16.gmra.mrb[0].mxu0 %v2176
      %v2268 = vpop.f32.mrb[0].mxu0
      %v2269 = vadd.f32 0.0, %v2268
      %v2270 = vpop.f32.mrb[0].mxu0
      %v2271 = vpop.f32.mrb[0].mxu0
      %v2272 = vadd.f32 0.0, %v2271
      %v2273 = vpop.f32.mrb[0].mxu0
      %2274 = vmatprep.mubr.bf16.mxu0 0
      %2275 = vmatmul.mubr.bf16.gmra.mrb[0].mxu0 %v2177
      %v2276 = vpop.f32.mrb[0].mxu0
      %v2277 = vadd.f32 0.0, %v2276
      %v2278 = vpop.f32.mrb[0].mxu0
      %v2279 = vpop.f32.mrb[0].mxu0
      %v2280 = vadd.f32 0.0, %v2279
      %v2281 = vpop.f32.mrb[0].mxu0
      %2282 = vdwg.mxu0
      %v2283 = vadd.f32 %v2122, %v2221
      %v2284 = vadd.f32 %v2123, %v2224
      %v2285 = vadd.f32 %v2124, %v2229
      %v2286 = vadd.f32 %v2125, %v2232
      %v2287 = vadd.f32 %v2126, %v2237
      %v2288 = vadd.f32 %v2127, %v2240
      %v2289 = vadd.f32 %v2128, %v2245
      %v2290 = vadd.f32 %v2129, %v2248
      %v2291 = vadd.f32 %v2130, %v2253
      %v2292 = vadd.f32 %v2131, %v2256
      %v2293 = vadd.f32 %v2132, %v2261
      %v2294 = vadd.f32 %v2133, %v2264
      %v2295 = vadd.f32 %v2134, %v2269
      %v2296 = vadd.f32 %v2135, %v2272
      %v2297 = vadd.f32 %v2136, %v2277
      %v2298 = vadd.f32 %v2137, %v2280
      %2299 = vst [vmem:[%s340] sm:$0xff] %v2283
      %2300 = vst [vmem:[%s340 + $0x8] sm:$0xff] %v2284
      %2301 = vst [vmem:[%s340 + $0x10] sm:$0xff] %v2285
      %2302 = vst [vmem:[%s340 + $0x18] sm:$0xff] %v2286
      %2303 = vst [vmem:[%s340 + $0x20] sm:$0xff] %v2287
      %2304 = vst [vmem:[%s340 + $0x28] sm:$0xff] %v2288
      %2305 = vst [vmem:[%s340 + $0x30] sm:$0xff] %v2289
      %2306 = vst [vmem:[%s340 + $0x38] sm:$0xff] %v2290
      %2307 = vst [vmem:[%s340 + $0x40] sm:$0xff] %v2291
      %2308 = vst [vmem:[%s340 + $0x48] sm:$0xff] %v2292
      %2309 = vst [vmem:[%s340 + $0x50] sm:$0xff] %v2293
      %2310 = vst [vmem:[%s340 + $0x58] sm:$0xff] %v2294
      %2311 = vst [vmem:[%s340 + $0x60] sm:$0xff] %v2295
      %2312 = vst [vmem:[%s340 + $0x68] sm:$0xff] %v2296
      %2313 = vst [vmem:[%s340 + $0x70] sm:$0xff] %v2297
      %2314 = vst [vmem:[%s340 + $0x78] sm:$0xff] %v2298
      %p2315 = scmp.lt.s32.totalorder %s24, 1
      %s2316 = scalar_select %p2315, %s24, 1
      %s2317 = scalar_lea.vmem %s6, %s2316
      %p2318 = scmp.lt.s32.totalorder %s24, 1
      %s2319 = scalar_select %p2318, %s24, 1
      %s2320 = smul.addr %s2319, 16
      %s2321 = smul.addr %s2320, 8
      %s2322 = scalar_lea.vmem %s7, %s2321
      %p2323 = scmp.lt.s32.totalorder %s24, 1
      %s2324 = scalar_select %p2323, %s24, 1
      %s2325 = smul.addr %s2324, 8
      %s2326 = scalar_lea.vmem %s8, %s2325
      // Predicated region
      $region49: #{stn3d_forward.4} parent=43 // pred_check
        %p2327 = pneg %p183
      $region50: #{stn3d_forward.4} parent=43 // pred_check_branch
        %2329 = sbr.rel (%p2327) target = $region52
      $region51: #{stn3d_forward.4} parent=43 // pred_region
        _
      $region52: #{stn3d_forward.4} parent=43 // pred_fallthru
        _
      // Predicated region
      $region53: #{stn3d_forward.4} parent=43 // pred_check
        %p2330 = pneg %p209
      $region54: #{stn3d_forward.4} parent=43 // pred_check_branch
        %2332 = sbr.rel (%p2330) target = $region56
      $region55: #{stn3d_forward.4} parent=43 // pred_region
        _
      $region56: #{stn3d_forward.4} parent=43 // pred_fallthru
        _
      // Predicated region
      $region57: #{stn3d_forward.4} parent=43 // pred_check
        %p2333 = pneg %p235
      $region58: #{stn3d_forward.4} parent=43 // pred_check_branch
        %2335 = sbr.rel (%p2333) target = $region60
      $region59: #{stn3d_forward.4} parent=43 // pred_region
        _
      $region60: #{stn3d_forward.4} parent=43 // pred_fallthru
        _
    $region44: #{stn3d_forward.4} parent=5 // pred_fallthru
      _
    %p2336 = scmp.le.s32.totalorder 2, %s15
    // Predicated region
    $region61: #{stn3d_forward.4} parent=5 // pred_check
      %p2337 = pneg %p2336
    $region62: #{stn3d_forward.4} parent=5 // pred_check_branch
      %2339 = sbr.rel (%p2337) target = $region64
    $region63: #{stn3d_forward.4} parent=5 // pred_region
      %s2340 = ssub.s32 %s15, 2
      // Predicated region
      $region65: #{stn3d_forward.4} parent=63 // pred_check
        %p2341 = pneg %p189
      $region66: #{stn3d_forward.4} parent=63 // pred_check_branch
        %2343 = sbr.rel (%p2341) target = $region68
      $region67: #{stn3d_forward.4} parent=63 // pred_region
        %p2344 = scmp.lt.s32.totalorder %s26, 1
        %s2345 = scalar_select %p2344, %s26, 1
        %s2346 = scalar_lea.vmem %s6, %s2345
      $region68: #{stn3d_forward.4} parent=63 // pred_fallthru
        _
      // Predicated region
      $region69: #{stn3d_forward.4} parent=63 // pred_check
        %p2347 = pneg %p215
      $region70: #{stn3d_forward.4} parent=63 // pred_check_branch
        %2349 = sbr.rel (%p2347) target = $region72
      $region71: #{stn3d_forward.4} parent=63 // pred_region
        %p2350 = scmp.lt.s32.totalorder %s26, 1
        %s2351 = scalar_select %p2350, %s26, 1
        %s2352 = smul.addr %s2351, 16
        %s2353 = smul.addr %s2352, 8
        %s2354 = scalar_lea.vmem %s7, %s2353
      $region72: #{stn3d_forward.4} parent=63 // pred_fallthru
        _
      // Predicated region
      $region73: #{stn3d_forward.4} parent=63 // pred_check
        %p2355 = pneg %p241
      $region74: #{stn3d_forward.4} parent=63 // pred_check_branch
        %2357 = sbr.rel (%p2355) target = $region76
      $region75: #{stn3d_forward.4} parent=63 // pred_region
        %p2358 = scmp.lt.s32.totalorder %s26, 1
        %s2359 = scalar_select %p2358, %s26, 1
        %s2360 = smul.addr %s2359, 8
        %s2361 = scalar_lea.vmem %s8, %s2360
      $region76: #{stn3d_forward.4} parent=63 // pred_fallthru
        _
    $region64: #{stn3d_forward.4} parent=5 // pred_fallthru
      _
  $region6: #{stn3d_forward.4} parent=0 // loop_footer
    %s19 = sadd.s32 1, %s15
  $region7: #{stn3d_forward.4} parent=0 // loop_footer_branch
    %14 = sbr.rel target = $region3
  $region8: #{stn3d_forward.4} parent=0 // loop_exit
    _

// kernel: stn3d_forward.5
$region0: #{stn3d_forward.5}
  #allocation0 [shape = 'u32[]', space=smem, size = 0x4, offset = 0x4, fixed_abs, tag = 'smem constant byte address 0x4 - core index']
  #allocation1 [shape = 'u32[144,128]{1,0:T(1,128)}', space=vmem, size = 0x12000, scoped, tag = 'internal scratch']
  %s0 = inlined_call_operand.vmem [shape: f32[2,1024], index: 0, kind: input, shape index: {}]
  %s1 = inlined_call_operand.vmem [shape: f32[2,1024], index: 1, kind: input, shape index: {}]
  %s2 = inlined_call_operand.vmem [shape: bf16[1024,512], index: 2, kind: input, shape index: {}]
  %s3 = inlined_call_operand.vmem [shape: f32[512,256], index: 3, kind: input, shape index: {}]
  %s4 = inlined_call_operand.vmem [shape: f32[256,128], index: 4, kind: input, shape index: {}]
  %s5 = inlined_call_operand.vmem [shape: f32[1,128], index: 5, kind: input, shape index: {}]
  %s6 = inlined_call_operand.vmem [shape: f32[2,128], index: 6, kind: output, shape index: {}]
  %s7 = sld [smem:[#allocation0]]
  $region34: #{stn3d_forward.5} parent=0
    _
  %s9 = ssub.s32 1, %s7
  %s10 = scalar_select 0, %s9, %s7
  // Predicated region
  $region2: #{stn3d_forward.5} parent=0 // pred_check
    _
  $region3: #{stn3d_forward.5} parent=0 // pred_check_branch
    %12 = sbr.rel (0) target = $region5
  $region4: #{stn3d_forward.5} parent=0 // pred_region
    _
  $region5: #{stn3d_forward.5} parent=0 // pred_fallthru
    _
  // Predicated region
  $region6: #{stn3d_forward.5} parent=0 // pred_check
    _
  $region7: #{stn3d_forward.5} parent=0 // pred_check_branch
    %14 = sbr.rel (0) target = $region9
  $region8: #{stn3d_forward.5} parent=0 // pred_region
    _
  $region9: #{stn3d_forward.5} parent=0 // pred_fallthru
    _
  // Predicated region
  $region10: #{stn3d_forward.5} parent=0 // pred_check
    _
  $region11: #{stn3d_forward.5} parent=0 // pred_check_branch
    %16 = sbr.rel (0) target = $region13
  $region12: #{stn3d_forward.5} parent=0 // pred_region
    _
  $region13: #{stn3d_forward.5} parent=0 // pred_fallthru
    _
  // Predicated region
  $region14: #{stn3d_forward.5} parent=0 // pred_check
    _
  $region15: #{stn3d_forward.5} parent=0 // pred_check_branch
    %18 = sbr.rel (0) target = $region17
  $region16: #{stn3d_forward.5} parent=0 // pred_region
    _
  $region17: #{stn3d_forward.5} parent=0 // pred_fallthru
    _
  // Predicated region
  $region18: #{stn3d_forward.5} parent=0 // pred_check
    _
  $region19: #{stn3d_forward.5} parent=0 // pred_check_branch
    %20 = sbr.rel (0) target = $region21
  $region20: #{stn3d_forward.5} parent=0 // pred_region
    _
  $region21: #{stn3d_forward.5} parent=0 // pred_fallthru
    _
  // Predicated region
  $region22: #{stn3d_forward.5} parent=0 // pred_check
    _
  $region23: #{stn3d_forward.5} parent=0 // pred_check_branch
    %22 = sbr.rel (0) target = $region25
  $region24: #{stn3d_forward.5} parent=0 // pred_region
    _
  $region25: #{stn3d_forward.5} parent=0 // pred_fallthru
    _
  %v23 = vld [vmem:[%s0] sm:$0xff]
  %v24 = vld [vmem:[%s0 + $0x8] sm:$0xff]
  %v25 = vld [vmem:[%s1] ss:$2 sm:$0xff]
  %v27 = vlaneseq
  %v28 = vshrl.u32 %v27, 7
  %v29 = vsub.s32 0, %v28
  %v30 = vrot.slane %v25, %v29
  %v31 = vlaneseq
  %v32 = vshrl.u32 %v31, 7
  %v33 = vsub.s32 1, %v32
  %v34 = vrot.slane %v25, %v33
  %v35 = vlaneseq
  %v36 = vshrl.u32 %v35, 7
  %v37 = vsub.s32 2, %v36
  %v38 = vrot.slane %v25, %v37
  %v39 = vlaneseq
  %v40 = vshrl.u32 %v39, 7
  %v41 = vsub.s32 3, %v40
  %v42 = vrot.slane %v25, %v41
  %v43 = vlaneseq
  %v44 = vshrl.u32 %v43, 7
  %v45 = vsub.s32 4, %v44
  %v46 = vrot.slane %v25, %v45
  %v47 = vlaneseq
  %v48 = vshrl.u32 %v47, 7
  %v49 = vsub.s32 5, %v48
  %v50 = vrot.slane %v25, %v49
  %v51 = vlaneseq
  %v52 = vshrl.u32 %v51, 7
  %v53 = vsub.s32 6, %v52
  %v54 = vrot.slane %v25, %v53
  %v55 = vlaneseq
  %v56 = vshrl.u32 %v55, 7
  %v57 = vsub.s32 7, %v56
  %v58 = vrot.slane %v25, %v57
  %v59 = vcombine.low %v30, %v34
  %v60 = vcombine.low %v38, %v42
  %v62 = vunpack.c.l.s4 1983009808
  %v63 = vunpack.c.0.s8 %v62
  %v64 = vlaneseq
  %v65 = vshrl.u32 %v64, 7
  %v66 = vsub.s32 %v63, %v65
  %v67 = vrot.slane %v59, %v66
  %v69 = vunpack.c.l.s4 1983009808
  %v70 = vunpack.c.0.s8 %v69
  %v71 = vlaneseq
  %v72 = vshrl.u32 %v71, 7
  %v73 = vsub.s32 %v70, %v72
  %v74 = vrot.slane %v60, %v73
  %v75 = vcombine.low %v67, %v74
  %v76 = vcombine.low %v46, %v50
  %v77 = vcombine.low %v54, %v58
  %v79 = vunpack.c.l.s4 1983009808
  %v80 = vunpack.c.0.s8 %v79
  %v81 = vlaneseq
  %v82 = vshrl.u32 %v81, 7
  %v83 = vsub.s32 %v80, %v82
  %v84 = vrot.slane %v76, %v83
  %v86 = vunpack.c.l.s4 1983009808
  %v87 = vunpack.c.0.s8 %v86
  %v88 = vlaneseq
  %v89 = vshrl.u32 %v88, 7
  %v90 = vsub.s32 %v87, %v89
  %v91 = vrot.slane %v77, %v90
  %v92 = vcombine.low %v84, %v91
  %v95 = vsub.f32 %v23, %v75
  %v96 = vsub.f32 %v24, %v92
  %s97 = scalar_lea.vmem %s1, 1
  %v98 = vld [vmem:[%s97] ss:$2 sm:$0xff]
  %v100 = vlaneseq
  %v101 = vshrl.u32 %v100, 7
  %v102 = vsub.s32 0, %v101
  %v103 = vrot.slane %v98, %v102
  %v104 = vlaneseq
  %v105 = vshrl.u32 %v104, 7
  %v106 = vsub.s32 1, %v105
  %v107 = vrot.slane %v98, %v106
  %v108 = vlaneseq
  %v109 = vshrl.u32 %v108, 7
  %v110 = vsub.s32 2, %v109
  %v111 = vrot.slane %v98, %v110
  %v112 = vlaneseq
  %v113 = vshrl.u32 %v112, 7
  %v114 = vsub.s32 3, %v113
  %v115 = vrot.slane %v98, %v114
  %v116 = vlaneseq
  %v117 = vshrl.u32 %v116, 7
  %v118 = vsub.s32 4, %v117
  %v119 = vrot.slane %v98, %v118
  %v120 = vlaneseq
  %v121 = vshrl.u32 %v120, 7
  %v122 = vsub.s32 5, %v121
  %v123 = vrot.slane %v98, %v122
  %v124 = vlaneseq
  %v125 = vshrl.u32 %v124, 7
  %v126 = vsub.s32 6, %v125
  %v127 = vrot.slane %v98, %v126
  %v128 = vlaneseq
  %v129 = vshrl.u32 %v128, 7
  %v130 = vsub.s32 7, %v129
  %v131 = vrot.slane %v98, %v130
  %v132 = vcombine.low %v103, %v107
  %v133 = vcombine.low %v111, %v115
  %v135 = vunpack.c.l.s4 1983009808
  %v136 = vunpack.c.0.s8 %v135
  %v137 = vlaneseq
  %v138 = vshrl.u32 %v137, 7
  %v139 = vsub.s32 %v136, %v138
  %v140 = vrot.slane %v132, %v139
  %v142 = vunpack.c.l.s4 1983009808
  %v143 = vunpack.c.0.s8 %v142
  %v144 = vlaneseq
  %v145 = vshrl.u32 %v144, 7
  %v146 = vsub.s32 %v143, %v145
  %v147 = vrot.slane %v133, %v146
  %v148 = vcombine.low %v140, %v147
  %v149 = vcombine.low %v119, %v123
  %v150 = vcombine.low %v127, %v131
  %v152 = vunpack.c.l.s4 1983009808
  %v153 = vunpack.c.0.s8 %v152
  %v154 = vlaneseq
  %v155 = vshrl.u32 %v154, 7
  %v156 = vsub.s32 %v153, %v155
  %v157 = vrot.slane %v149, %v156
  %v159 = vunpack.c.l.s4 1983009808
  %v160 = vunpack.c.0.s8 %v159
  %v161 = vlaneseq
  %v162 = vshrl.u32 %v161, 7
  %v163 = vsub.s32 %v160, %v162
  %v164 = vrot.slane %v150, %v163
  %v165 = vcombine.low %v157, %v164
  %v168 = vmul.f32 %v95, %v148
  %v169 = vmul.f32 %v96, %v165
  %v170 = vmax.f32 %v168, 0.0
  %v171 = vmax.f32 %v169, 0.0
  %v174 = vcombine.high %v170, %v170
  %v176 = vunpack.c.l.s4 1983009808
  %v177 = vunpack.c.0.s8 %v176
  %v178 = vlaneseq
  %v179 = vshrl.u32 %v178, 7
  %v180 = vsub.s32 %v177, %v179
  %v181 = vrot.slane %v170, %v180
  %v183 = vunpack.c.l.s4 1983009808
  %v184 = vunpack.c.0.s8 %v183
  %v185 = vlaneseq
  %v186 = vshrl.u32 %v185, 7
  %v187 = vsub.s32 %v184, %v186
  %v188 = vrot.slane %v174, %v187
  %v189 = vcombine.high %v181, %v181
  %v190 = vcombine.high %v188, %v188
  %v191 = vcombine.high %v171, %v171
  %v193 = vunpack.c.l.s4 1983009808
  %v194 = vunpack.c.0.s8 %v193
  %v195 = vlaneseq
  %v196 = vshrl.u32 %v195, 7
  %v197 = vsub.s32 %v194, %v196
  %v198 = vrot.slane %v171, %v197
  %v200 = vunpack.c.l.s4 1983009808
  %v201 = vunpack.c.0.s8 %v200
  %v202 = vlaneseq
  %v203 = vshrl.u32 %v202, 7
  %v204 = vsub.s32 %v201, %v203
  %v205 = vrot.slane %v191, %v204
  %v206 = vcombine.high %v198, %v198
  %v207 = vcombine.high %v205, %v205
  %v216 = vpack.c.bf16 %v181, %v181
  %v217 = vpack.c.bf16 %v189, %v189
  %v218 = vpack.c.bf16 %v188, %v188
  %v219 = vpack.c.bf16 %v190, %v190
  %v220 = vpack.c.bf16 %v198, %v198
  %v221 = vpack.c.bf16 %v206, %v206
  %v222 = vpack.c.bf16 %v205, %v205
  %v223 = vpack.c.bf16 %v207, %v207
  %v224 = vld [vmem:[%s2] sm:$0xff]
  %v225 = vld [vmem:[%s2 + $0x8] sm:$0xff]
  %v226 = vld [vmem:[%s2 + $0x10] sm:$0xff]
  %v227 = vld [vmem:[%s2 + $0x18] sm:$0xff]
  %v228 = vld [vmem:[%s2 + $0x20] sm:$0xff]
  %v229 = vld [vmem:[%s2 + $0x28] sm:$0xff]
  %v230 = vld [vmem:[%s2 + $0x30] sm:$0xff]
  %v231 = vld [vmem:[%s2 + $0x38] sm:$0xff]
  %v232 = vld [vmem:[%s2 + $0x40] sm:$0xff]
  %v233 = vld [vmem:[%s2 + $0x48] sm:$0xff]
  %v234 = vld [vmem:[%s2 + $0x50] sm:$0xff]
  %v235 = vld [vmem:[%s2 + $0x58] sm:$0xff]
  %v236 = vld [vmem:[%s2 + $0x60] sm:$0xff]
  %v237 = vld [vmem:[%s2 + $0x68] sm:$0xff]
  %v238 = vld [vmem:[%s2 + $0x70] sm:$0xff]
  %v239 = vld [vmem:[%s2 + $0x78] sm:$0xff]
  %v240 = vld [vmem:[%s2 + $0x80] sm:$0xff]
  %v241 = vld [vmem:[%s2 + $0x88] sm:$0xff]
  %v242 = vld [vmem:[%s2 + $0x90] sm:$0xff]
  %v243 = vld [vmem:[%s2 + $0x98] sm:$0xff]
  %v244 = vld [vmem:[%s2 + $0xa0] sm:$0xff]
  %v245 = vld [vmem:[%s2 + $0xa8] sm:$0xff]
  %v246 = vld [vmem:[%s2 + $0xb0] sm:$0xff]
  %v247 = vld [vmem:[%s2 + $0xb8] sm:$0xff]
  %v248 = vld [vmem:[%s2 + $0xc0] sm:$0xff]
  %v249 = vld [vmem:[%s2 + $0xc8] sm:$0xff]
  %v250 = vld [vmem:[%s2 + $0xd0] sm:$0xff]
  %v251 = vld [vmem:[%s2 + $0xd8] sm:$0xff]
  %v252 = vld [vmem:[%s2 + $0xe0] sm:$0xff]
  %v253 = vld [vmem:[%s2 + $0xe8] sm:$0xff]
  %v254 = vld [vmem:[%s2 + $0xf0] sm:$0xff]
  %v255 = vld [vmem:[%s2 + $0xf8] sm:$0xff]
  %v256 = vld [vmem:[%s2 + $0x100] sm:$0xff]
  %v257 = vld [vmem:[%s2 + $0x108] sm:$0xff]
  %v258 = vld [vmem:[%s2 + $0x110] sm:$0xff]
  %v259 = vld [vmem:[%s2 + $0x118] sm:$0xff]
  %v260 = vld [vmem:[%s2 + $0x120] sm:$0xff]
  %v261 = vld [vmem:[%s2 + $0x128] sm:$0xff]
  %v262 = vld [vmem:[%s2 + $0x130] sm:$0xff]
  %v263 = vld [vmem:[%s2 + $0x138] sm:$0xff]
  %v264 = vld [vmem:[%s2 + $0x140] sm:$0xff]
  %v265 = vld [vmem:[%s2 + $0x148] sm:$0xff]
  %v266 = vld [vmem:[%s2 + $0x150] sm:$0xff]
  %v267 = vld [vmem:[%s2 + $0x158] sm:$0xff]
  %v268 = vld [vmem:[%s2 + $0x160] sm:$0xff]
  %v269 = vld [vmem:[%s2 + $0x168] sm:$0xff]
  %v270 = vld [vmem:[%s2 + $0x170] sm:$0xff]
  %v271 = vld [vmem:[%s2 + $0x178] sm:$0xff]
  %v272 = vld [vmem:[%s2 + $0x180] sm:$0xff]
  %v273 = vld [vmem:[%s2 + $0x188] sm:$0xff]
  %v274 = vld [vmem:[%s2 + $0x190] sm:$0xff]
  %v275 = vld [vmem:[%s2 + $0x198] sm:$0xff]
  %v276 = vld [vmem:[%s2 + $0x1a0] sm:$0xff]
  %v277 = vld [vmem:[%s2 + $0x1a8] sm:$0xff]
  %v278 = vld [vmem:[%s2 + $0x1b0] sm:$0xff]
  %v279 = vld [vmem:[%s2 + $0x1b8] sm:$0xff]
  %v280 = vld [vmem:[%s2 + $0x1c0] sm:$0xff]
  %v281 = vld [vmem:[%s2 + $0x1c8] sm:$0xff]
  %v282 = vld [vmem:[%s2 + $0x1d0] sm:$0xff]
  %v283 = vld [vmem:[%s2 + $0x1d8] sm:$0xff]
  %v284 = vld [vmem:[%s2 + $0x1e0] sm:$0xff]
  %v285 = vld [vmem:[%s2 + $0x1e8] sm:$0xff]
  %v286 = vld [vmem:[%s2 + $0x1f0] sm:$0xff]
  %v287 = vld [vmem:[%s2 + $0x1f8] sm:$0xff]
  %v288 = vld [vmem:[%s2 + $0x200] sm:$0xff]
  %v289 = vld [vmem:[%s2 + $0x208] sm:$0xff]
  %v290 = vld [vmem:[%s2 + $0x210] sm:$0xff]
  %v291 = vld [vmem:[%s2 + $0x218] sm:$0xff]
  %v292 = vld [vmem:[%s2 + $0x220] sm:$0xff]
  %v293 = vld [vmem:[%s2 + $0x228] sm:$0xff]
  %v294 = vld [vmem:[%s2 + $0x230] sm:$0xff]
  %v295 = vld [vmem:[%s2 + $0x238] sm:$0xff]
  %v296 = vld [vmem:[%s2 + $0x240] sm:$0xff]
  %v297 = vld [vmem:[%s2 + $0x248] sm:$0xff]
  %v298 = vld [vmem:[%s2 + $0x250] sm:$0xff]
  %v299 = vld [vmem:[%s2 + $0x258] sm:$0xff]
  %v300 = vld [vmem:[%s2 + $0x260] sm:$0xff]
  %v301 = vld [vmem:[%s2 + $0x268] sm:$0xff]
  %v302 = vld [vmem:[%s2 + $0x270] sm:$0xff]
  %v303 = vld [vmem:[%s2 + $0x278] sm:$0xff]
  %v304 = vld [vmem:[%s2 + $0x280] sm:$0xff]
  %v305 = vld [vmem:[%s2 + $0x288] sm:$0xff]
  %v306 = vld [vmem:[%s2 + $0x290] sm:$0xff]
  %v307 = vld [vmem:[%s2 + $0x298] sm:$0xff]
  %v308 = vld [vmem:[%s2 + $0x2a0] sm:$0xff]
  %v309 = vld [vmem:[%s2 + $0x2a8] sm:$0xff]
  %v310 = vld [vmem:[%s2 + $0x2b0] sm:$0xff]
  %v311 = vld [vmem:[%s2 + $0x2b8] sm:$0xff]
  %v312 = vld [vmem:[%s2 + $0x2c0] sm:$0xff]
  %v313 = vld [vmem:[%s2 + $0x2c8] sm:$0xff]
  %v314 = vld [vmem:[%s2 + $0x2d0] sm:$0xff]
  %v315 = vld [vmem:[%s2 + $0x2d8] sm:$0xff]
  %v316 = vld [vmem:[%s2 + $0x2e0] sm:$0xff]
  %v317 = vld [vmem:[%s2 + $0x2e8] sm:$0xff]
  %v318 = vld [vmem:[%s2 + $0x2f0] sm:$0xff]
  %v319 = vld [vmem:[%s2 + $0x2f8] sm:$0xff]
  %v320 = vld [vmem:[%s2 + $0x300] sm:$0xff]
  %v321 = vld [vmem:[%s2 + $0x308] sm:$0xff]
  %v322 = vld [vmem:[%s2 + $0x310] sm:$0xff]
  %v323 = vld [vmem:[%s2 + $0x318] sm:$0xff]
  %v324 = vld [vmem:[%s2 + $0x320] sm:$0xff]
  %v325 = vld [vmem:[%s2 + $0x328] sm:$0xff]
  %v326 = vld [vmem:[%s2 + $0x330] sm:$0xff]
  %v327 = vld [vmem:[%s2 + $0x338] sm:$0xff]
  %v328 = vld [vmem:[%s2 + $0x340] sm:$0xff]
  %v329 = vld [vmem:[%s2 + $0x348] sm:$0xff]
  %v330 = vld [vmem:[%s2 + $0x350] sm:$0xff]
  %v331 = vld [vmem:[%s2 + $0x358] sm:$0xff]
  %v332 = vld [vmem:[%s2 + $0x360] sm:$0xff]
  %v333 = vld [vmem:[%s2 + $0x368] sm:$0xff]
  %v334 = vld [vmem:[%s2 + $0x370] sm:$0xff]
  %v335 = vld [vmem:[%s2 + $0x378] sm:$0xff]
  %v336 = vld [vmem:[%s2 + $0x380] sm:$0xff]
  %v337 = vld [vmem:[%s2 + $0x388] sm:$0xff]
  %v338 = vld [vmem:[%s2 + $0x390] sm:$0xff]
  %v339 = vld [vmem:[%s2 + $0x398] sm:$0xff]
  %v340 = vld [vmem:[%s2 + $0x3a0] sm:$0xff]
  %v341 = vld [vmem:[%s2 + $0x3a8] sm:$0xff]
  %v342 = vld [vmem:[%s2 + $0x3b0] sm:$0xff]
  %v343 = vld [vmem:[%s2 + $0x3b8] sm:$0xff]
  %v344 = vld [vmem:[%s2 + $0x3c0] sm:$0xff]
  %v345 = vld [vmem:[%s2 + $0x3c8] sm:$0xff]
  %v346 = vld [vmem:[%s2 + $0x3d0] sm:$0xff]
  %v347 = vld [vmem:[%s2 + $0x3d8] sm:$0xff]
  %v348 = vld [vmem:[%s2 + $0x3e0] sm:$0xff]
  %v349 = vld [vmem:[%s2 + $0x3e8] sm:$0xff]
  %v350 = vld [vmem:[%s2 + $0x3f0] sm:$0xff]
  %v351 = vld [vmem:[%s2 + $0x3f8] sm:$0xff]
  %v352 = vld [vmem:[%s2 + $0x400] sm:$0xff]
  %v353 = vld [vmem:[%s2 + $0x408] sm:$0xff]
  %v354 = vld [vmem:[%s2 + $0x410] sm:$0xff]
  %v355 = vld [vmem:[%s2 + $0x418] sm:$0xff]
  %v356 = vld [vmem:[%s2 + $0x420] sm:$0xff]
  %v357 = vld [vmem:[%s2 + $0x428] sm:$0xff]
  %v358 = vld [vmem:[%s2 + $0x430] sm:$0xff]
  %v359 = vld [vmem:[%s2 + $0x438] sm:$0xff]
  %v360 = vld [vmem:[%s2 + $0x440] sm:$0xff]
  %v361 = vld [vmem:[%s2 + $0x448] sm:$0xff]
  %v362 = vld [vmem:[%s2 + $0x450] sm:$0xff]
  %v363 = vld [vmem:[%s2 + $0x458] sm:$0xff]
  %v364 = vld [vmem:[%s2 + $0x460] sm:$0xff]
  %v365 = vld [vmem:[%s2 + $0x468] sm:$0xff]
  %v366 = vld [vmem:[%s2 + $0x470] sm:$0xff]
  %v367 = vld [vmem:[%s2 + $0x478] sm:$0xff]
  %v368 = vld [vmem:[%s2 + $0x480] sm:$0xff]
  %v369 = vld [vmem:[%s2 + $0x488] sm:$0xff]
  %v370 = vld [vmem:[%s2 + $0x490] sm:$0xff]
  %v371 = vld [vmem:[%s2 + $0x498] sm:$0xff]
  %v372 = vld [vmem:[%s2 + $0x4a0] sm:$0xff]
  %v373 = vld [vmem:[%s2 + $0x4a8] sm:$0xff]
  %v374 = vld [vmem:[%s2 + $0x4b0] sm:$0xff]
  %v375 = vld [vmem:[%s2 + $0x4b8] sm:$0xff]
  %v376 = vld [vmem:[%s2 + $0x4c0] sm:$0xff]
  %v377 = vld [vmem:[%s2 + $0x4c8] sm:$0xff]
  %v378 = vld [vmem:[%s2 + $0x4d0] sm:$0xff]
  %v379 = vld [vmem:[%s2 + $0x4d8] sm:$0xff]
  %v380 = vld [vmem:[%s2 + $0x4e0] sm:$0xff]
  %v381 = vld [vmem:[%s2 + $0x4e8] sm:$0xff]
  %v382 = vld [vmem:[%s2 + $0x4f0] sm:$0xff]
  %v383 = vld [vmem:[%s2 + $0x4f8] sm:$0xff]
  %v384 = vld [vmem:[%s2 + $0x500] sm:$0xff]
  %v385 = vld [vmem:[%s2 + $0x508] sm:$0xff]
  %v386 = vld [vmem:[%s2 + $0x510] sm:$0xff]
  %v387 = vld [vmem:[%s2 + $0x518] sm:$0xff]
  %v388 = vld [vmem:[%s2 + $0x520] sm:$0xff]
  %v389 = vld [vmem:[%s2 + $0x528] sm:$0xff]
  %v390 = vld [vmem:[%s2 + $0x530] sm:$0xff]
  %v391 = vld [vmem:[%s2 + $0x538] sm:$0xff]
  %v392 = vld [vmem:[%s2 + $0x540] sm:$0xff]
  %v393 = vld [vmem:[%s2 + $0x548] sm:$0xff]
  %v394 = vld [vmem:[%s2 + $0x550] sm:$0xff]
  %v395 = vld [vmem:[%s2 + $0x558] sm:$0xff]
  %v396 = vld [vmem:[%s2 + $0x560] sm:$0xff]
  %v397 = vld [vmem:[%s2 + $0x568] sm:$0xff]
  %v398 = vld [vmem:[%s2 + $0x570] sm:$0xff]
  %v399 = vld [vmem:[%s2 + $0x578] sm:$0xff]
  %v400 = vld [vmem:[%s2 + $0x580] sm:$0xff]
  %v401 = vld [vmem:[%s2 + $0x588] sm:$0xff]
  %v402 = vld [vmem:[%s2 + $0x590] sm:$0xff]
  %v403 = vld [vmem:[%s2 + $0x598] sm:$0xff]
  %v404 = vld [vmem:[%s2 + $0x5a0] sm:$0xff]
  %v405 = vld [vmem:[%s2 + $0x5a8] sm:$0xff]
  %v406 = vld [vmem:[%s2 + $0x5b0] sm:$0xff]
  %v407 = vld [vmem:[%s2 + $0x5b8] sm:$0xff]
  %v408 = vld [vmem:[%s2 + $0x5c0] sm:$0xff]
  %v409 = vld [vmem:[%s2 + $0x5c8] sm:$0xff]
  %v410 = vld [vmem:[%s2 + $0x5d0] sm:$0xff]
  %v411 = vld [vmem:[%s2 + $0x5d8] sm:$0xff]
  %v412 = vld [vmem:[%s2 + $0x5e0] sm:$0xff]
  %v413 = vld [vmem:[%s2 + $0x5e8] sm:$0xff]
  %v414 = vld [vmem:[%s2 + $0x5f0] sm:$0xff]
  %v415 = vld [vmem:[%s2 + $0x5f8] sm:$0xff]
  %v416 = vld [vmem:[%s2 + $0x600] sm:$0xff]
  %v417 = vld [vmem:[%s2 + $0x608] sm:$0xff]
  %v418 = vld [vmem:[%s2 + $0x610] sm:$0xff]
  %v419 = vld [vmem:[%s2 + $0x618] sm:$0xff]
  %v420 = vld [vmem:[%s2 + $0x620] sm:$0xff]
  %v421 = vld [vmem:[%s2 + $0x628] sm:$0xff]
  %v422 = vld [vmem:[%s2 + $0x630] sm:$0xff]
  %v423 = vld [vmem:[%s2 + $0x638] sm:$0xff]
  %v424 = vld [vmem:[%s2 + $0x640] sm:$0xff]
  %v425 = vld [vmem:[%s2 + $0x648] sm:$0xff]
  %v426 = vld [vmem:[%s2 + $0x650] sm:$0xff]
  %v427 = vld [vmem:[%s2 + $0x658] sm:$0xff]
  %v428 = vld [vmem:[%s2 + $0x660] sm:$0xff]
  %v429 = vld [vmem:[%s2 + $0x668] sm:$0xff]
  %v430 = vld [vmem:[%s2 + $0x670] sm:$0xff]
  %v431 = vld [vmem:[%s2 + $0x678] sm:$0xff]
  %v432 = vld [vmem:[%s2 + $0x680] sm:$0xff]
  %v433 = vld [vmem:[%s2 + $0x688] sm:$0xff]
  %v434 = vld [vmem:[%s2 + $0x690] sm:$0xff]
  %v435 = vld [vmem:[%s2 + $0x698] sm:$0xff]
  %v436 = vld [vmem:[%s2 + $0x6a0] sm:$0xff]
  %v437 = vld [vmem:[%s2 + $0x6a8] sm:$0xff]
  %v438 = vld [vmem:[%s2 + $0x6b0] sm:$0xff]
  %v439 = vld [vmem:[%s2 + $0x6b8] sm:$0xff]
  %v440 = vld [vmem:[%s2 + $0x6c0] sm:$0xff]
  %v441 = vld [vmem:[%s2 + $0x6c8] sm:$0xff]
  %v442 = vld [vmem:[%s2 + $0x6d0] sm:$0xff]
  %v443 = vld [vmem:[%s2 + $0x6d8] sm:$0xff]
  %v444 = vld [vmem:[%s2 + $0x6e0] sm:$0xff]
  %v445 = vld [vmem:[%s2 + $0x6e8] sm:$0xff]
  %v446 = vld [vmem:[%s2 + $0x6f0] sm:$0xff]
  %v447 = vld [vmem:[%s2 + $0x6f8] sm:$0xff]
  %v448 = vld [vmem:[%s2 + $0x700] sm:$0xff]
  %v449 = vld [vmem:[%s2 + $0x708] sm:$0xff]
  %v450 = vld [vmem:[%s2 + $0x710] sm:$0xff]
  %v451 = vld [vmem:[%s2 + $0x718] sm:$0xff]
  %v452 = vld [vmem:[%s2 + $0x720] sm:$0xff]
  %v453 = vld [vmem:[%s2 + $0x728] sm:$0xff]
  %v454 = vld [vmem:[%s2 + $0x730] sm:$0xff]
  %v455 = vld [vmem:[%s2 + $0x738] sm:$0xff]
  %v456 = vld [vmem:[%s2 + $0x740] sm:$0xff]
  %v457 = vld [vmem:[%s2 + $0x748] sm:$0xff]
  %v458 = vld [vmem:[%s2 + $0x750] sm:$0xff]
  %v459 = vld [vmem:[%s2 + $0x758] sm:$0xff]
  %v460 = vld [vmem:[%s2 + $0x760] sm:$0xff]
  %v461 = vld [vmem:[%s2 + $0x768] sm:$0xff]
  %v462 = vld [vmem:[%s2 + $0x770] sm:$0xff]
  %v463 = vld [vmem:[%s2 + $0x778] sm:$0xff]
  %v464 = vld [vmem:[%s2 + $0x780] sm:$0xff]
  %v465 = vld [vmem:[%s2 + $0x788] sm:$0xff]
  %v466 = vld [vmem:[%s2 + $0x790] sm:$0xff]
  %v467 = vld [vmem:[%s2 + $0x798] sm:$0xff]
  %v468 = vld [vmem:[%s2 + $0x7a0] sm:$0xff]
  %v469 = vld [vmem:[%s2 + $0x7a8] sm:$0xff]
  %v470 = vld [vmem:[%s2 + $0x7b0] sm:$0xff]
  %v471 = vld [vmem:[%s2 + $0x7b8] sm:$0xff]
  %v472 = vld [vmem:[%s2 + $0x7c0] sm:$0xff]
  %v473 = vld [vmem:[%s2 + $0x7c8] sm:$0xff]
  %v474 = vld [vmem:[%s2 + $0x7d0] sm:$0xff]
  %v475 = vld [vmem:[%s2 + $0x7d8] sm:$0xff]
  %v476 = vld [vmem:[%s2 + $0x7e0] sm:$0xff]
  %v477 = vld [vmem:[%s2 + $0x7e8] sm:$0xff]
  %v478 = vld [vmem:[%s2 + $0x7f0] sm:$0xff]
  %v479 = vld [vmem:[%s2 + $0x7f8] sm:$0xff]
  %v736 = vunpack.c.l.b16 %v224
  %v737 = vunpack.c.h.b16 %v224
  %v738 = vunpack.c.l.b16 %v225
  %v739 = vunpack.c.h.b16 %v225
  %v740 = vunpack.c.l.b16 %v226
  %v741 = vunpack.c.h.b16 %v226
  %v742 = vunpack.c.l.b16 %v227
  %v743 = vunpack.c.h.b16 %v227
  %v744 = vunpack.c.l.b16 %v228
  %v745 = vunpack.c.h.b16 %v228
  %v746 = vunpack.c.l.b16 %v229
  %v747 = vunpack.c.h.b16 %v229
  %v748 = vunpack.c.l.b16 %v230
  %v749 = vunpack.c.h.b16 %v230
  %v750 = vunpack.c.l.b16 %v231
  %v751 = vunpack.c.h.b16 %v231
  %v752 = vunpack.c.l.b16 %v232
  %v753 = vunpack.c.h.b16 %v232
  %v754 = vunpack.c.l.b16 %v233
  %v755 = vunpack.c.h.b16 %v233
  %v756 = vunpack.c.l.b16 %v234
  %v757 = vunpack.c.h.b16 %v234
  %v758 = vunpack.c.l.b16 %v235
  %v759 = vunpack.c.h.b16 %v235
  %v760 = vunpack.c.l.b16 %v236
  %v761 = vunpack.c.h.b16 %v236
  %v762 = vunpack.c.l.b16 %v237
  %v763 = vunpack.c.h.b16 %v237
  %v764 = vunpack.c.l.b16 %v238
  %v765 = vunpack.c.h.b16 %v238
  %v766 = vunpack.c.l.b16 %v239
  %v767 = vunpack.c.h.b16 %v239
  %v768 = vunpack.c.l.b16 %v240
  %v769 = vunpack.c.h.b16 %v240
  %v770 = vunpack.c.l.b16 %v241
  %v771 = vunpack.c.h.b16 %v241
  %v772 = vunpack.c.l.b16 %v242
  %v773 = vunpack.c.h.b16 %v242
  %v774 = vunpack.c.l.b16 %v243
  %v775 = vunpack.c.h.b16 %v243
  %v776 = vunpack.c.l.b16 %v244
  %v777 = vunpack.c.h.b16 %v244
  %v778 = vunpack.c.l.b16 %v245
  %v779 = vunpack.c.h.b16 %v245
  %v780 = vunpack.c.l.b16 %v246
  %v781 = vunpack.c.h.b16 %v246
  %v782 = vunpack.c.l.b16 %v247
  %v783 = vunpack.c.h.b16 %v247
  %v784 = vunpack.c.l.b16 %v248
  %v785 = vunpack.c.h.b16 %v248
  %v786 = vunpack.c.l.b16 %v249
  %v787 = vunpack.c.h.b16 %v249
  %v788 = vunpack.c.l.b16 %v250
  %v789 = vunpack.c.h.b16 %v250
  %v790 = vunpack.c.l.b16 %v251
  %v791 = vunpack.c.h.b16 %v251
  %v792 = vunpack.c.l.b16 %v252
  %v793 = vunpack.c.h.b16 %v252
  %v794 = vunpack.c.l.b16 %v253
  %v795 = vunpack.c.h.b16 %v253
  %v796 = vunpack.c.l.b16 %v254
  %v797 = vunpack.c.h.b16 %v254
  %v798 = vunpack.c.l.b16 %v255
  %v799 = vunpack.c.h.b16 %v255
  %v800 = vunpack.c.l.b16 %v256
  %v801 = vunpack.c.h.b16 %v256
  %v802 = vunpack.c.l.b16 %v257
  %v803 = vunpack.c.h.b16 %v257
  %v804 = vunpack.c.l.b16 %v258
  %v805 = vunpack.c.h.b16 %v258
  %v806 = vunpack.c.l.b16 %v259
  %v807 = vunpack.c.h.b16 %v259
  %v808 = vunpack.c.l.b16 %v260
  %v809 = vunpack.c.h.b16 %v260
  %v810 = vunpack.c.l.b16 %v261
  %v811 = vunpack.c.h.b16 %v261
  %v812 = vunpack.c.l.b16 %v262
  %v813 = vunpack.c.h.b16 %v262
  %v814 = vunpack.c.l.b16 %v263
  %v815 = vunpack.c.h.b16 %v263
  %v816 = vunpack.c.l.b16 %v264
  %v817 = vunpack.c.h.b16 %v264
  %v818 = vunpack.c.l.b16 %v265
  %v819 = vunpack.c.h.b16 %v265
  %v820 = vunpack.c.l.b16 %v266
  %v821 = vunpack.c.h.b16 %v266
  %v822 = vunpack.c.l.b16 %v267
  %v823 = vunpack.c.h.b16 %v267
  %v824 = vunpack.c.l.b16 %v268
  %v825 = vunpack.c.h.b16 %v268
  %v826 = vunpack.c.l.b16 %v269
  %v827 = vunpack.c.h.b16 %v269
  %v828 = vunpack.c.l.b16 %v270
  %v829 = vunpack.c.h.b16 %v270
  %v830 = vunpack.c.l.b16 %v271
  %v831 = vunpack.c.h.b16 %v271
  %v832 = vunpack.c.l.b16 %v272
  %v833 = vunpack.c.h.b16 %v272
  %v834 = vunpack.c.l.b16 %v273
  %v835 = vunpack.c.h.b16 %v273
  %v836 = vunpack.c.l.b16 %v274
  %v837 = vunpack.c.h.b16 %v274
  %v838 = vunpack.c.l.b16 %v275
  %v839 = vunpack.c.h.b16 %v275
  %v840 = vunpack.c.l.b16 %v276
  %v841 = vunpack.c.h.b16 %v276
  %v842 = vunpack.c.l.b16 %v277
  %v843 = vunpack.c.h.b16 %v277
  %v844 = vunpack.c.l.b16 %v278
  %v845 = vunpack.c.h.b16 %v278
  %v846 = vunpack.c.l.b16 %v279
  %v847 = vunpack.c.h.b16 %v279
  %v848 = vunpack.c.l.b16 %v280
  %v849 = vunpack.c.h.b16 %v280
  %v850 = vunpack.c.l.b16 %v281
  %v851 = vunpack.c.h.b16 %v281
  %v852 = vunpack.c.l.b16 %v282
  %v853 = vunpack.c.h.b16 %v282
  %v854 = vunpack.c.l.b16 %v283
  %v855 = vunpack.c.h.b16 %v283
  %v856 = vunpack.c.l.b16 %v284
  %v857 = vunpack.c.h.b16 %v284
  %v858 = vunpack.c.l.b16 %v285
  %v859 = vunpack.c.h.b16 %v285
  %v860 = vunpack.c.l.b16 %v286
  %v861 = vunpack.c.h.b16 %v286
  %v862 = vunpack.c.l.b16 %v287
  %v863 = vunpack.c.h.b16 %v287
  %v864 = vunpack.c.l.b16 %v288
  %v865 = vunpack.c.h.b16 %v288
  %v866 = vunpack.c.l.b16 %v289
  %v867 = vunpack.c.h.b16 %v289
  %v868 = vunpack.c.l.b16 %v290
  %v869 = vunpack.c.h.b16 %v290
  %v870 = vunpack.c.l.b16 %v291
  %v871 = vunpack.c.h.b16 %v291
  %v872 = vunpack.c.l.b16 %v292
  %v873 = vunpack.c.h.b16 %v292
  %v874 = vunpack.c.l.b16 %v293
  %v875 = vunpack.c.h.b16 %v293
  %v876 = vunpack.c.l.b16 %v294
  %v877 = vunpack.c.h.b16 %v294
  %v878 = vunpack.c.l.b16 %v295
  %v879 = vunpack.c.h.b16 %v295
  %v880 = vunpack.c.l.b16 %v296
  %v881 = vunpack.c.h.b16 %v296
  %v882 = vunpack.c.l.b16 %v297
  %v883 = vunpack.c.h.b16 %v297
  %v884 = vunpack.c.l.b16 %v298
  %v885 = vunpack.c.h.b16 %v298
  %v886 = vunpack.c.l.b16 %v299
  %v887 = vunpack.c.h.b16 %v299
  %v888 = vunpack.c.l.b16 %v300
  %v889 = vunpack.c.h.b16 %v300
  %v890 = vunpack.c.l.b16 %v301
  %v891 = vunpack.c.h.b16 %v301
  %v892 = vunpack.c.l.b16 %v302
  %v893 = vunpack.c.h.b16 %v302
  %v894 = vunpack.c.l.b16 %v303
  %v895 = vunpack.c.h.b16 %v303
  %v896 = vunpack.c.l.b16 %v304
  %v897 = vunpack.c.h.b16 %v304
  %v898 = vunpack.c.l.b16 %v305
  %v899 = vunpack.c.h.b16 %v305
  %v900 = vunpack.c.l.b16 %v306
  %v901 = vunpack.c.h.b16 %v306
  %v902 = vunpack.c.l.b16 %v307
  %v903 = vunpack.c.h.b16 %v307
  %v904 = vunpack.c.l.b16 %v308
  %v905 = vunpack.c.h.b16 %v308
  %v906 = vunpack.c.l.b16 %v309
  %v907 = vunpack.c.h.b16 %v309
  %v908 = vunpack.c.l.b16 %v310
  %v909 = vunpack.c.h.b16 %v310
  %v910 = vunpack.c.l.b16 %v311
  %v911 = vunpack.c.h.b16 %v311
  %v912 = vunpack.c.l.b16 %v312
  %v913 = vunpack.c.h.b16 %v312
  %v914 = vunpack.c.l.b16 %v313
  %v915 = vunpack.c.h.b16 %v313
  %v916 = vunpack.c.l.b16 %v314
  %v917 = vunpack.c.h.b16 %v314
  %v918 = vunpack.c.l.b16 %v315
  %v919 = vunpack.c.h.b16 %v315
  %v920 = vunpack.c.l.b16 %v316
  %v921 = vunpack.c.h.b16 %v316
  %v922 = vunpack.c.l.b16 %v317
  %v923 = vunpack.c.h.b16 %v317
  %v924 = vunpack.c.l.b16 %v318
  %v925 = vunpack.c.h.b16 %v318
  %v926 = vunpack.c.l.b16 %v319
  %v927 = vunpack.c.h.b16 %v319
  %v928 = vunpack.c.l.b16 %v320
  %v929 = vunpack.c.h.b16 %v320
  %v930 = vunpack.c.l.b16 %v321
  %v931 = vunpack.c.h.b16 %v321
  %v932 = vunpack.c.l.b16 %v322
  %v933 = vunpack.c.h.b16 %v322
  %v934 = vunpack.c.l.b16 %v323
  %v935 = vunpack.c.h.b16 %v323
  %v936 = vunpack.c.l.b16 %v324
  %v937 = vunpack.c.h.b16 %v324
  %v938 = vunpack.c.l.b16 %v325
  %v939 = vunpack.c.h.b16 %v325
  %v940 = vunpack.c.l.b16 %v326
  %v941 = vunpack.c.h.b16 %v326
  %v942 = vunpack.c.l.b16 %v327
  %v943 = vunpack.c.h.b16 %v327
  %v944 = vunpack.c.l.b16 %v328
  %v945 = vunpack.c.h.b16 %v328
  %v946 = vunpack.c.l.b16 %v329
  %v947 = vunpack.c.h.b16 %v329
  %v948 = vunpack.c.l.b16 %v330
  %v949 = vunpack.c.h.b16 %v330
  %v950 = vunpack.c.l.b16 %v331
  %v951 = vunpack.c.h.b16 %v331
  %v952 = vunpack.c.l.b16 %v332
  %v953 = vunpack.c.h.b16 %v332
  %v954 = vunpack.c.l.b16 %v333
  %v955 = vunpack.c.h.b16 %v333
  %v956 = vunpack.c.l.b16 %v334
  %v957 = vunpack.c.h.b16 %v334
  %v958 = vunpack.c.l.b16 %v335
  %v959 = vunpack.c.h.b16 %v335
  %v960 = vunpack.c.l.b16 %v336
  %v961 = vunpack.c.h.b16 %v336
  %v962 = vunpack.c.l.b16 %v337
  %v963 = vunpack.c.h.b16 %v337
  %v964 = vunpack.c.l.b16 %v338
  %v965 = vunpack.c.h.b16 %v338
  %v966 = vunpack.c.l.b16 %v339
  %v967 = vunpack.c.h.b16 %v339
  %v968 = vunpack.c.l.b16 %v340
  %v969 = vunpack.c.h.b16 %v340
  %v970 = vunpack.c.l.b16 %v341
  %v971 = vunpack.c.h.b16 %v341
  %v972 = vunpack.c.l.b16 %v342
  %v973 = vunpack.c.h.b16 %v342
  %v974 = vunpack.c.l.b16 %v343
  %v975 = vunpack.c.h.b16 %v343
  %v976 = vunpack.c.l.b16 %v344
  %v977 = vunpack.c.h.b16 %v344
  %v978 = vunpack.c.l.b16 %v345
  %v979 = vunpack.c.h.b16 %v345
  %v980 = vunpack.c.l.b16 %v346
  %v981 = vunpack.c.h.b16 %v346
  %v982 = vunpack.c.l.b16 %v347
  %v983 = vunpack.c.h.b16 %v347
  %v984 = vunpack.c.l.b16 %v348
  %v985 = vunpack.c.h.b16 %v348
  %v986 = vunpack.c.l.b16 %v349
  %v987 = vunpack.c.h.b16 %v349
  %v988 = vunpack.c.l.b16 %v350
  %v989 = vunpack.c.h.b16 %v350
  %v990 = vunpack.c.l.b16 %v351
  %v991 = vunpack.c.h.b16 %v351
  %v992 = vunpack.c.l.b16 %v352
  %v993 = vunpack.c.h.b16 %v352
  %v994 = vunpack.c.l.b16 %v353
  %v995 = vunpack.c.h.b16 %v353
  %v996 = vunpack.c.l.b16 %v354
  %v997 = vunpack.c.h.b16 %v354
  %v998 = vunpack.c.l.b16 %v355
  %v999 = vunpack.c.h.b16 %v355
  %v1000 = vunpack.c.l.b16 %v356
  %v1001 = vunpack.c.h.b16 %v356
  %v1002 = vunpack.c.l.b16 %v357
  %v1003 = vunpack.c.h.b16 %v357
  %v1004 = vunpack.c.l.b16 %v358
  %v1005 = vunpack.c.h.b16 %v358
  %v1006 = vunpack.c.l.b16 %v359
  %v1007 = vunpack.c.h.b16 %v359
  %v1008 = vunpack.c.l.b16 %v360
  %v1009 = vunpack.c.h.b16 %v360
  %v1010 = vunpack.c.l.b16 %v361
  %v1011 = vunpack.c.h.b16 %v361
  %v1012 = vunpack.c.l.b16 %v362
  %v1013 = vunpack.c.h.b16 %v362
  %v1014 = vunpack.c.l.b16 %v363
  %v1015 = vunpack.c.h.b16 %v363
  %v1016 = vunpack.c.l.b16 %v364
  %v1017 = vunpack.c.h.b16 %v364
  %v1018 = vunpack.c.l.b16 %v365
  %v1019 = vunpack.c.h.b16 %v365
  %v1020 = vunpack.c.l.b16 %v366
  %v1021 = vunpack.c.h.b16 %v366
  %v1022 = vunpack.c.l.b16 %v367
  %v1023 = vunpack.c.h.b16 %v367
  %v1024 = vunpack.c.l.b16 %v368
  %v1025 = vunpack.c.h.b16 %v368
  %v1026 = vunpack.c.l.b16 %v369
  %v1027 = vunpack.c.h.b16 %v369
  %v1028 = vunpack.c.l.b16 %v370
  %v1029 = vunpack.c.h.b16 %v370
  %v1030 = vunpack.c.l.b16 %v371
  %v1031 = vunpack.c.h.b16 %v371
  %v1032 = vunpack.c.l.b16 %v372
  %v1033 = vunpack.c.h.b16 %v372
  %v1034 = vunpack.c.l.b16 %v373
  %v1035 = vunpack.c.h.b16 %v373
  %v1036 = vunpack.c.l.b16 %v374
  %v1037 = vunpack.c.h.b16 %v374
  %v1038 = vunpack.c.l.b16 %v375
  %v1039 = vunpack.c.h.b16 %v375
  %v1040 = vunpack.c.l.b16 %v376
  %v1041 = vunpack.c.h.b16 %v376
  %v1042 = vunpack.c.l.b16 %v377
  %v1043 = vunpack.c.h.b16 %v377
  %v1044 = vunpack.c.l.b16 %v378
  %v1045 = vunpack.c.h.b16 %v378
  %v1046 = vunpack.c.l.b16 %v379
  %v1047 = vunpack.c.h.b16 %v379
  %v1048 = vunpack.c.l.b16 %v380
  %v1049 = vunpack.c.h.b16 %v380
  %v1050 = vunpack.c.l.b16 %v381
  %v1051 = vunpack.c.h.b16 %v381
  %v1052 = vunpack.c.l.b16 %v382
  %v1053 = vunpack.c.h.b16 %v382
  %v1054 = vunpack.c.l.b16 %v383
  %v1055 = vunpack.c.h.b16 %v383
  %v1056 = vunpack.c.l.b16 %v384
  %v1057 = vunpack.c.h.b16 %v384
  %v1058 = vunpack.c.l.b16 %v385
  %v1059 = vunpack.c.h.b16 %v385
  %v1060 = vunpack.c.l.b16 %v386
  %v1061 = vunpack.c.h.b16 %v386
  %v1062 = vunpack.c.l.b16 %v387
  %v1063 = vunpack.c.h.b16 %v387
  %v1064 = vunpack.c.l.b16 %v388
  %v1065 = vunpack.c.h.b16 %v388
  %v1066 = vunpack.c.l.b16 %v389
  %v1067 = vunpack.c.h.b16 %v389
  %v1068 = vunpack.c.l.b16 %v390
  %v1069 = vunpack.c.h.b16 %v390
  %v1070 = vunpack.c.l.b16 %v391
  %v1071 = vunpack.c.h.b16 %v391
  %v1072 = vunpack.c.l.b16 %v392
  %v1073 = vunpack.c.h.b16 %v392
  %v1074 = vunpack.c.l.b16 %v393
  %v1075 = vunpack.c.h.b16 %v393
  %v1076 = vunpack.c.l.b16 %v394
  %v1077 = vunpack.c.h.b16 %v394
  %v1078 = vunpack.c.l.b16 %v395
  %v1079 = vunpack.c.h.b16 %v395
  %v1080 = vunpack.c.l.b16 %v396
  %v1081 = vunpack.c.h.b16 %v396
  %v1082 = vunpack.c.l.b16 %v397
  %v1083 = vunpack.c.h.b16 %v397
  %v1084 = vunpack.c.l.b16 %v398
  %v1085 = vunpack.c.h.b16 %v398
  %v1086 = vunpack.c.l.b16 %v399
  %v1087 = vunpack.c.h.b16 %v399
  %v1088 = vunpack.c.l.b16 %v400
  %v1089 = vunpack.c.h.b16 %v400
  %v1090 = vunpack.c.l.b16 %v401
  %v1091 = vunpack.c.h.b16 %v401
  %v1092 = vunpack.c.l.b16 %v402
  %v1093 = vunpack.c.h.b16 %v402
  %v1094 = vunpack.c.l.b16 %v403
  %v1095 = vunpack.c.h.b16 %v403
  %v1096 = vunpack.c.l.b16 %v404
  %v1097 = vunpack.c.h.b16 %v404
  %v1098 = vunpack.c.l.b16 %v405
  %v1099 = vunpack.c.h.b16 %v405
  %v1100 = vunpack.c.l.b16 %v406
  %v1101 = vunpack.c.h.b16 %v406
  %v1102 = vunpack.c.l.b16 %v407
  %v1103 = vunpack.c.h.b16 %v407
  %v1104 = vunpack.c.l.b16 %v408
  %v1105 = vunpack.c.h.b16 %v408
  %v1106 = vunpack.c.l.b16 %v409
  %v1107 = vunpack.c.h.b16 %v409
  %v1108 = vunpack.c.l.b16 %v410
  %v1109 = vunpack.c.h.b16 %v410
  %v1110 = vunpack.c.l.b16 %v411
  %v1111 = vunpack.c.h.b16 %v411
  %v1112 = vunpack.c.l.b16 %v412
  %v1113 = vunpack.c.h.b16 %v412
  %v1114 = vunpack.c.l.b16 %v413
  %v1115 = vunpack.c.h.b16 %v413
  %v1116 = vunpack.c.l.b16 %v414
  %v1117 = vunpack.c.h.b16 %v414
  %v1118 = vunpack.c.l.b16 %v415
  %v1119 = vunpack.c.h.b16 %v415
  %v1120 = vunpack.c.l.b16 %v416
  %v1121 = vunpack.c.h.b16 %v416
  %v1122 = vunpack.c.l.b16 %v417
  %v1123 = vunpack.c.h.b16 %v417
  %v1124 = vunpack.c.l.b16 %v418
  %v1125 = vunpack.c.h.b16 %v418
  %v1126 = vunpack.c.l.b16 %v419
  %v1127 = vunpack.c.h.b16 %v419
  %v1128 = vunpack.c.l.b16 %v420
  %v1129 = vunpack.c.h.b16 %v420
  %v1130 = vunpack.c.l.b16 %v421
  %v1131 = vunpack.c.h.b16 %v421
  %v1132 = vunpack.c.l.b16 %v422
  %v1133 = vunpack.c.h.b16 %v422
  %v1134 = vunpack.c.l.b16 %v423
  %v1135 = vunpack.c.h.b16 %v423
  %v1136 = vunpack.c.l.b16 %v424
  %v1137 = vunpack.c.h.b16 %v424
  %v1138 = vunpack.c.l.b16 %v425
  %v1139 = vunpack.c.h.b16 %v425
  %v1140 = vunpack.c.l.b16 %v426
  %v1141 = vunpack.c.h.b16 %v426
  %v1142 = vunpack.c.l.b16 %v427
  %v1143 = vunpack.c.h.b16 %v427
  %v1144 = vunpack.c.l.b16 %v428
  %v1145 = vunpack.c.h.b16 %v428
  %v1146 = vunpack.c.l.b16 %v429
  %v1147 = vunpack.c.h.b16 %v429
  %v1148 = vunpack.c.l.b16 %v430
  %v1149 = vunpack.c.h.b16 %v430
  %v1150 = vunpack.c.l.b16 %v431
  %v1151 = vunpack.c.h.b16 %v431
  %v1152 = vunpack.c.l.b16 %v432
  %v1153 = vunpack.c.h.b16 %v432
  %v1154 = vunpack.c.l.b16 %v433
  %v1155 = vunpack.c.h.b16 %v433
  %v1156 = vunpack.c.l.b16 %v434
  %v1157 = vunpack.c.h.b16 %v434
  %v1158 = vunpack.c.l.b16 %v435
  %v1159 = vunpack.c.h.b16 %v435
  %v1160 = vunpack.c.l.b16 %v436
  %v1161 = vunpack.c.h.b16 %v436
  %v1162 = vunpack.c.l.b16 %v437
  %v1163 = vunpack.c.h.b16 %v437
  %v1164 = vunpack.c.l.b16 %v438
  %v1165 = vunpack.c.h.b16 %v438
  %v1166 = vunpack.c.l.b16 %v439
  %v1167 = vunpack.c.h.b16 %v439
  %v1168 = vunpack.c.l.b16 %v440
  %v1169 = vunpack.c.h.b16 %v440
  %v1170 = vunpack.c.l.b16 %v441
  %v1171 = vunpack.c.h.b16 %v441
  %v1172 = vunpack.c.l.b16 %v442
  %v1173 = vunpack.c.h.b16 %v442
  %v1174 = vunpack.c.l.b16 %v443
  %v1175 = vunpack.c.h.b16 %v443
  %v1176 = vunpack.c.l.b16 %v444
  %v1177 = vunpack.c.h.b16 %v444
  %v1178 = vunpack.c.l.b16 %v445
  %v1179 = vunpack.c.h.b16 %v445
  %v1180 = vunpack.c.l.b16 %v446
  %v1181 = vunpack.c.h.b16 %v446
  %v1182 = vunpack.c.l.b16 %v447
  %v1183 = vunpack.c.h.b16 %v447
  %v1184 = vunpack.c.l.b16 %v448
  %v1185 = vunpack.c.h.b16 %v448
  %v1186 = vunpack.c.l.b16 %v449
  %v1187 = vunpack.c.h.b16 %v449
  %v1188 = vunpack.c.l.b16 %v450
  %v1189 = vunpack.c.h.b16 %v450
  %v1190 = vunpack.c.l.b16 %v451
  %v1191 = vunpack.c.h.b16 %v451
  %v1192 = vunpack.c.l.b16 %v452
  %v1193 = vunpack.c.h.b16 %v452
  %v1194 = vunpack.c.l.b16 %v453
  %v1195 = vunpack.c.h.b16 %v453
  %v1196 = vunpack.c.l.b16 %v454
  %v1197 = vunpack.c.h.b16 %v454
  %v1198 = vunpack.c.l.b16 %v455
  %v1199 = vunpack.c.h.b16 %v455
  %v1200 = vunpack.c.l.b16 %v456
  %v1201 = vunpack.c.h.b16 %v456
  %v1202 = vunpack.c.l.b16 %v457
  %v1203 = vunpack.c.h.b16 %v457
  %v1204 = vunpack.c.l.b16 %v458
  %v1205 = vunpack.c.h.b16 %v458
  %v1206 = vunpack.c.l.b16 %v459
  %v1207 = vunpack.c.h.b16 %v459
  %v1208 = vunpack.c.l.b16 %v460
  %v1209 = vunpack.c.h.b16 %v460
  %v1210 = vunpack.c.l.b16 %v461
  %v1211 = vunpack.c.h.b16 %v461
  %v1212 = vunpack.c.l.b16 %v462
  %v1213 = vunpack.c.h.b16 %v462
  %v1214 = vunpack.c.l.b16 %v463
  %v1215 = vunpack.c.h.b16 %v463
  %v1216 = vunpack.c.l.b16 %v464
  %v1217 = vunpack.c.h.b16 %v464
  %v1218 = vunpack.c.l.b16 %v465
  %v1219 = vunpack.c.h.b16 %v465
  %v1220 = vunpack.c.l.b16 %v466
  %v1221 = vunpack.c.h.b16 %v466
  %v1222 = vunpack.c.l.b16 %v467
  %v1223 = vunpack.c.h.b16 %v467
  %v1224 = vunpack.c.l.b16 %v468
  %v1225 = vunpack.c.h.b16 %v468
  %v1226 = vunpack.c.l.b16 %v469
  %v1227 = vunpack.c.h.b16 %v469
  %v1228 = vunpack.c.l.b16 %v470
  %v1229 = vunpack.c.h.b16 %v470
  %v1230 = vunpack.c.l.b16 %v471
  %v1231 = vunpack.c.h.b16 %v471
  %v1232 = vunpack.c.l.b16 %v472
  %v1233 = vunpack.c.h.b16 %v472
  %v1234 = vunpack.c.l.b16 %v473
  %v1235 = vunpack.c.h.b16 %v473
  %v1236 = vunpack.c.l.b16 %v474
  %v1237 = vunpack.c.h.b16 %v474
  %v1238 = vunpack.c.l.b16 %v475
  %v1239 = vunpack.c.h.b16 %v475
  %v1240 = vunpack.c.l.b16 %v476
  %v1241 = vunpack.c.h.b16 %v476
  %v1242 = vunpack.c.l.b16 %v477
  %v1243 = vunpack.c.h.b16 %v477
  %v1244 = vunpack.c.l.b16 %v478
  %v1245 = vunpack.c.h.b16 %v478
  %v1246 = vunpack.c.l.b16 %v479
  %v1247 = vunpack.c.h.b16 %v479
  %v1248 = vpack.c.b16 %v740, %v736
  %v1249 = vpack.c.b16 %v741, %v737
  %v1250 = vpack.c.b16 %v742, %v738
  %v1251 = vpack.c.b16 %v743, %v739
  %v1252 = vpack.c.b16 %v748, %v744
  %v1253 = vpack.c.b16 %v749, %v745
  %v1254 = vpack.c.b16 %v750, %v746
  %v1255 = vpack.c.b16 %v751, %v747
  %v1256 = vpack.c.b16 %v756, %v752
  %v1257 = vpack.c.b16 %v757, %v753
  %v1258 = vpack.c.b16 %v758, %v754
  %v1259 = vpack.c.b16 %v759, %v755
  %v1260 = vpack.c.b16 %v764, %v760
  %v1261 = vpack.c.b16 %v765, %v761
  %v1262 = vpack.c.b16 %v766, %v762
  %v1263 = vpack.c.b16 %v767, %v763
  %v1264 = vpack.c.b16 %v772, %v768
  %v1265 = vpack.c.b16 %v773, %v769
  %v1266 = vpack.c.b16 %v774, %v770
  %v1267 = vpack.c.b16 %v775, %v771
  %v1268 = vpack.c.b16 %v780, %v776
  %v1269 = vpack.c.b16 %v781, %v777
  %v1270 = vpack.c.b16 %v782, %v778
  %v1271 = vpack.c.b16 %v783, %v779
  %v1272 = vpack.c.b16 %v788, %v784
  %v1273 = vpack.c.b16 %v789, %v785
  %v1274 = vpack.c.b16 %v790, %v786
  %v1275 = vpack.c.b16 %v791, %v787
  %v1276 = vpack.c.b16 %v796, %v792
  %v1277 = vpack.c.b16 %v797, %v793
  %v1278 = vpack.c.b16 %v798, %v794
  %v1279 = vpack.c.b16 %v799, %v795
  %v1280 = vpack.c.b16 %v804, %v800
  %v1281 = vpack.c.b16 %v805, %v801
  %v1282 = vpack.c.b16 %v806, %v802
  %v1283 = vpack.c.b16 %v807, %v803
  %v1284 = vpack.c.b16 %v812, %v808
  %v1285 = vpack.c.b16 %v813, %v809
  %v1286 = vpack.c.b16 %v814, %v810
  %v1287 = vpack.c.b16 %v815, %v811
  %v1288 = vpack.c.b16 %v820, %v816
  %v1289 = vpack.c.b16 %v821, %v817
  %v1290 = vpack.c.b16 %v822, %v818
  %v1291 = vpack.c.b16 %v823, %v819
  %v1292 = vpack.c.b16 %v828, %v824
  %v1293 = vpack.c.b16 %v829, %v825
  %v1294 = vpack.c.b16 %v830, %v826
  %v1295 = vpack.c.b16 %v831, %v827
  %v1296 = vpack.c.b16 %v836, %v832
  %v1297 = vpack.c.b16 %v837, %v833
  %v1298 = vpack.c.b16 %v838, %v834
  %v1299 = vpack.c.b16 %v839, %v835
  %v1300 = vpack.c.b16 %v844, %v840
  %v1301 = vpack.c.b16 %v845, %v841
  %v1302 = vpack.c.b16 %v846, %v842
  %v1303 = vpack.c.b16 %v847, %v843
  %v1304 = vpack.c.b16 %v852, %v848
  %v1305 = vpack.c.b16 %v853, %v849
  %v1306 = vpack.c.b16 %v854, %v850
  %v1307 = vpack.c.b16 %v855, %v851
  %v1308 = vpack.c.b16 %v860, %v856
  %v1309 = vpack.c.b16 %v861, %v857
  %v1310 = vpack.c.b16 %v862, %v858
  %v1311 = vpack.c.b16 %v863, %v859
  %v1312 = vpack.c.b16 %v868, %v864
  %v1313 = vpack.c.b16 %v869, %v865
  %v1314 = vpack.c.b16 %v870, %v866
  %v1315 = vpack.c.b16 %v871, %v867
  %v1316 = vpack.c.b16 %v876, %v872
  %v1317 = vpack.c.b16 %v877, %v873
  %v1318 = vpack.c.b16 %v878, %v874
  %v1319 = vpack.c.b16 %v879, %v875
  %v1320 = vpack.c.b16 %v884, %v880
  %v1321 = vpack.c.b16 %v885, %v881
  %v1322 = vpack.c.b16 %v886, %v882
  %v1323 = vpack.c.b16 %v887, %v883
  %v1324 = vpack.c.b16 %v892, %v888
  %v1325 = vpack.c.b16 %v893, %v889
  %v1326 = vpack.c.b16 %v894, %v890
  %v1327 = vpack.c.b16 %v895, %v891
  %v1328 = vpack.c.b16 %v900, %v896
  %v1329 = vpack.c.b16 %v901, %v897
  %v1330 = vpack.c.b16 %v902, %v898
  %v1331 = vpack.c.b16 %v903, %v899
  %v1332 = vpack.c.b16 %v908, %v904
  %v1333 = vpack.c.b16 %v909, %v905
  %v1334 = vpack.c.b16 %v910, %v906
  %v1335 = vpack.c.b16 %v911, %v907
  %v1336 = vpack.c.b16 %v916, %v912
  %v1337 = vpack.c.b16 %v917, %v913
  %v1338 = vpack.c.b16 %v918, %v914
  %v1339 = vpack.c.b16 %v919, %v915
  %v1340 = vpack.c.b16 %v924, %v920
  %v1341 = vpack.c.b16 %v925, %v921
  %v1342 = vpack.c.b16 %v926, %v922
  %v1343 = vpack.c.b16 %v927, %v923
  %v1344 = vpack.c.b16 %v932, %v928
  %v1345 = vpack.c.b16 %v933, %v929
  %v1346 = vpack.c.b16 %v934, %v930
  %v1347 = vpack.c.b16 %v935, %v931
  %v1348 = vpack.c.b16 %v940, %v936
  %v1349 = vpack.c.b16 %v941, %v937
  %v1350 = vpack.c.b16 %v942, %v938
  %v1351 = vpack.c.b16 %v943, %v939
  %v1352 = vpack.c.b16 %v948, %v944
  %v1353 = vpack.c.b16 %v949, %v945
  %v1354 = vpack.c.b16 %v950, %v946
  %v1355 = vpack.c.b16 %v951, %v947
  %v1356 = vpack.c.b16 %v956, %v952
  %v1357 = vpack.c.b16 %v957, %v953
  %v1358 = vpack.c.b16 %v958, %v954
  %v1359 = vpack.c.b16 %v959, %v955
  %v1360 = vpack.c.b16 %v964, %v960
  %v1361 = vpack.c.b16 %v965, %v961
  %v1362 = vpack.c.b16 %v966, %v962
  %v1363 = vpack.c.b16 %v967, %v963
  %v1364 = vpack.c.b16 %v972, %v968
  %v1365 = vpack.c.b16 %v973, %v969
  %v1366 = vpack.c.b16 %v974, %v970
  %v1367 = vpack.c.b16 %v975, %v971
  %v1368 = vpack.c.b16 %v980, %v976
  %v1369 = vpack.c.b16 %v981, %v977
  %v1370 = vpack.c.b16 %v982, %v978
  %v1371 = vpack.c.b16 %v983, %v979
  %v1372 = vpack.c.b16 %v988, %v984
  %v1373 = vpack.c.b16 %v989, %v985
  %v1374 = vpack.c.b16 %v990, %v986
  %v1375 = vpack.c.b16 %v991, %v987
  %v1376 = vpack.c.b16 %v996, %v992
  %v1377 = vpack.c.b16 %v997, %v993
  %v1378 = vpack.c.b16 %v998, %v994
  %v1379 = vpack.c.b16 %v999, %v995
  %v1380 = vpack.c.b16 %v1004, %v1000
  %v1381 = vpack.c.b16 %v1005, %v1001
  %v1382 = vpack.c.b16 %v1006, %v1002
  %v1383 = vpack.c.b16 %v1007, %v1003
  %v1384 = vpack.c.b16 %v1012, %v1008
  %v1385 = vpack.c.b16 %v1013, %v1009
  %v1386 = vpack.c.b16 %v1014, %v1010
  %v1387 = vpack.c.b16 %v1015, %v1011
  %v1388 = vpack.c.b16 %v1020, %v1016
  %v1389 = vpack.c.b16 %v1021, %v1017
  %v1390 = vpack.c.b16 %v1022, %v1018
  %v1391 = vpack.c.b16 %v1023, %v1019
  %v1392 = vpack.c.b16 %v1028, %v1024
  %v1393 = vpack.c.b16 %v1029, %v1025
  %v1394 = vpack.c.b16 %v1030, %v1026
  %v1395 = vpack.c.b16 %v1031, %v1027
  %v1396 = vpack.c.b16 %v1036, %v1032
  %v1397 = vpack.c.b16 %v1037, %v1033
  %v1398 = vpack.c.b16 %v1038, %v1034
  %v1399 = vpack.c.b16 %v1039, %v1035
  %v1400 = vpack.c.b16 %v1044, %v1040
  %v1401 = vpack.c.b16 %v1045, %v1041
  %v1402 = vpack.c.b16 %v1046, %v1042
  %v1403 = vpack.c.b16 %v1047, %v1043
  %v1404 = vpack.c.b16 %v1052, %v1048
  %v1405 = vpack.c.b16 %v1053, %v1049
  %v1406 = vpack.c.b16 %v1054, %v1050
  %v1407 = vpack.c.b16 %v1055, %v1051
  %v1408 = vpack.c.b16 %v1060, %v1056
  %v1409 = vpack.c.b16 %v1061, %v1057
  %v1410 = vpack.c.b16 %v1062, %v1058
  %v1411 = vpack.c.b16 %v1063, %v1059
  %v1412 = vpack.c.b16 %v1068, %v1064
  %v1413 = vpack.c.b16 %v1069, %v1065
  %v1414 = vpack.c.b16 %v1070, %v1066
  %v1415 = vpack.c.b16 %v1071, %v1067
  %v1416 = vpack.c.b16 %v1076, %v1072
  %v1417 = vpack.c.b16 %v1077, %v1073
  %v1418 = vpack.c.b16 %v1078, %v1074
  %v1419 = vpack.c.b16 %v1079, %v1075
  %v1420 = vpack.c.b16 %v1084, %v1080
  %v1421 = vpack.c.b16 %v1085, %v1081
  %v1422 = vpack.c.b16 %v1086, %v1082
  %v1423 = vpack.c.b16 %v1087, %v1083
  %v1424 = vpack.c.b16 %v1092, %v1088
  %v1425 = vpack.c.b16 %v1093, %v1089
  %v1426 = vpack.c.b16 %v1094, %v1090
  %v1427 = vpack.c.b16 %v1095, %v1091
  %v1428 = vpack.c.b16 %v1100, %v1096
  %v1429 = vpack.c.b16 %v1101, %v1097
  %v1430 = vpack.c.b16 %v1102, %v1098
  %v1431 = vpack.c.b16 %v1103, %v1099
  %v1432 = vpack.c.b16 %v1108, %v1104
  %v1433 = vpack.c.b16 %v1109, %v1105
  %v1434 = vpack.c.b16 %v1110, %v1106
  %v1435 = vpack.c.b16 %v1111, %v1107
  %v1436 = vpack.c.b16 %v1116, %v1112
  %v1437 = vpack.c.b16 %v1117, %v1113
  %v1438 = vpack.c.b16 %v1118, %v1114
  %v1439 = vpack.c.b16 %v1119, %v1115
  %v1440 = vpack.c.b16 %v1124, %v1120
  %v1441 = vpack.c.b16 %v1125, %v1121
  %v1442 = vpack.c.b16 %v1126, %v1122
  %v1443 = vpack.c.b16 %v1127, %v1123
  %v1444 = vpack.c.b16 %v1132, %v1128
  %v1445 = vpack.c.b16 %v1133, %v1129
  %v1446 = vpack.c.b16 %v1134, %v1130
  %v1447 = vpack.c.b16 %v1135, %v1131
  %v1448 = vpack.c.b16 %v1140, %v1136
  %v1449 = vpack.c.b16 %v1141, %v1137
  %v1450 = vpack.c.b16 %v1142, %v1138
  %v1451 = vpack.c.b16 %v1143, %v1139
  %v1452 = vpack.c.b16 %v1148, %v1144
  %v1453 = vpack.c.b16 %v1149, %v1145
  %v1454 = vpack.c.b16 %v1150, %v1146
  %v1455 = vpack.c.b16 %v1151, %v1147
  %v1456 = vpack.c.b16 %v1156, %v1152
  %v1457 = vpack.c.b16 %v1157, %v1153
  %v1458 = vpack.c.b16 %v1158, %v1154
  %v1459 = vpack.c.b16 %v1159, %v1155
  %v1460 = vpack.c.b16 %v1164, %v1160
  %v1461 = vpack.c.b16 %v1165, %v1161
  %v1462 = vpack.c.b16 %v1166, %v1162
  %v1463 = vpack.c.b16 %v1167, %v1163
  %v1464 = vpack.c.b16 %v1172, %v1168
  %v1465 = vpack.c.b16 %v1173, %v1169
  %v1466 = vpack.c.b16 %v1174, %v1170
  %v1467 = vpack.c.b16 %v1175, %v1171
  %v1468 = vpack.c.b16 %v1180, %v1176
  %v1469 = vpack.c.b16 %v1181, %v1177
  %v1470 = vpack.c.b16 %v1182, %v1178
  %v1471 = vpack.c.b16 %v1183, %v1179
  %v1472 = vpack.c.b16 %v1188, %v1184
  %v1473 = vpack.c.b16 %v1189, %v1185
  %v1474 = vpack.c.b16 %v1190, %v1186
  %v1475 = vpack.c.b16 %v1191, %v1187
  %v1476 = vpack.c.b16 %v1196, %v1192
  %v1477 = vpack.c.b16 %v1197, %v1193
  %v1478 = vpack.c.b16 %v1198, %v1194
  %v1479 = vpack.c.b16 %v1199, %v1195
  %v1480 = vpack.c.b16 %v1204, %v1200
  %v1481 = vpack.c.b16 %v1205, %v1201
  %v1482 = vpack.c.b16 %v1206, %v1202
  %v1483 = vpack.c.b16 %v1207, %v1203
  %v1484 = vpack.c.b16 %v1212, %v1208
  %v1485 = vpack.c.b16 %v1213, %v1209
  %v1486 = vpack.c.b16 %v1214, %v1210
  %v1487 = vpack.c.b16 %v1215, %v1211
  %v1488 = vpack.c.b16 %v1220, %v1216
  %v1489 = vpack.c.b16 %v1221, %v1217
  %v1490 = vpack.c.b16 %v1222, %v1218
  %v1491 = vpack.c.b16 %v1223, %v1219
  %v1492 = vpack.c.b16 %v1228, %v1224
  %v1493 = vpack.c.b16 %v1229, %v1225
  %v1494 = vpack.c.b16 %v1230, %v1226
  %v1495 = vpack.c.b16 %v1231, %v1227
  %v1496 = vpack.c.b16 %v1236, %v1232
  %v1497 = vpack.c.b16 %v1237, %v1233
  %v1498 = vpack.c.b16 %v1238, %v1234
  %v1499 = vpack.c.b16 %v1239, %v1235
  %v1500 = vpack.c.b16 %v1244, %v1240
  %v1501 = vpack.c.b16 %v1245, %v1241
  %v1502 = vpack.c.b16 %v1246, %v1242
  %v1503 = vpack.c.b16 %v1247, %v1243
  %1760 = vmatprep.subr.bf16.mxu0 %v1249
  %1761 = vmatpush1.bf16.msra.mxu0 %v1248
  %1762 = vmatprep.subr.bf16.mxu0 %v1253
  %1763 = vmatpush1.bf16.msra.mxu0 %v1252
  %1764 = vmatprep.subr.bf16.mxu0 %v1257
  %1765 = vmatpush1.bf16.msra.mxu0 %v1256
  %1766 = vmatprep.subr.bf16.mxu0 %v1261
  %1767 = vmatpush1.bf16.msra.mxu0 %v1260
  %1768 = vmatprep.subr.bf16.mxu0 %v1265
  %1769 = vmatpush1.bf16.msra.mxu0 %v1264
  %1770 = vmatprep.subr.bf16.mxu0 %v1269
  %1771 = vmatpush1.bf16.msra.mxu0 %v1268
  %1772 = vmatprep.subr.bf16.mxu0 %v1273
  %1773 = vmatpush1.bf16.msra.mxu0 %v1272
  %1774 = vmatprep.subr.bf16.mxu0 %v1277
  %1775 = vmatpush1.bf16.msra.mxu0 %v1276
  %1776 = vmatprep.subr.bf16.mxu0 %v1281
  %1777 = vmatpush1.bf16.msra.mxu0 %v1280
  %1778 = vmatprep.subr.bf16.mxu0 %v1285
  %1779 = vmatpush1.bf16.msra.mxu0 %v1284
  %1780 = vmatprep.subr.bf16.mxu0 %v1289
  %1781 = vmatpush1.bf16.msra.mxu0 %v1288
  %1782 = vmatprep.subr.bf16.mxu0 %v1293
  %1783 = vmatpush1.bf16.msra.mxu0 %v1292
  %1784 = vmatprep.subr.bf16.mxu0 %v1297
  %1785 = vmatpush1.bf16.msra.mxu0 %v1296
  %1786 = vmatprep.subr.bf16.mxu0 %v1301
  %1787 = vmatpush1.bf16.msra.mxu0 %v1300
  %1788 = vmatprep.subr.bf16.mxu0 %v1305
  %1789 = vmatpush1.bf16.msra.mxu0 %v1304
  %1790 = vmatprep.subr.bf16.mxu0 %v1309
  %1791 = vmatpush1.bf16.msra.mxu0 %v1308
  %1792 = vmatprep.mubr.bf16.mxu0 %v217
  %1793 = vmatmul.mubr.bf16.gmra.mrb[0].mxu0 %v216
  %v1794 = vpop.f32.mrb[0].mxu0
  %v1795 = vadd.f32 0.0, %v1794
  %v1796 = vpop.f32.mrb[0].mxu0
  %v1797 = vadd.f32 0.0, %v1796
  %v1798 = vpop.f32.mrb[0].mxu0
  %v1799 = vpop.f32.mrb[0].mxu0
  %1800 = vdwg.mxu0
  %1801 = vmatprep.subr.bf16.mxu0 %v1313
  %1802 = vmatpush1.bf16.msra.mxu0 %v1312
  %1803 = vmatprep.subr.bf16.mxu0 %v1317
  %1804 = vmatpush1.bf16.msra.mxu0 %v1316
  %1805 = vmatprep.subr.bf16.mxu0 %v1321
  %1806 = vmatpush1.bf16.msra.mxu0 %v1320
  %1807 = vmatprep.subr.bf16.mxu0 %v1325
  %1808 = vmatpush1.bf16.msra.mxu0 %v1324
  %1809 = vmatprep.subr.bf16.mxu0 %v1329
  %1810 = vmatpush1.bf16.msra.mxu0 %v1328
  %1811 = vmatprep.subr.bf16.mxu0 %v1333
  %1812 = vmatpush1.bf16.msra.mxu0 %v1332
  %1813 = vmatprep.subr.bf16.mxu0 %v1337
  %1814 = vmatpush1.bf16.msra.mxu0 %v1336
  %1815 = vmatprep.subr.bf16.mxu0 %v1341
  %1816 = vmatpush1.bf16.msra.mxu0 %v1340
  %1817 = vmatprep.subr.bf16.mxu0 %v1345
  %1818 = vmatpush1.bf16.msra.mxu0 %v1344
  %1819 = vmatprep.subr.bf16.mxu0 %v1349
  %1820 = vmatpush1.bf16.msra.mxu0 %v1348
  %1821 = vmatprep.subr.bf16.mxu0 %v1353
  %1822 = vmatpush1.bf16.msra.mxu0 %v1352
  %1823 = vmatprep.subr.bf16.mxu0 %v1357
  %1824 = vmatpush1.bf16.msra.mxu0 %v1356
  %1825 = vmatprep.subr.bf16.mxu0 %v1361
  %1826 = vmatpush1.bf16.msra.mxu0 %v1360
  %1827 = vmatprep.subr.bf16.mxu0 %v1365
  %1828 = vmatpush1.bf16.msra.mxu0 %v1364
  %1829 = vmatprep.subr.bf16.mxu0 %v1369
  %1830 = vmatpush1.bf16.msra.mxu0 %v1368
  %1831 = vmatprep.subr.bf16.mxu0 %v1373
  %1832 = vmatpush1.bf16.msra.mxu0 %v1372
  %1833 = vmatprep.mubr.bf16.mxu0 %v219
  %1834 = vmatmul.mubr.bf16.gmra.mrb[0].mxu0 %v218
  %v1835 = vpop.f32.mrb[0].mxu0
  %v1836 = vadd.f32 %v1795, %v1835
  %v1837 = vpop.f32.mrb[0].mxu0
  %v1838 = vadd.f32 %v1797, %v1837
  %v1839 = vpop.f32.mrb[0].mxu0
  %v1840 = vpop.f32.mrb[0].mxu0
  %1841 = vdwg.mxu0
  %1842 = vmatprep.subr.bf16.mxu0 %v1377
  %1843 = vmatpush1.bf16.msra.mxu0 %v1376
  %1844 = vmatprep.subr.bf16.mxu0 %v1381
  %1845 = vmatpush1.bf16.msra.mxu0 %v1380
  %1846 = vmatprep.subr.bf16.mxu0 %v1385
  %1847 = vmatpush1.bf16.msra.mxu0 %v1384
  %1848 = vmatprep.subr.bf16.mxu0 %v1389
  %1849 = vmatpush1.bf16.msra.mxu0 %v1388
  %1850 = vmatprep.subr.bf16.mxu0 %v1393
  %1851 = vmatpush1.bf16.msra.mxu0 %v1392
  %1852 = vmatprep.subr.bf16.mxu0 %v1397
  %1853 = vmatpush1.bf16.msra.mxu0 %v1396
  %1854 = vmatprep.subr.bf16.mxu0 %v1401
  %1855 = vmatpush1.bf16.msra.mxu0 %v1400
  %1856 = vmatprep.subr.bf16.mxu0 %v1405
  %1857 = vmatpush1.bf16.msra.mxu0 %v1404
  %1858 = vmatprep.subr.bf16.mxu0 %v1409
  %1859 = vmatpush1.bf16.msra.mxu0 %v1408
  %1860 = vmatprep.subr.bf16.mxu0 %v1413
  %1861 = vmatpush1.bf16.msra.mxu0 %v1412
  %1862 = vmatprep.subr.bf16.mxu0 %v1417
  %1863 = vmatpush1.bf16.msra.mxu0 %v1416
  %1864 = vmatprep.subr.bf16.mxu0 %v1421
  %1865 = vmatpush1.bf16.msra.mxu0 %v1420
  %1866 = vmatprep.subr.bf16.mxu0 %v1425
  %1867 = vmatpush1.bf16.msra.mxu0 %v1424
  %1868 = vmatprep.subr.bf16.mxu0 %v1429
  %1869 = vmatpush1.bf16.msra.mxu0 %v1428
  %1870 = vmatprep.subr.bf16.mxu0 %v1433
  %1871 = vmatpush1.bf16.msra.mxu0 %v1432
  %1872 = vmatprep.subr.bf16.mxu0 %v1437
  %1873 = vmatpush1.bf16.msra.mxu0 %v1436
  %1874 = vmatprep.mubr.bf16.mxu0 %v221
  %1875 = vmatmul.mubr.bf16.gmra.mrb[0].mxu0 %v220
  %v1876 = vpop.f32.mrb[0].mxu0
  %v1877 = vadd.f32 %v1836, %v1876
  %v1878 = vpop.f32.mrb[0].mxu0
  %v1879 = vadd.f32 %v1838, %v1878
  %v1880 = vpop.f32.mrb[0].mxu0
  %v1881 = vpop.f32.mrb[0].mxu0
  %1882 = vdwg.mxu0
  %1883 = vmatprep.subr.bf16.mxu0 %v1441
  %1884 = vmatpush1.bf16.msra.mxu0 %v1440
  %1885 = vmatprep.subr.bf16.mxu0 %v1445
  %1886 = vmatpush1.bf16.msra.mxu0 %v1444
  %1887 = vmatprep.subr.bf16.mxu0 %v1449
  %1888 = vmatpush1.bf16.msra.mxu0 %v1448
  %1889 = vmatprep.subr.bf16.mxu0 %v1453
  %1890 = vmatpush1.bf16.msra.mxu0 %v1452
  %1891 = vmatprep.subr.bf16.mxu0 %v1457
  %1892 = vmatpush1.bf16.msra.mxu0 %v1456
  %1893 = vmatprep.subr.bf16.mxu0 %v1461
  %1894 = vmatpush1.bf16.msra.mxu0 %v1460
  %1895 = vmatprep.subr.bf16.mxu0 %v1465
  %1896 = vmatpush1.bf16.msra.mxu0 %v1464
  %1897 = vmatprep.subr.bf16.mxu0 %v1469
  %1898 = vmatpush1.bf16.msra.mxu0 %v1468
  %1899 = vmatprep.subr.bf16.mxu0 %v1473
  %1900 = vmatpush1.bf16.msra.mxu0 %v1472
  %1901 = vmatprep.subr.bf16.mxu0 %v1477
  %1902 = vmatpush1.bf16.msra.mxu0 %v1476
  %1903 = vmatprep.subr.bf16.mxu0 %v1481
  %1904 = vmatpush1.bf16.msra.mxu0 %v1480
  %1905 = vmatprep.subr.bf16.mxu0 %v1485
  %1906 = vmatpush1.bf16.msra.mxu0 %v1484
  %1907 = vmatprep.subr.bf16.mxu0 %v1489
  %1908 = vmatpush1.bf16.msra.mxu0 %v1488
  %1909 = vmatprep.subr.bf16.mxu0 %v1493
  %1910 = vmatpush1.bf16.msra.mxu0 %v1492
  %1911 = vmatprep.subr.bf16.mxu0 %v1497
  %1912 = vmatpush1.bf16.msra.mxu0 %v1496
  %1913 = vmatprep.subr.bf16.mxu0 %v1501
  %1914 = vmatpush1.bf16.msra.mxu0 %v1500
  %1915 = vmatprep.mubr.bf16.mxu0 %v223
  %1916 = vmatmul.mubr.bf16.gmra.mrb[0].mxu0 %v222
  %v1917 = vpop.f32.mrb[0].mxu0
  %v1918 = vadd.f32 %v1877, %v1917
  %v1919 = vpop.f32.mrb[0].mxu0
  %v1920 = vadd.f32 %v1879, %v1919
  %v1921 = vpop.f32.mrb[0].mxu0
  %v1922 = vpop.f32.mrb[0].mxu0
  %1923 = vdwg.mxu0
  %1924 = vmatprep.subr.bf16.mxu0 %v1251
  %1925 = vmatpush1.bf16.msra.mxu0 %v1250
  %1926 = vmatprep.subr.bf16.mxu0 %v1255
  %1927 = vmatpush1.bf16.msra.mxu0 %v1254
  %1928 = vmatprep.subr.bf16.mxu0 %v1259
  %1929 = vmatpush1.bf16.msra.mxu0 %v1258
  %1930 = vmatprep.subr.bf16.mxu0 %v1263
  %1931 = vmatpush1.bf16.msra.mxu0 %v1262
  %1932 = vmatprep.subr.bf16.mxu0 %v1267
  %1933 = vmatpush1.bf16.msra.mxu0 %v1266
  %1934 = vmatprep.subr.bf16.mxu0 %v1271
  %1935 = vmatpush1.bf16.msra.mxu0 %v1270
  %1936 = vmatprep.subr.bf16.mxu0 %v1275
  %1937 = vmatpush1.bf16.msra.mxu0 %v1274
  %1938 = vmatprep.subr.bf16.mxu0 %v1279
  %1939 = vmatpush1.bf16.msra.mxu0 %v1278
  %1940 = vmatprep.subr.bf16.mxu0 %v1283
  %1941 = vmatpush1.bf16.msra.mxu0 %v1282
  %1942 = vmatprep.subr.bf16.mxu0 %v1287
  %1943 = vmatpush1.bf16.msra.mxu0 %v1286
  %1944 = vmatprep.subr.bf16.mxu0 %v1291
  %1945 = vmatpush1.bf16.msra.mxu0 %v1290
  %1946 = vmatprep.subr.bf16.mxu0 %v1295
  %1947 = vmatpush1.bf16.msra.mxu0 %v1294
  %1948 = vmatprep.subr.bf16.mxu0 %v1299
  %1949 = vmatpush1.bf16.msra.mxu0 %v1298
  %1950 = vmatprep.subr.bf16.mxu0 %v1303
  %1951 = vmatpush1.bf16.msra.mxu0 %v1302
  %1952 = vmatprep.subr.bf16.mxu0 %v1307
  %1953 = vmatpush1.bf16.msra.mxu0 %v1306
  %1954 = vmatprep.subr.bf16.mxu0 %v1311
  %1955 = vmatpush1.bf16.msra.mxu0 %v1310
  %1956 = vmatprep.mubr.bf16.mxu0 %v217
  %1957 = vmatmul.mubr.bf16.gmra.mrb[0].mxu0 %v216
  %v1958 = vpop.f32.mrb[0].mxu0
  %v1959 = vadd.f32 0.0, %v1958
  %v1960 = vpop.f32.mrb[0].mxu0
  %v1961 = vadd.f32 0.0, %v1960
  %v1962 = vpop.f32.mrb[0].mxu0
  %v1963 = vpop.f32.mrb[0].mxu0
  %1964 = vdwg.mxu0
  %1965 = vmatprep.subr.bf16.mxu0 %v1315
  %1966 = vmatpush1.bf16.msra.mxu0 %v1314
  %1967 = vmatprep.subr.bf16.mxu0 %v1319
  %1968 = vmatpush1.bf16.msra.mxu0 %v1318
  %1969 = vmatprep.subr.bf16.mxu0 %v1323
  %1970 = vmatpush1.bf16.msra.mxu0 %v1322
  %1971 = vmatprep.subr.bf16.mxu0 %v1327
  %1972 = vmatpush1.bf16.msra.mxu0 %v1326
  %1973 = vmatprep.subr.bf16.mxu0 %v1331
  %1974 = vmatpush1.bf16.msra.mxu0 %v1330
  %1975 = vmatprep.subr.bf16.mxu0 %v1335
  %1976 = vmatpush1.bf16.msra.mxu0 %v1334
  %1977 = vmatprep.subr.bf16.mxu0 %v1339
  %1978 = vmatpush1.bf16.msra.mxu0 %v1338
  %1979 = vmatprep.subr.bf16.mxu0 %v1343
  %1980 = vmatpush1.bf16.msra.mxu0 %v1342
  %1981 = vmatprep.subr.bf16.mxu0 %v1347
  %1982 = vmatpush1.bf16.msra.mxu0 %v1346
  %1983 = vmatprep.subr.bf16.mxu0 %v1351
  %1984 = vmatpush1.bf16.msra.mxu0 %v1350
  %1985 = vmatprep.subr.bf16.mxu0 %v1355
  %1986 = vmatpush1.bf16.msra.mxu0 %v1354
  %1987 = vmatprep.subr.bf16.mxu0 %v1359
  %1988 = vmatpush1.bf16.msra.mxu0 %v1358
  %1989 = vmatprep.subr.bf16.mxu0 %v1363
  %1990 = vmatpush1.bf16.msra.mxu0 %v1362
  %1991 = vmatprep.subr.bf16.mxu0 %v1367
  %1992 = vmatpush1.bf16.msra.mxu0 %v1366
  %1993 = vmatprep.subr.bf16.mxu0 %v1371
  %1994 = vmatpush1.bf16.msra.mxu0 %v1370
  %1995 = vmatprep.subr.bf16.mxu0 %v1375
  %1996 = vmatpush1.bf16.msra.mxu0 %v1374
  %1997 = vmatprep.mubr.bf16.mxu0 %v219
  %1998 = vmatmul.mubr.bf16.gmra.mrb[0].mxu0 %v218
  %v1999 = vpop.f32.mrb[0].mxu0
  %v2000 = vadd.f32 %v1959, %v1999
  %v2001 = vpop.f32.mrb[0].mxu0
  %v2002 = vadd.f32 %v1961, %v2001
  %v2003 = vpop.f32.mrb[0].mxu0
  %v2004 = vpop.f32.mrb[0].mxu0
  %2005 = vdwg.mxu0
  %2006 = vmatprep.subr.bf16.mxu0 %v1379
  %2007 = vmatpush1.bf16.msra.mxu0 %v1378
  %2008 = vmatprep.subr.bf16.mxu0 %v1383
  %2009 = vmatpush1.bf16.msra.mxu0 %v1382
  %2010 = vmatprep.subr.bf16.mxu0 %v1387
  %2011 = vmatpush1.bf16.msra.mxu0 %v1386
  %2012 = vmatprep.subr.bf16.mxu0 %v1391
  %2013 = vmatpush1.bf16.msra.mxu0 %v1390
  %2014 = vmatprep.subr.bf16.mxu0 %v1395
  %2015 = vmatpush1.bf16.msra.mxu0 %v1394
  %2016 = vmatprep.subr.bf16.mxu0 %v1399
  %2017 = vmatpush1.bf16.msra.mxu0 %v1398
  %2018 = vmatprep.subr.bf16.mxu0 %v1403
  %2019 = vmatpush1.bf16.msra.mxu0 %v1402
  %2020 = vmatprep.subr.bf16.mxu0 %v1407
  %2021 = vmatpush1.bf16.msra.mxu0 %v1406
  %2022 = vmatprep.subr.bf16.mxu0 %v1411
  %2023 = vmatpush1.bf16.msra.mxu0 %v1410
  %2024 = vmatprep.subr.bf16.mxu0 %v1415
  %2025 = vmatpush1.bf16.msra.mxu0 %v1414
  %2026 = vmatprep.subr.bf16.mxu0 %v1419
  %2027 = vmatpush1.bf16.msra.mxu0 %v1418
  %2028 = vmatprep.subr.bf16.mxu0 %v1423
  %2029 = vmatpush1.bf16.msra.mxu0 %v1422
  %2030 = vmatprep.subr.bf16.mxu0 %v1427
  %2031 = vmatpush1.bf16.msra.mxu0 %v1426
  %2032 = vmatprep.subr.bf16.mxu0 %v1431
  %2033 = vmatpush1.bf16.msra.mxu0 %v1430
  %2034 = vmatprep.subr.bf16.mxu0 %v1435
  %2035 = vmatpush1.bf16.msra.mxu0 %v1434
  %2036 = vmatprep.subr.bf16.mxu0 %v1439
  %2037 = vmatpush1.bf16.msra.mxu0 %v1438
  %2038 = vmatprep.mubr.bf16.mxu0 %v221
  %2039 = vmatmul.mubr.bf16.gmra.mrb[0].mxu0 %v220
  %v2040 = vpop.f32.mrb[0].mxu0
  %v2041 = vadd.f32 %v2000, %v2040
  %v2042 = vpop.f32.mrb[0].mxu0
  %v2043 = vadd.f32 %v2002, %v2042
  %v2044 = vpop.f32.mrb[0].mxu0
  %v2045 = vpop.f32.mrb[0].mxu0
  %2046 = vdwg.mxu0
  %2047 = vmatprep.subr.bf16.mxu0 %v1443
  %2048 = vmatpush1.bf16.msra.mxu0 %v1442
  %2049 = vmatprep.subr.bf16.mxu0 %v1447
  %2050 = vmatpush1.bf16.msra.mxu0 %v1446
  %2051 = vmatprep.subr.bf16.mxu0 %v1451
  %2052 = vmatpush1.bf16.msra.mxu0 %v1450
  %2053 = vmatprep.subr.bf16.mxu0 %v1455
  %2054 = vmatpush1.bf16.msra.mxu0 %v1454
  %2055 = vmatprep.subr.bf16.mxu0 %v1459
  %2056 = vmatpush1.bf16.msra.mxu0 %v1458
  %2057 = vmatprep.subr.bf16.mxu0 %v1463
  %2058 = vmatpush1.bf16.msra.mxu0 %v1462
  %2059 = vmatprep.subr.bf16.mxu0 %v1467
  %2060 = vmatpush1.bf16.msra.mxu0 %v1466
  %2061 = vmatprep.subr.bf16.mxu0 %v1471
  %2062 = vmatpush1.bf16.msra.mxu0 %v1470
  %2063 = vmatprep.subr.bf16.mxu0 %v1475
  %2064 = vmatpush1.bf16.msra.mxu0 %v1474
  %2065 = vmatprep.subr.bf16.mxu0 %v1479
  %2066 = vmatpush1.bf16.msra.mxu0 %v1478
  %2067 = vmatprep.subr.bf16.mxu0 %v1483
  %2068 = vmatpush1.bf16.msra.mxu0 %v1482
  %2069 = vmatprep.subr.bf16.mxu0 %v1487
  %2070 = vmatpush1.bf16.msra.mxu0 %v1486
  %2071 = vmatprep.subr.bf16.mxu0 %v1491
  %2072 = vmatpush1.bf16.msra.mxu0 %v1490
  %2073 = vmatprep.subr.bf16.mxu0 %v1495
  %2074 = vmatpush1.bf16.msra.mxu0 %v1494
  %2075 = vmatprep.subr.bf16.mxu0 %v1499
  %2076 = vmatpush1.bf16.msra.mxu0 %v1498
  %2077 = vmatprep.subr.bf16.mxu0 %v1503
  %2078 = vmatpush1.bf16.msra.mxu0 %v1502
  %2079 = vmatprep.mubr.bf16.mxu0 %v223
  %2080 = vmatmul.mubr.bf16.gmra.mrb[0].mxu0 %v222
  %v2081 = vpop.f32.mrb[0].mxu0
  %v2082 = vadd.f32 %v2041, %v2081
  %v2083 = vpop.f32.mrb[0].mxu0
  %v2084 = vadd.f32 %v2043, %v2083
  %v2085 = vpop.f32.mrb[0].mxu0
  %v2086 = vpop.f32.mrb[0].mxu0
  %2087 = vdwg.mxu0
  %vm2088 = vcmask 1041408
  %v2089 = vsel %vm2088, %v1918, 0.0
  %v2090 = vrot.slane %v2089, 4
  %v2091 = vadd.f32 %v2089, %v2090
  %v2092 = vrot.slane %v2091, 2
  %v2093 = vadd.f32 %v2091, %v2092
  %v2094 = vrot.slane %v2093, 1
  %v2095 = vadd.f32 %v2093, %v2094
  %v2096 = vsel %vm2088, %v1920, 0.0
  %v2097 = vrot.slane %v2096, 4
  %v2098 = vadd.f32 %v2096, %v2097
  %v2099 = vrot.slane %v2098, 2
  %v2100 = vadd.f32 %v2098, %v2099
  %v2101 = vrot.slane %v2100, 1
  %v2102 = vadd.f32 %v2100, %v2101
  %v2103 = vsel %vm2088, %v2082, 0.0
  %v2104 = vrot.slane %v2103, 4
  %v2105 = vadd.f32 %v2103, %v2104
  %v2106 = vrot.slane %v2105, 2
  %v2107 = vadd.f32 %v2105, %v2106
  %v2108 = vrot.slane %v2107, 1
  %v2109 = vadd.f32 %v2107, %v2108
  %v2110 = vsel %vm2088, %v2084, 0.0
  %v2111 = vrot.slane %v2110, 4
  %v2112 = vadd.f32 %v2110, %v2111
  %v2113 = vrot.slane %v2112, 2
  %v2114 = vadd.f32 %v2112, %v2113
  %v2115 = vrot.slane %v2114, 1
  %v2116 = vadd.f32 %v2114, %v2115
  %v2117 = vrcp.pop 2.0
  %v2118 = vmul.f32 %v2095, %v2117
  %v2119 = vmul.f32 %v2102, %v2117
  %v2120 = vmul.f32 %v2109, %v2117
  %v2121 = vmul.f32 %v2116, %v2117
  %v2122 = vsub.f32 %v1918, %v2118
  %v2123 = vsub.f32 %v1920, %v2119
  %v2124 = vsub.f32 %v2082, %v2120
  %v2125 = vsub.f32 %v2084, %v2121
  %v2126 = vmul.f32 %v2122, %v2122
  %v2127 = vmul.f32 %v2123, %v2123
  %v2128 = vmul.f32 %v2124, %v2124
  %v2129 = vmul.f32 %v2125, %v2125
  %v2130 = vsel %vm2088, %v2126, 0.0
  %v2131 = vrot.slane %v2130, 4
  %v2132 = vadd.f32 %v2130, %v2131
  %v2133 = vrot.slane %v2132, 2
  %v2134 = vadd.f32 %v2132, %v2133
  %v2135 = vrot.slane %v2134, 1
  %v2136 = vadd.f32 %v2134, %v2135
  %v2137 = vsel %vm2088, %v2127, 0.0
  %v2138 = vrot.slane %v2137, 4
  %v2139 = vadd.f32 %v2137, %v2138
  %v2140 = vrot.slane %v2139, 2
  %v2141 = vadd.f32 %v2139, %v2140
  %v2142 = vrot.slane %v2141, 1
  %v2143 = vadd.f32 %v2141, %v2142
  %v2144 = vsel %vm2088, %v2128, 0.0
  %v2145 = vrot.slane %v2144, 4
  %v2146 = vadd.f32 %v2144, %v2145
  %v2147 = vrot.slane %v2146, 2
  %v2148 = vadd.f32 %v2146, %v2147
  %v2149 = vrot.slane %v2148, 1
  %v2150 = vadd.f32 %v2148, %v2149
  %v2151 = vsel %vm2088, %v2129, 0.0
  %v2152 = vrot.slane %v2151, 4
  %v2153 = vadd.f32 %v2151, %v2152
  %v2154 = vrot.slane %v2153, 2
  %v2155 = vadd.f32 %v2153, %v2154
  %v2156 = vrot.slane %v2155, 1
  %v2157 = vadd.f32 %v2155, %v2156
  %v2158 = vmul.f32 %v2136, %v2117
  %v2159 = vmul.f32 %v2143, %v2117
  %v2160 = vmul.f32 %v2150, %v2117
  %v2161 = vmul.f32 %v2157, %v2117
  %v2162 = vadd.f32 %v2158, 1e-05
  %v2163 = vadd.f32 %v2159, 1e-05
  %v2164 = vadd.f32 %v2160, 1e-05
  %v2165 = vadd.f32 %v2161, 1e-05
  %v2166 = vrsqrt.pop %v2162
  %v2167 = vrsqrt.pop %v2163
  %v2168 = vrsqrt.pop %v2164
  %v2169 = vrsqrt.pop %v2165
  %v2170 = vmul.f32 %v2122, %v2166
  %v2171 = vmul.f32 %v2123, %v2167
  %v2172 = vmul.f32 %v2124, %v2168
  %v2173 = vmul.f32 %v2125, %v2169
  %v2174 = vmax.f32 %v2170, 0.0
  %v2175 = vmax.f32 %v2171, 0.0
  %v2176 = vmax.f32 %v2172, 0.0
  %v2177 = vmax.f32 %v2173, 0.0
  %v2178 = vld [vmem:[%s3] sm:$0xff]
  %v2179 = vld [vmem:[%s3 + $0x8] sm:$0xff]
  %v2180 = vld [vmem:[%s3 + $0x10] sm:$0xff]
  %v2181 = vld [vmem:[%s3 + $0x18] sm:$0xff]
  %v2182 = vld [vmem:[%s3 + $0x20] sm:$0xff]
  %v2183 = vld [vmem:[%s3 + $0x28] sm:$0xff]
  %v2184 = vld [vmem:[%s3 + $0x30] sm:$0xff]
  %v2185 = vld [vmem:[%s3 + $0x38] sm:$0xff]
  %v2186 = vld [vmem:[%s3 + $0x40] sm:$0xff]
  %v2187 = vld [vmem:[%s3 + $0x48] sm:$0xff]
  %v2188 = vld [vmem:[%s3 + $0x50] sm:$0xff]
  %v2189 = vld [vmem:[%s3 + $0x58] sm:$0xff]
  %v2190 = vld [vmem:[%s3 + $0x60] sm:$0xff]
  %v2191 = vld [vmem:[%s3 + $0x68] sm:$0xff]
  %v2192 = vld [vmem:[%s3 + $0x70] sm:$0xff]
  %v2193 = vld [vmem:[%s3 + $0x78] sm:$0xff]
  %v2194 = vld [vmem:[%s3 + $0x80] sm:$0xff]
  %v2195 = vld [vmem:[%s3 + $0x88] sm:$0xff]
  %v2196 = vld [vmem:[%s3 + $0x90] sm:$0xff]
  %v2197 = vld [vmem:[%s3 + $0x98] sm:$0xff]
  %v2198 = vld [vmem:[%s3 + $0xa0] sm:$0xff]
  %v2199 = vld [vmem:[%s3 + $0xa8] sm:$0xff]
  %v2200 = vld [vmem:[%s3 + $0xb0] sm:$0xff]
  %v2201 = vld [vmem:[%s3 + $0xb8] sm:$0xff]
  %v2202 = vld [vmem:[%s3 + $0xc0] sm:$0xff]
  %v2203 = vld [vmem:[%s3 + $0xc8] sm:$0xff]
  %v2204 = vld [vmem:[%s3 + $0xd0] sm:$0xff]
  %v2205 = vld [vmem:[%s3 + $0xd8] sm:$0xff]
  %v2206 = vld [vmem:[%s3 + $0xe0] sm:$0xff]
  %v2207 = vld [vmem:[%s3 + $0xe8] sm:$0xff]
  %v2208 = vld [vmem:[%s3 + $0xf0] sm:$0xff]
  %v2209 = vld [vmem:[%s3 + $0xf8] sm:$0xff]
  %v2210 = vld [vmem:[%s3 + $0x100] sm:$0xff]
  %v2211 = vld [vmem:[%s3 + $0x108] sm:$0xff]
  %v2212 = vld [vmem:[%s3 + $0x110] sm:$0xff]
  %v2213 = vld [vmem:[%s3 + $0x118] sm:$0xff]
  %v2214 = vld [vmem:[%s3 + $0x120] sm:$0xff]
  %v2215 = vld [vmem:[%s3 + $0x128] sm:$0xff]
  %v2216 = vld [vmem:[%s3 + $0x130] sm:$0xff]
  %v2217 = vld [vmem:[%s3 + $0x138] sm:$0xff]
  %v2218 = vld [vmem:[%s3 + $0x140] sm:$0xff]
  %v2219 = vld [vmem:[%s3 + $0x148] sm:$0xff]
  %v2220 = vld [vmem:[%s3 + $0x150] sm:$0xff]
  %v2221 = vld [vmem:[%s3 + $0x158] sm:$0xff]
  %v2222 = vld [vmem:[%s3 + $0x160] sm:$0xff]
  %v2223 = vld [vmem:[%s3 + $0x168] sm:$0xff]
  %v2224 = vld [vmem:[%s3 + $0x170] sm:$0xff]
  %v2225 = vld [vmem:[%s3 + $0x178] sm:$0xff]
  %v2226 = vld [vmem:[%s3 + $0x180] sm:$0xff]
  %v2227 = vld [vmem:[%s3 + $0x188] sm:$0xff]
  %v2228 = vld [vmem:[%s3 + $0x190] sm:$0xff]
  %v2229 = vld [vmem:[%s3 + $0x198] sm:$0xff]
  %v2230 = vld [vmem:[%s3 + $0x1a0] sm:$0xff]
  %v2231 = vld [vmem:[%s3 + $0x1a8] sm:$0xff]
  %v2232 = vld [vmem:[%s3 + $0x1b0] sm:$0xff]
  %v2233 = vld [vmem:[%s3 + $0x1b8] sm:$0xff]
  %v2234 = vld [vmem:[%s3 + $0x1c0] sm:$0xff]
  %v2235 = vld [vmem:[%s3 + $0x1c8] sm:$0xff]
  %v2236 = vld [vmem:[%s3 + $0x1d0] sm:$0xff]
  %v2237 = vld [vmem:[%s3 + $0x1d8] sm:$0xff]
  %v2238 = vld [vmem:[%s3 + $0x1e0] sm:$0xff]
  %v2239 = vld [vmem:[%s3 + $0x1e8] sm:$0xff]
  %v2240 = vld [vmem:[%s3 + $0x1f0] sm:$0xff]
  %v2241 = vld [vmem:[%s3 + $0x1f8] sm:$0xff]
  %v2242 = vld [vmem:[%s3 + $0x200] sm:$0xff]
  %v2243 = vld [vmem:[%s3 + $0x208] sm:$0xff]
  %v2244 = vld [vmem:[%s3 + $0x210] sm:$0xff]
  %v2245 = vld [vmem:[%s3 + $0x218] sm:$0xff]
  %v2246 = vld [vmem:[%s3 + $0x220] sm:$0xff]
  %v2247 = vld [vmem:[%s3 + $0x228] sm:$0xff]
  %v2248 = vld [vmem:[%s3 + $0x230] sm:$0xff]
  %v2249 = vld [vmem:[%s3 + $0x238] sm:$0xff]
  %v2250 = vld [vmem:[%s3 + $0x240] sm:$0xff]
  %v2251 = vld [vmem:[%s3 + $0x248] sm:$0xff]
  %v2252 = vld [vmem:[%s3 + $0x250] sm:$0xff]
  %v2253 = vld [vmem:[%s3 + $0x258] sm:$0xff]
  %v2254 = vld [vmem:[%s3 + $0x260] sm:$0xff]
  %v2255 = vld [vmem:[%s3 + $0x268] sm:$0xff]
  %v2256 = vld [vmem:[%s3 + $0x270] sm:$0xff]
  %v2257 = vld [vmem:[%s3 + $0x278] sm:$0xff]
  %v2258 = vld [vmem:[%s3 + $0x280] sm:$0xff]
  %v2259 = vld [vmem:[%s3 + $0x288] sm:$0xff]
  %v2260 = vld [vmem:[%s3 + $0x290] sm:$0xff]
  %v2261 = vld [vmem:[%s3 + $0x298] sm:$0xff]
  %v2262 = vld [vmem:[%s3 + $0x2a0] sm:$0xff]
  %v2263 = vld [vmem:[%s3 + $0x2a8] sm:$0xff]
  %v2264 = vld [vmem:[%s3 + $0x2b0] sm:$0xff]
  %v2265 = vld [vmem:[%s3 + $0x2b8] sm:$0xff]
  %v2266 = vld [vmem:[%s3 + $0x2c0] sm:$0xff]
  %v2267 = vld [vmem:[%s3 + $0x2c8] sm:$0xff]
  %v2268 = vld [vmem:[%s3 + $0x2d0] sm:$0xff]
  %v2269 = vld [vmem:[%s3 + $0x2d8] sm:$0xff]
  %v2270 = vld [vmem:[%s3 + $0x2e0] sm:$0xff]
  %v2271 = vld [vmem:[%s3 + $0x2e8] sm:$0xff]
  %v2272 = vld [vmem:[%s3 + $0x2f0] sm:$0xff]
  %v2273 = vld [vmem:[%s3 + $0x2f8] sm:$0xff]
  %v2274 = vld [vmem:[%s3 + $0x300] sm:$0xff]
  %v2275 = vld [vmem:[%s3 + $0x308] sm:$0xff]
  %v2276 = vld [vmem:[%s3 + $0x310] sm:$0xff]
  %v2277 = vld [vmem:[%s3 + $0x318] sm:$0xff]
  %v2278 = vld [vmem:[%s3 + $0x320] sm:$0xff]
  %v2279 = vld [vmem:[%s3 + $0x328] sm:$0xff]
  %v2280 = vld [vmem:[%s3 + $0x330] sm:$0xff]
  %v2281 = vld [vmem:[%s3 + $0x338] sm:$0xff]
  %v2282 = vld [vmem:[%s3 + $0x340] sm:$0xff]
  %v2283 = vld [vmem:[%s3 + $0x348] sm:$0xff]
  %v2284 = vld [vmem:[%s3 + $0x350] sm:$0xff]
  %v2285 = vld [vmem:[%s3 + $0x358] sm:$0xff]
  %v2286 = vld [vmem:[%s3 + $0x360] sm:$0xff]
  %v2287 = vld [vmem:[%s3 + $0x368] sm:$0xff]
  %v2288 = vld [vmem:[%s3 + $0x370] sm:$0xff]
  %v2289 = vld [vmem:[%s3 + $0x378] sm:$0xff]
  %v2290 = vld [vmem:[%s3 + $0x380] sm:$0xff]
  %v2291 = vld [vmem:[%s3 + $0x388] sm:$0xff]
  %v2292 = vld [vmem:[%s3 + $0x390] sm:$0xff]
  %v2293 = vld [vmem:[%s3 + $0x398] sm:$0xff]
  %v2294 = vld [vmem:[%s3 + $0x3a0] sm:$0xff]
  %v2295 = vld [vmem:[%s3 + $0x3a8] sm:$0xff]
  %v2296 = vld [vmem:[%s3 + $0x3b0] sm:$0xff]
  %v2297 = vld [vmem:[%s3 + $0x3b8] sm:$0xff]
  %v2298 = vld [vmem:[%s3 + $0x3c0] sm:$0xff]
  %v2299 = vld [vmem:[%s3 + $0x3c8] sm:$0xff]
  %v2300 = vld [vmem:[%s3 + $0x3d0] sm:$0xff]
  %v2301 = vld [vmem:[%s3 + $0x3d8] sm:$0xff]
  %v2302 = vld [vmem:[%s3 + $0x3e0] sm:$0xff]
  %v2303 = vld [vmem:[%s3 + $0x3e8] sm:$0xff]
  %v2304 = vld [vmem:[%s3 + $0x3f0] sm:$0xff]
  %v2305 = vld [vmem:[%s3 + $0x3f8] sm:$0xff]
  %2306 = vmatprep.subr.mxu0 %v2179
  %2307 = vmatpush1.msra.mxu0 %v2178
  %2308 = vmatprep.subr.mxu0 %v2181
  %2309 = vmatpush1.msra.mxu0 %v2180
  %2310 = vmatprep.subr.mxu0 %v2183
  %2311 = vmatpush1.msra.mxu0 %v2182
  %2312 = vmatprep.subr.mxu0 %v2185
  %2313 = vmatpush1.msra.mxu0 %v2184
  %2314 = vmatprep.subr.mxu0 %v2187
  %2315 = vmatpush1.msra.mxu0 %v2186
  %2316 = vmatprep.subr.mxu0 %v2189
  %2317 = vmatpush1.msra.mxu0 %v2188
  %2318 = vmatprep.subr.mxu0 %v2191
  %2319 = vmatpush1.msra.mxu0 %v2190
  %2320 = vmatprep.subr.mxu0 %v2193
  %2321 = vmatpush1.msra.mxu0 %v2192
  %2322 = vmatprep.subr.mxu0 %v2195
  %2323 = vmatpush1.msra.mxu0 %v2194
  %2324 = vmatprep.subr.mxu0 %v2197
  %2325 = vmatpush1.msra.mxu0 %v2196
  %2326 = vmatprep.subr.mxu0 %v2199
  %2327 = vmatpush1.msra.mxu0 %v2198
  %2328 = vmatprep.subr.mxu0 %v2201
  %2329 = vmatpush1.msra.mxu0 %v2200
  %2330 = vmatprep.subr.mxu0 %v2203
  %2331 = vmatpush1.msra.mxu0 %v2202
  %2332 = vmatprep.subr.mxu0 %v2205
  %2333 = vmatpush1.msra.mxu0 %v2204
  %2334 = vmatprep.subr.mxu0 %v2207
  %2335 = vmatpush1.msra.mxu0 %v2206
  %2336 = vmatprep.subr.mxu0 %v2209
  %2337 = vmatpush1.msra.mxu0 %v2208
  %2338 = vmatprep.subr.mxu0 %v2211
  %2339 = vmatpush1.msra.mxu0 %v2210
  %2340 = vmatprep.subr.mxu0 %v2213
  %2341 = vmatpush1.msra.mxu0 %v2212
  %2342 = vmatprep.subr.mxu0 %v2215
  %2343 = vmatpush1.msra.mxu0 %v2214
  %2344 = vmatprep.subr.mxu0 %v2217
  %2345 = vmatpush1.msra.mxu0 %v2216
  %2346 = vmatprep.subr.mxu0 %v2219
  %2347 = vmatpush1.msra.mxu0 %v2218
  %2348 = vmatprep.subr.mxu0 %v2221
  %2349 = vmatpush1.msra.mxu0 %v2220
  %2350 = vmatprep.subr.mxu0 %v2223
  %2351 = vmatpush1.msra.mxu0 %v2222
  %2352 = vmatprep.subr.mxu0 %v2225
  %2353 = vmatpush1.msra.mxu0 %v2224
  %2354 = vmatprep.subr.mxu0 %v2227
  %2355 = vmatpush1.msra.mxu0 %v2226
  %2356 = vmatprep.subr.mxu0 %v2229
  %2357 = vmatpush1.msra.mxu0 %v2228
  %2358 = vmatprep.subr.mxu0 %v2231
  %2359 = vmatpush1.msra.mxu0 %v2230
  %2360 = vmatprep.subr.mxu0 %v2233
  %2361 = vmatpush1.msra.mxu0 %v2232
  %2362 = vmatprep.subr.mxu0 %v2235
  %2363 = vmatpush1.msra.mxu0 %v2234
  %2364 = vmatprep.subr.mxu0 %v2237
  %2365 = vmatpush1.msra.mxu0 %v2236
  %2366 = vmatprep.subr.mxu0 %v2239
  %2367 = vmatpush1.msra.mxu0 %v2238
  %2368 = vmatprep.subr.mxu0 %v2241
  %2369 = vmatpush1.msra.mxu0 %v2240
  %2370 = vmatprep.mubr.f32.mxu0 %v2175
  %2371 = vmatmul.mubr.f32.gmra.mrb[0].mxu0 %v2174
  %v2372 = vpop.f32.mrb[0].mxu0
  %v2373 = vadd.f32 0.0, %v2372
  %v2374 = vpop.f32.mrb[0].mxu0
  %v2375 = vadd.f32 0.0, %v2374
  %2376 = vdwg.mxu0
  %2377 = vmatprep.subr.mxu0 %v2243
  %2378 = vmatpush1.msra.mxu0 %v2242
  %2379 = vmatprep.subr.mxu0 %v2245
  %2380 = vmatpush1.msra.mxu0 %v2244
  %2381 = vmatprep.subr.mxu0 %v2247
  %2382 = vmatpush1.msra.mxu0 %v2246
  %2383 = vmatprep.subr.mxu0 %v2249
  %2384 = vmatpush1.msra.mxu0 %v2248
  %2385 = vmatprep.subr.mxu0 %v2251
  %2386 = vmatpush1.msra.mxu0 %v2250
  %2387 = vmatprep.subr.mxu0 %v2253
  %2388 = vmatpush1.msra.mxu0 %v2252
  %2389 = vmatprep.subr.mxu0 %v2255
  %2390 = vmatpush1.msra.mxu0 %v2254
  %2391 = vmatprep.subr.mxu0 %v2257
  %2392 = vmatpush1.msra.mxu0 %v2256
  %2393 = vmatprep.subr.mxu0 %v2259
  %2394 = vmatpush1.msra.mxu0 %v2258
  %2395 = vmatprep.subr.mxu0 %v2261
  %2396 = vmatpush1.msra.mxu0 %v2260
  %2397 = vmatprep.subr.mxu0 %v2263
  %2398 = vmatpush1.msra.mxu0 %v2262
  %2399 = vmatprep.subr.mxu0 %v2265
  %2400 = vmatpush1.msra.mxu0 %v2264
  %2401 = vmatprep.subr.mxu0 %v2267
  %2402 = vmatpush1.msra.mxu0 %v2266
  %2403 = vmatprep.subr.mxu0 %v2269
  %2404 = vmatpush1.msra.mxu0 %v2268
  %2405 = vmatprep.subr.mxu0 %v2271
  %2406 = vmatpush1.msra.mxu0 %v2270
  %2407 = vmatprep.subr.mxu0 %v2273
  %2408 = vmatpush1.msra.mxu0 %v2272
  %2409 = vmatprep.subr.mxu0 %v2275
  %2410 = vmatpush1.msra.mxu0 %v2274
  %2411 = vmatprep.subr.mxu0 %v2277
  %2412 = vmatpush1.msra.mxu0 %v2276
  %2413 = vmatprep.subr.mxu0 %v2279
  %2414 = vmatpush1.msra.mxu0 %v2278
  %2415 = vmatprep.subr.mxu0 %v2281
  %2416 = vmatpush1.msra.mxu0 %v2280
  %2417 = vmatprep.subr.mxu0 %v2283
  %2418 = vmatpush1.msra.mxu0 %v2282
  %2419 = vmatprep.subr.mxu0 %v2285
  %2420 = vmatpush1.msra.mxu0 %v2284
  %2421 = vmatprep.subr.mxu0 %v2287
  %2422 = vmatpush1.msra.mxu0 %v2286
  %2423 = vmatprep.subr.mxu0 %v2289
  %2424 = vmatpush1.msra.mxu0 %v2288
  %2425 = vmatprep.subr.mxu0 %v2291
  %2426 = vmatpush1.msra.mxu0 %v2290
  %2427 = vmatprep.subr.mxu0 %v2293
  %2428 = vmatpush1.msra.mxu0 %v2292
  %2429 = vmatprep.subr.mxu0 %v2295
  %2430 = vmatpush1.msra.mxu0 %v2294
  %2431 = vmatprep.subr.mxu0 %v2297
  %2432 = vmatpush1.msra.mxu0 %v2296
  %2433 = vmatprep.subr.mxu0 %v2299
  %2434 = vmatpush1.msra.mxu0 %v2298
  %2435 = vmatprep.subr.mxu0 %v2301
  %2436 = vmatpush1.msra.mxu0 %v2300
  %2437 = vmatprep.subr.mxu0 %v2303
  %2438 = vmatpush1.msra.mxu0 %v2302
  %2439 = vmatprep.subr.mxu0 %v2305
  %2440 = vmatpush1.msra.mxu0 %v2304
  %2441 = vmatprep.mubr.f32.mxu0 %v2177
  %2442 = vmatmul.mubr.f32.gmra.mrb[0].mxu0 %v2176
  %v2443 = vpop.f32.mrb[0].mxu0
  %v2444 = vadd.f32 %v2373, %v2443
  %v2445 = vpop.f32.mrb[0].mxu0
  %v2446 = vadd.f32 %v2375, %v2445
  %2447 = vdwg.mxu0
  %v2448 = vsel %vm2088, %v2444, 0.0
  %v2449 = vrot.slane %v2448, 4
  %v2450 = vadd.f32 %v2448, %v2449
  %v2451 = vrot.slane %v2450, 2
  %v2452 = vadd.f32 %v2450, %v2451
  %v2453 = vrot.slane %v2452, 1
  %v2454 = vadd.f32 %v2452, %v2453
  %v2455 = vsel %vm2088, %v2446, 0.0
  %v2456 = vrot.slane %v2455, 4
  %v2457 = vadd.f32 %v2455, %v2456
  %v2458 = vrot.slane %v2457, 2
  %v2459 = vadd.f32 %v2457, %v2458
  %v2460 = vrot.slane %v2459, 1
  %v2461 = vadd.f32 %v2459, %v2460
  %v2462 = vmul.f32 %v2454, %v2117
  %v2463 = vmul.f32 %v2461, %v2117
  %v2464 = vsub.f32 %v2444, %v2462
  %v2465 = vsub.f32 %v2446, %v2463
  %v2466 = vmul.f32 %v2464, %v2464
  %v2467 = vmul.f32 %v2465, %v2465
  %v2468 = vsel %vm2088, %v2466, 0.0
  %v2469 = vrot.slane %v2468, 4
  %v2470 = vadd.f32 %v2468, %v2469
  %v2471 = vrot.slane %v2470, 2
  %v2472 = vadd.f32 %v2470, %v2471
  %v2473 = vrot.slane %v2472, 1
  %v2474 = vadd.f32 %v2472, %v2473
  %v2475 = vsel %vm2088, %v2467, 0.0
  %v2476 = vrot.slane %v2475, 4
  %v2477 = vadd.f32 %v2475, %v2476
  %v2478 = vrot.slane %v2477, 2
  %v2479 = vadd.f32 %v2477, %v2478
  %v2480 = vrot.slane %v2479, 1
  %v2481 = vadd.f32 %v2479, %v2480
  %v2482 = vmul.f32 %v2474, %v2117
  %v2483 = vmul.f32 %v2481, %v2117
  %v2484 = vadd.f32 %v2482, 1e-05
  %v2485 = vadd.f32 %v2483, 1e-05
  %v2486 = vrsqrt.pop %v2484
  %v2487 = vrsqrt.pop %v2485
  %v2488 = vmul.f32 %v2464, %v2486
  %v2489 = vmul.f32 %v2465, %v2487
  %v2490 = vmax.f32 %v2488, 0.0
  %v2491 = vmax.f32 %v2489, 0.0
  %v2492 = vld [vmem:[%s4] sm:$0xff]
  %v2493 = vld [vmem:[%s4 + $0x8] sm:$0xff]
  %v2494 = vld [vmem:[%s4 + $0x10] sm:$0xff]
  %v2495 = vld [vmem:[%s4 + $0x18] sm:$0xff]
  %v2496 = vld [vmem:[%s4 + $0x20] sm:$0xff]
  %v2497 = vld [vmem:[%s4 + $0x28] sm:$0xff]
  %v2498 = vld [vmem:[%s4 + $0x30] sm:$0xff]
  %v2499 = vld [vmem:[%s4 + $0x38] sm:$0xff]
  %v2500 = vld [vmem:[%s4 + $0x40] sm:$0xff]
  %v2501 = vld [vmem:[%s4 + $0x48] sm:$0xff]
  %v2502 = vld [vmem:[%s4 + $0x50] sm:$0xff]
  %v2503 = vld [vmem:[%s4 + $0x58] sm:$0xff]
  %v2504 = vld [vmem:[%s4 + $0x60] sm:$0xff]
  %v2505 = vld [vmem:[%s4 + $0x68] sm:$0xff]
  %v2506 = vld [vmem:[%s4 + $0x70] sm:$0xff]
  %v2507 = vld [vmem:[%s4 + $0x78] sm:$0xff]
  %v2508 = vld [vmem:[%s4 + $0x80] sm:$0xff]
  %v2509 = vld [vmem:[%s4 + $0x88] sm:$0xff]
  %v2510 = vld [vmem:[%s4 + $0x90] sm:$0xff]
  %v2511 = vld [vmem:[%s4 + $0x98] sm:$0xff]
  %v2512 = vld [vmem:[%s4 + $0xa0] sm:$0xff]
  %v2513 = vld [vmem:[%s4 + $0xa8] sm:$0xff]
  %v2514 = vld [vmem:[%s4 + $0xb0] sm:$0xff]
  %v2515 = vld [vmem:[%s4 + $0xb8] sm:$0xff]
  %v2516 = vld [vmem:[%s4 + $0xc0] sm:$0xff]
  %v2517 = vld [vmem:[%s4 + $0xc8] sm:$0xff]
  %v2518 = vld [vmem:[%s4 + $0xd0] sm:$0xff]
  %v2519 = vld [vmem:[%s4 + $0xd8] sm:$0xff]
  %v2520 = vld [vmem:[%s4 + $0xe0] sm:$0xff]
  %v2521 = vld [vmem:[%s4 + $0xe8] sm:$0xff]
  %v2522 = vld [vmem:[%s4 + $0xf0] sm:$0xff]
  %v2523 = vld [vmem:[%s4 + $0xf8] sm:$0xff]
  %v2524 = vld [vmem:[%s5] sm:$0x1]
  %v2526 = vlaneseq
  %v2527 = vshrl.u32 %v2526, 7
  %v2528 = vsub.s32 0, %v2527
  %v2529 = vrot.slane %v2524, %v2528
  %2531 = vmatprep.subr.mxu0 0.0
  %2532 = vmatpush1.msra.mxu0 %v2492
  %2533 = vmatprep.subr.mxu0 0.0
  %2534 = vmatpush1.msra.mxu0 %v2493
  %2535 = vmatprep.subr.mxu0 0.0
  %2536 = vmatpush1.msra.mxu0 %v2494
  %2537 = vmatprep.subr.mxu0 0.0
  %2538 = vmatpush1.msra.mxu0 %v2495
  %2539 = vmatprep.subr.mxu0 0.0
  %2540 = vmatpush1.msra.mxu0 %v2496
  %2541 = vmatprep.subr.mxu0 0.0
  %2542 = vmatpush1.msra.mxu0 %v2497
  %2543 = vmatprep.subr.mxu0 0.0
  %2544 = vmatpush1.msra.mxu0 %v2498
  %2545 = vmatprep.subr.mxu0 0.0
  %2546 = vmatpush1.msra.mxu0 %v2499
  %2547 = vmatprep.subr.mxu0 0.0
  %2548 = vmatpush1.msra.mxu0 %v2500
  %2549 = vmatprep.subr.mxu0 0.0
  %2550 = vmatpush1.msra.mxu0 %v2501
  %2551 = vmatprep.subr.mxu0 0.0
  %2552 = vmatpush1.msra.mxu0 %v2502
  %2553 = vmatprep.subr.mxu0 0.0
  %2554 = vmatpush1.msra.mxu0 %v2503
  %2555 = vmatprep.subr.mxu0 0.0
  %2556 = vmatpush1.msra.mxu0 %v2504
  %2557 = vmatprep.subr.mxu0 0.0
  %2558 = vmatpush1.msra.mxu0 %v2505
  %2559 = vmatprep.subr.mxu0 0.0
  %2560 = vmatpush1.msra.mxu0 %v2506
  %2561 = vmatprep.subr.mxu0 0.0
  %2562 = vmatpush1.msra.mxu0 %v2507
  %2563 = vmatprep.subr.mxu0 0.0
  %2564 = vmatpush1.msra.mxu0 %v2508
  %2565 = vmatprep.subr.mxu0 0.0
  %2566 = vmatpush1.msra.mxu0 %v2509
  %2567 = vmatprep.subr.mxu0 0.0
  %2568 = vmatpush1.msra.mxu0 %v2510
  %2569 = vmatprep.subr.mxu0 0.0
  %2570 = vmatpush1.msra.mxu0 %v2511
  %2571 = vmatprep.subr.mxu0 0.0
  %2572 = vmatpush1.msra.mxu0 %v2512
  %2573 = vmatprep.subr.mxu0 0.0
  %2574 = vmatpush1.msra.mxu0 %v2513
  %2575 = vmatprep.subr.mxu0 0.0
  %2576 = vmatpush1.msra.mxu0 %v2514
  %2577 = vmatprep.subr.mxu0 0.0
  %2578 = vmatpush1.msra.mxu0 %v2515
  %2579 = vmatprep.subr.mxu0 0.0
  %2580 = vmatpush1.msra.mxu0 %v2516
  %2581 = vmatprep.subr.mxu0 0.0
  %2582 = vmatpush1.msra.mxu0 %v2517
  %2583 = vmatprep.subr.mxu0 0.0
  %2584 = vmatpush1.msra.mxu0 %v2518
  %2585 = vmatprep.subr.mxu0 0.0
  %2586 = vmatpush1.msra.mxu0 %v2519
  %2587 = vmatprep.subr.mxu0 0.0
  %2588 = vmatpush1.msra.mxu0 %v2520
  %2589 = vmatprep.subr.mxu0 0.0
  %2590 = vmatpush1.msra.mxu0 %v2521
  %2591 = vmatprep.subr.mxu0 0.0
  %2592 = vmatpush1.msra.mxu0 %v2522
  %2593 = vmatprep.subr.mxu0 0.0
  %2594 = vmatpush1.msra.mxu0 %v2523
  %2595 = vmatprep.mubr.f32.mxu0 %v2491
  %2596 = vmatmul.mubr.f32.gmra.mrb[0].mxu0 %v2490
  %v2597 = vpop.f32.mrb[0].mxu0
  %v2598 = vadd.f32 %v2529, %v2597
  %v2599 = vpop.f32.mrb[0].mxu0
  %2600 = vdwg.mxu0
  %2601 = vst [vmem:[%s6] sm:$0x3] %v2598
  // Predicated region
  $region26: #{stn3d_forward.5} parent=0 // pred_check
    _
  $region27: #{stn3d_forward.5} parent=0 // pred_check_branch
    %2603 = sbr.rel (0) target = $region29
  $region28: #{stn3d_forward.5} parent=0 // pred_region
    _
  $region29: #{stn3d_forward.5} parent=0 // pred_fallthru
    _
  // Predicated region
  $region30: #{stn3d_forward.5} parent=0 // pred_check
    _
  $region31: #{stn3d_forward.5} parent=0 // pred_check_branch
    %2605 = sbr.rel (0) target = $region33
  $region32: #{stn3d_forward.5} parent=0 // pred_region
    _
  $region33: #{stn3d_forward.5} parent=0 // pred_fallthru
    _

</llo_original>
